<compile_context>
chip_gen: v5e
topology: v5e:2x2
jax: 0.10.0
libtpu: 0.0.40
codegen_flags: <defaults>
</compile_context>

<pallas_src>
import jax
import jax.numpy as jnp
from jax import lax
from jax.experimental import pallas as pl
from jax.experimental.pallas import tpu as pltpu


def _make_residual_kernel(H1, W1, C, C_in, KH, KC, skip_tap, skip_off,
                          batch_tile, use_proj):
    """Fused residual-block kernel for static spatial/channel sizes.

    Per grid step the kernel sees:
      x_ref   : (batch_tile, H1+KH-1, W1+KH-1, KC)  bf16  padded (or s2d) input
      w1_ref  : (KH*KH*KC, C)                        bf16  conv1 (+ s2d) weight
      w2_ref  : (9*C, C)                             bf16  conv2 weight
      [w3_ref : (C_in, C)                            bf16  1x1 projection]
      s1,b1,s2,b2 : (1, C) f32   conv-bias + eval-mode BN folded scale / bias
      [b3     : (1, C) f32]
      out_ref : (batch_tile, H1*W1, C) f32
      ypad_ref: (H1+2, W1+2, C) bf16 VMEM scratch (conv2 staging, zero border)
    """
    M = H1 * W1

    def kernel(*refs):
        if use_proj:
            (x_ref, w1_ref, w2_ref, w3_ref,
             s1_ref, b1_ref, s2_ref, b2_ref, b3_ref,
             out_ref, ypad_ref) = refs
        else:
            (x_ref, w1_ref, w2_ref,
             s1_ref, b1_ref, s2_ref, b2_ref,
             out_ref, ypad_ref) = refs

        # Zero ONLY the 1-wide border of the conv2 staging scratch; the interior
        # is fully overwritten below.  Runs every grid step (cheap: ~2H+2W rows)
        # because the scratch persists across steps and a program_id(0)==0 guard
        # would break under megacore 'parallel' sharding.
        zero_row = jnp.zeros((W1 + 2, C), dtype=ypad_ref.dtype)
        ypad_ref[0] = zero_row
        ypad_ref[H1 + 1] = zero_row
        zero_col = jnp.zeros((H1 + 2, 1, C), dtype=ypad_ref.dtype)
        ypad_ref[:, 0:1, :] = zero_col
        ypad_ref[:, W1 + 1:W1 + 2, :] = zero_col

        for b in range(batch_tile):                        # static unroll
            xb = x_ref[b]                                  # (HP, WP, KC) bf16

            # ---- conv1: KH*KH shifted stride-1 windows -> ONE big-K matmul ----
            wins = []
            for sy in range(KH):
                for sx in range(KH):
                    wins.append(xb[sy:sy + H1, sx:sx + W1, :].reshape(M, KC))
            patches = jnp.concatenate(wins, axis=-1)       # (M, KH*KH*KC) bf16
            y1 = jnp.dot(patches, w1_ref[...],
                         preferred_element_type=jnp.float32)       # (M, C) f32
            y1 = jnp.maximum(y1 * s1_ref[...] + b1_ref[...], 0.0)  # bn1 + relu

            # ---- stage relu(bn1(conv1)) into the zero-bordered VMEM scratch ---
            # (intermediate never round-trips through HBM)
            ypad_ref[1:H1 + 1, 1:W1 + 1, :] = (
                y1.astype(ypad_ref.dtype).reshape(H1, W1, C))

            # ---- conv2: 9 shifted windows -> ONE (M, 9C) @ (9C, C) matmul -----
            wins2 = []
            for dy in range(3):
                for dx in range(3):
                    wins2.append(
                        ypad_ref[dy:dy + H1, dx:dx + W1, :].reshape(M, C))
            p2 = jnp.concatenate(wins2, axis=-1)           # (M, 9C) bf16
            y2 = jnp.dot(p2, w2_ref[...],
                         preferred_element_type=jnp.float32)       # (M, C) f32
            y2 = y2 * s2_ref[...] + b2_ref[...]                    # folded bn2

            # ---- skip path: sliced from the conv1 input (no extra HBM stream) -
            x_skip = wins[skip_tap][:, skip_off:skip_off + C_in]   # (M, Cin)
            if use_proj:
                skip = jnp.dot(x_skip, w3_ref[...],
                               preferred_element_type=jnp.float32) + b3_ref[...]
            else:
                skip = x_skip.astype(jnp.float32)

            out_ref[b] = jnp.maximum(y2 + skip, 0.0)

    return kernel


def _fold_bn(conv_b, gamma, beta, mean, var, eps):
    scale = gamma * lax.rsqrt(var + eps)
    bias = beta + scale * (conv_b - mean)
    return (scale.reshape(1, -1).astype(jnp.float32),
            bias.reshape(1, -1).astype(jnp.float32))


def _pick_batch_tile(n, per_elem_bytes, cap_bytes=2 << 20):
    """Largest divisor of n that keeps >=2 grid steps (megacore) and fits cap."""
    bt = 1
    for d in range(1, n + 1):
        if n % d:
            continue
        if n >= 2 and n // d < 2:
            continue
        if d * per_elem_bytes > cap_bytes:
            continue
        bt = d
    return bt


def residual_forward(x, params, *, strides=1, use_1x1conv=False, eps=1e-5,
                     batch_tile=None):
    """Residual block forward. x: (N, C_in, H, W) float32 NCHW (PyTorch layout)."""
    N, C_in, H, W = x.shape
    C = params["conv1_w"].shape[0]
    assert strides in (1, 2), "ResNet residual blocks use stride 1 or 2"
    H1 = (H + 2 - 3) // strides + 1
    W1 = (W + 2 - 3) // strides + 1
    M = H1 * W1

    # ---- wrapper-side layout prep (pure XLA, NO im2col): NCHW->NHWC, pad, bf16
    x_nhwc = jnp.transpose(x, (0, 2, 3, 1)).astype(jnp.bfloat16)
    x_pad = jnp.pad(x_nhwc, ((0, 0), (1, 1), (1, 1), (0, 0)))

    w1_hwio = jnp.transpose(params["conv1_w"].astype(jnp.bfloat16),
                            (2, 3, 1, 0))                     # (3,3,Cin,C)
    w2_flat = jnp.transpose(params["conv2_w"].astype(jnp.bfloat16),
                            (2, 3, 1, 0)).reshape(9 * C, C)

    if strides == 1:
        # conv1 consumed directly as 9 stride-1 windows of the padded input.
        KH, KC = 3, C_in
        x_in = x_pad                                          # (N, H+2, W+2, Cin)
        w1_flat = w1_hwio.reshape(9 * C_in, C)
        skip_tap, skip_off = 1 * 3 + 1, 0                     # center tap
        if not use_1x1conv:
            assert C_in == C, "identity skip needs matching channel counts"
    else:
        # Space-to-depth: a 3x3/stride-2 conv over x_pad == a 2x2/stride-1 conv
        # over x_pad rearranged to ((H+2)/2, (W+2)/2) spatial with 4*Cin channels
        # (the 2x2 phase block folded into channels).  Same bytes as x_pad, so
        # the input HBM stream stays minimal; the weight gets zero rows for the
        # unused (dy==3 / dx==3) taps.
        assert (H + 2) % 2 == 0 and (W + 2) % 2 == 0, "stride-2 path needs even H, W"
        assert use_1x1conv, "stride-2 identity skip would change spatial size"
        KH, KC = 2, 4 * C_in
        Hp, Wp = H + 2, W + 2
        xs = x_pad.reshape(N, Hp // 2, 2, Wp // 2, 2, C_in)   # (N,R,py,Q,px,ci)
        x_in = jnp.transpose(xs, (0, 1, 3, 2, 4, 5)).reshape(
            N, Hp // 2, Wp // 2, 4 * C_in)                    # ch = (py,px,ci)
        w1p = jnp.pad(w1_hwio, ((0, 1), (0, 1), (0, 0), (0, 0)))  # (4,4,Cin,C)
        w1r = w1p.reshape(2, 2, 2, 2, C_in, C)                # (ty,py,tx,px,ci,C)
        w1_flat = jnp.transpose(w1r, (0, 2, 1, 3, 4, 5)).reshape(4 * 4 * C_in, C)
        # conv3/identity taps x[2i, 2j] = x_pad[2i+1, 2j+1] -> s2d tap (0,0),
        # phase (py,px)=(1,1) -> channel offset 3*Cin.
        skip_tap, skip_off = 0, 3 * C_in

    HP = H1 + KH - 1
    WP = W1 + KH - 1
    G = KH * KH

    # ---- fold conv bias + eval-mode BatchNorm into per-channel scale/bias ----
    s1, b1 = _fold_bn(params["conv1_b"], params["bn1_gamma"], params["bn1_beta"],
                      params["bn1_mean"], params["bn1_var"], eps)
    s2, b2 = _fold_bn(params["conv2_b"], params["bn2_gamma"], params["bn2_beta"],
                      params["bn2_mean"], params["bn2_var"], eps)

    # ---- batch tiling: amortize per-grid-step overhead, keep >=2 grid steps ---
    if batch_tile is None:
        batch_tile = _pick_batch_tile(N, HP * WP * KC * 2)
    assert N % batch_tile == 0
    grid = (N // batch_tile,)

    kernel = _make_residual_kernel(H1, W1, C, C_in, KH, KC, skip_tap, skip_off,
                                   batch_tile, use_1x1conv)

    # Weights / folded BN params: constant index_maps -> DMA'd once and kept
    # VMEM-resident across all grid steps.
    in_specs = [
        pl.BlockSpec((batch_tile, HP, WP, KC), lambda i: (i, 0, 0, 0)),
        pl.BlockSpec((G * KC, C), lambda i: (0, 0)),
        pl.BlockSpec((9 * C, C), lambda i: (0, 0)),
    ]
    operands = [x_in, w1_flat, w2_flat]
    if use_1x1conv:
        w3 = jnp.transpose(
            params["conv3_w"].astype(jnp.bfloat16).reshape(C, C_in))  # (Cin, C)
        in_specs.append(pl.BlockSpec((C_in, C), lambda i: (0, 0)))
        operands.append(w3)
    in_specs += [pl.BlockSpec((1, C), lambda i: (0, 0))] * 4
    operands += [s1, b1, s2, b2]
    if use_1x1conv:
        in_specs.append(pl.BlockSpec((1, C), lambda i: (0, 0)))
        operands.append(params["conv3_b"].reshape(1, C).astype(jnp.float32))

    out_flat = pl.pallas_call(
        kernel,
        grid=grid,
        in_specs=in_specs,
        out_specs=pl.BlockSpec((batch_tile, M, C), lambda i: (i, 0, 0)),
        out_shape=jax.ShapeDtypeStruct((N, M, C), jnp.float32),
        scratch_shapes=[pltpu.VMEM((H1 + 2, W1 + 2, C), jnp.bfloat16)],
        compiler_params=pltpu.CompilerParams(
            dimension_semantics=("parallel",),
            # Explicit VMEM budget: per-step footprint here is only tens of KiB,
            # so 32 MiB leaves ample double-buffering headroom on every
            # generation, including v7x's 64 MiB physical VMEM.
            vmem_limit_bytes=32 * 1024 * 1024),
    )(*operands)

    # (N, H1*W1, C) NHWC-flat -> NCHW to match PyTorch.
    return jnp.transpose(out_flat.reshape(N, H1, W1, C), (0, 3, 1, 2))


def residual_reference(x, params, *, strides=1, use_1x1conv=False, eps=1e-5,
                       round_intermediate=False):
    """Pure-JAX reference (eval-mode BN), highest-precision convolutions.

    round_intermediate=True mirrors the kernel's bf16 staging of the
    relu(bn1(conv1)) intermediate before conv2.
    """
    def conv(x, w, b, stride, pad):
        y = lax.conv_general_dilated(
            x, w, window_strides=(stride, stride),
            padding=[(pad, pad), (pad, pad)],
            dimension_numbers=("NCHW", "OIHW", "NCHW"),
            precision=lax.Precision.HIGHEST)
        return y + b[None, :, None, None]

    def bn(x, g, be, m, v):
        return (g[None, :, None, None] * (x - m[None, :, None, None])
                * lax.rsqrt(v + eps)[None, :, None, None]
                + be[None, :, None, None])

    y = conv(x, params["conv1_w"], params["conv1_b"], strides, 1)
    y = jax.nn.relu(bn(y, params["bn1_gamma"], params["bn1_beta"],
                       params["bn1_mean"], params["bn1_var"]))
    if round_intermediate:
        y = y.astype(jnp.bfloat16).astype(jnp.float32)
    y = conv(y, params["conv2_w"], params["conv2_b"], 1, 1)
    y = bn(y, params["bn2_gamma"], params["bn2_beta"],
           params["bn2_mean"], params["bn2_var"])
    xs = conv(x, params["conv3_w"], params["conv3_b"], strides, 0) if use_1x1conv else x
    return jax.nn.relu(y + xs)


def _quantize_like_kernel(x, params):
    """bf16-round the tensors the kernel feeds to the MXU (input + conv weights)."""
    qx = x.astype(jnp.bfloat16).astype(jnp.float32)
    qp = dict(params)
    for k in ("conv1_w", "conv2_w", "conv3_w"):
        if k in qp:
            qp[k] = qp[k].astype(jnp.bfloat16).astype(jnp.float32)
    return qx, qp


def _make_params(key, c_in, c, use_1x1conv):
    ks = jax.random.split(key, 12)
    p = {
        "conv1_w": jax.random.normal(ks[0], (c, c_in, 3, 3), jnp.float32) * 0.2,
        "conv1_b": jax.random.normal(ks[1], (c,), jnp.float32) * 0.1,
        "conv2_w": jax.random.normal(ks[2], (c, c, 3, 3), jnp.float32) * 0.2,
        "conv2_b": jax.random.normal(ks[3], (c,), jnp.float32) * 0.1,
        "bn1_gamma": 1.0 + 0.1 * jax.random.normal(ks[4], (c,), jnp.float32),
        "bn1_beta": 0.1 * jax.random.normal(ks[5], (c,), jnp.float32),
        "bn1_mean": 0.1 * jax.random.normal(ks[6], (c,), jnp.float32),
        "bn1_var": jax.random.uniform(ks[7], (c,), jnp.float32, 0.5, 1.5),
        "bn2_gamma": 1.0 + 0.1 * jax.random.normal(ks[8], (c,), jnp.float32),
        "bn2_beta": 0.1 * jax.random.normal(ks[9], (c,), jnp.float32),
        "bn2_mean": 0.1 * jax.random.normal(ks[10], (c,), jnp.float32),
        "bn2_var": jax.random.uniform(ks[11], (c,), jnp.float32, 0.5, 1.5),
    }
    if use_1x1conv:
        k1, k2 = jax.random.split(jax.random.fold_in(key, 99))
        p["conv3_w"] = jax.random.normal(k1, (c, c_in, 1, 1), jnp.float32) * 0.2
        p["conv3_b"] = jax.random.normal(k2, (c,), jnp.float32) * 0.1
    return p


if __name__ == "__main__":
    root = jax.random.PRNGKey(0)
    k_x1, k_p1, k_x2, k_p2 = jax.random.split(root, 4)

    # The kernel deliberately quantizes matmul operands to bf16 (per the perf
    # guidance), so correctness is checked against the same reference math
    # evaluated on identically bf16-rounded operands (f32 / HIGHEST precision).
    # Any structural bug (wrong tap, stride, s2d mapping, BN fold, skip path)
    # shows up as O(1) errors; the residual mismatch here is only f32
    # accumulation-order noise, far below the 1e-2 tolerance.
    ATOL = RTOL = 1e-2

    # Config 1: identity skip (input_channels == num_channels, stride 1).
    x1 = jax.random.normal(k_x1, (2, 8, 16, 16), jnp.float32)
    p1 = _make_params(k_p1, 8, 8, use_1x1conv=False)
    y1 = jax.block_until_ready(
        residual_forward(x1, p1, strides=1, use_1x1conv=False))
    xq1, pq1 = _quantize_like_kernel(x1, p1)
    r1 = residual_reference(xq1, pq1, strides=1, use_1x1conv=False,
                            round_intermediate=True)
    assert y1.shape == r1.shape == (2, 8, 16, 16)
    assert jnp.allclose(y1, r1, atol=ATOL, rtol=RTOL), (
        f"identity-skip mismatch: max abs err {jnp.max(jnp.abs(y1 - r1)):.3e}")

    # Config 2: 1x1-conv projection skip, stride 2, channel change 4 -> 8.
    x2 = jax.random.normal(k_x2, (2, 4, 16, 16), jnp.float32)
    p2 = _make_params(k_p2, 4, 8, use_1x1conv=True)
    y2 = jax.block_until_ready(
        residual_forward(x2, p2, strides=2, use_1x1conv=True))
    xq2, pq2 = _quantize_like_kernel(x2, p2)
    r2 = residual_reference(xq2, pq2, strides=2, use_1x1conv=True,
                            round_intermediate=True)
    assert y2.shape == r2.shape == (2, 8, 8, 8)
    assert jnp.allclose(y2, r2, atol=ATOL, rtol=RTOL), (
        f"projection-skip mismatch: max abs err {jnp.max(jnp.abs(y2 - r2)):.3e}")

    print("KERNEL_OK")
</pallas_src>

<mosaic_0001>
module attributes {stable_mosaic.version = 11 : i64} {
  func.func @kernel(%arg0: i32, %arg1: memref<1x18x18x8xbf16, #tpu.memory_space<vmem>>, %arg2: memref<72x8xbf16, #tpu.memory_space<vmem>>, %arg3: memref<72x8xbf16, #tpu.memory_space<vmem>>, %arg4: memref<1x8xf32, #tpu.memory_space<vmem>>, %arg5: memref<1x8xf32, #tpu.memory_space<vmem>>, %arg6: memref<1x8xf32, #tpu.memory_space<vmem>>, %arg7: memref<1x8xf32, #tpu.memory_space<vmem>>, %arg8: memref<1x256x8xf32, #tpu.memory_space<vmem>>, %arg9: memref<18x18x8xbf16, #tpu.memory_space<vmem>>) attributes {dimension_semantics = [#tpu.dimension_semantics<parallel>], iteration_bounds = array<i64: 2>, scalar_prefetch = 0 : i64, scratch_operands = 1 : i64, tpu.core_type = #tpu.core_type<tc>, window_params = [{transform_indices = @transform_0, window_bounds = array<i64: 1, 18, 18, 8>}, {pipeline_mode = #tpu.pipeline_mode<synchronous>, transform_indices = @transform_1, window_bounds = array<i64: 72, 8>}, {pipeline_mode = #tpu.pipeline_mode<synchronous>, transform_indices = @transform_2, window_bounds = array<i64: 72, 8>}, {pipeline_mode = #tpu.pipeline_mode<synchronous>, transform_indices = @transform_3, window_bounds = array<i64: 1, 8>}, {pipeline_mode = #tpu.pipeline_mode<synchronous>, transform_indices = @transform_4, window_bounds = array<i64: 1, 8>}, {pipeline_mode = #tpu.pipeline_mode<synchronous>, transform_indices = @transform_5, window_bounds = array<i64: 1, 8>}, {pipeline_mode = #tpu.pipeline_mode<synchronous>, transform_indices = @transform_6, window_bounds = array<i64: 1, 8>}, {transform_indices = @transform_7, window_bounds = array<i64: 1, 256, 8>}]} {
    %cst = arith.constant 0.000000e+00 : bf16
    %0 = vector.broadcast %cst : bf16 to vector<18x8xbf16>
    %c0 = arith.constant 0 : index
    %c0_0 = arith.constant 0 : index
    %c0_1 = arith.constant 0 : index
    %1 = vector.load %arg9[%c0, %c0_0, %c0_1] : memref<18x18x8xbf16, #tpu.memory_space<vmem>>, vector<1x18x8xbf16>
    %2 = vector.shape_cast %1 : vector<1x18x8xbf16> to vector<18x8xbf16>
    %3 = vector.shape_cast %0 : vector<18x8xbf16> to vector<1x18x8xbf16>
    tpu.vector_store %arg9[%c0, %c0_0, %c0_1], %3 {strides = array<i32>} : memref<18x18x8xbf16, #tpu.memory_space<vmem>>, vector<1x18x8xbf16>,
    %c17 = arith.constant 17 : index
    %c0_2 = arith.constant 0 : index
    %c0_3 = arith.constant 0 : index
    %4 = vector.load %arg9[%c17, %c0_2, %c0_3] : memref<18x18x8xbf16, #tpu.memory_space<vmem>>, vector<1x18x8xbf16>
    %5 = vector.shape_cast %4 : vector<1x18x8xbf16> to vector<18x8xbf16>
    %6 = vector.shape_cast %0 : vector<18x8xbf16> to vector<1x18x8xbf16>
    tpu.vector_store %arg9[%c17, %c0_2, %c0_3], %6 {strides = array<i32>} : memref<18x18x8xbf16, #tpu.memory_space<vmem>>, vector<1x18x8xbf16>,
    %cst_4 = arith.constant 0.000000e+00 : bf16
    %7 = vector.broadcast %cst_4 : bf16 to vector<18x1x8xbf16>
    %c0_5 = arith.constant 0 : index
    %c0_6 = arith.constant 0 : index
    %c0_7 = arith.constant 0 : index
    %8 = vector.load %arg9[%c0_5, %c0_6, %c0_7] : memref<18x18x8xbf16, #tpu.memory_space<vmem>>, vector<18x1x8xbf16>
    tpu.vector_store %arg9[%c0_5, %c0_6, %c0_7], %7 {strides = array<i32>} : memref<18x18x8xbf16, #tpu.memory_space<vmem>>, vector<18x1x8xbf16>,
    %c0_8 = arith.constant 0 : index
    %c17_9 = arith.constant 17 : index
    %c0_10 = arith.constant 0 : index
    %9 = vector.load %arg9[%c0_8, %c17_9, %c0_10] : memref<18x18x8xbf16, #tpu.memory_space<vmem>>, vector<18x1x8xbf16>
    tpu.vector_store %arg9[%c0_8, %c17_9, %c0_10], %7 {strides = array<i32>} : memref<18x18x8xbf16, #tpu.memory_space<vmem>>, vector<18x1x8xbf16>,
    %c0_11 = arith.constant 0 : index
    %c0_12 = arith.constant 0 : index
    %c0_13 = arith.constant 0 : index
    %c0_14 = arith.constant 0 : index
    %10 = vector.load %arg1[%c0_11, %c0_12, %c0_13, %c0_14] : memref<1x18x18x8xbf16, #tpu.memory_space<vmem>>, vector<1x18x18x8xbf16>
    %11 = vector.shape_cast %10 : vector<1x18x18x8xbf16> to vector<18x18x8xbf16>
    %12 = vector.extract_strided_slice %11 {offsets = [0, 0, 0], sizes = [16, 16, 8], strides = [1, 1, 1]} : vector<18x18x8xbf16> to vector<16x16x8xbf16>
    %13 = vector.shape_cast %12 : vector<16x16x8xbf16> to vector<256x8xbf16>
    %14 = vector.extract_strided_slice %11 {offsets = [0, 1, 0], sizes = [16, 16, 8], strides = [1, 1, 1]} : vector<18x18x8xbf16> to vector<16x16x8xbf16>
    %15 = vector.shape_cast %14 : vector<16x16x8xbf16> to vector<256x8xbf16>
    %16 = vector.extract_strided_slice %11 {offsets = [0, 2, 0], sizes = [16, 16, 8], strides = [1, 1, 1]} : vector<18x18x8xbf16> to vector<16x16x8xbf16>
    %17 = vector.shape_cast %16 : vector<16x16x8xbf16> to vector<256x8xbf16>
    %18 = vector.extract_strided_slice %11 {offsets = [1, 0, 0], sizes = [16, 16, 8], strides = [1, 1, 1]} : vector<18x18x8xbf16> to vector<16x16x8xbf16>
    %19 = vector.shape_cast %18 : vector<16x16x8xbf16> to vector<256x8xbf16>
    %20 = vector.extract_strided_slice %11 {offsets = [1, 1, 0], sizes = [16, 16, 8], strides = [1, 1, 1]} : vector<18x18x8xbf16> to vector<16x16x8xbf16>
    %21 = vector.shape_cast %20 : vector<16x16x8xbf16> to vector<256x8xbf16>
    %22 = vector.extract_strided_slice %11 {offsets = [1, 2, 0], sizes = [16, 16, 8], strides = [1, 1, 1]} : vector<18x18x8xbf16> to vector<16x16x8xbf16>
    %23 = vector.shape_cast %22 : vector<16x16x8xbf16> to vector<256x8xbf16>
    %24 = vector.extract_strided_slice %11 {offsets = [2, 0, 0], sizes = [16, 16, 8], strides = [1, 1, 1]} : vector<18x18x8xbf16> to vector<16x16x8xbf16>
    %25 = vector.shape_cast %24 : vector<16x16x8xbf16> to vector<256x8xbf16>
    %26 = vector.extract_strided_slice %11 {offsets = [2, 1, 0], sizes = [16, 16, 8], strides = [1, 1, 1]} : vector<18x18x8xbf16> to vector<16x16x8xbf16>
    %27 = vector.shape_cast %26 : vector<16x16x8xbf16> to vector<256x8xbf16>
    %28 = vector.extract_strided_slice %11 {offsets = [2, 2, 0], sizes = [16, 16, 8], strides = [1, 1, 1]} : vector<18x18x8xbf16> to vector<16x16x8xbf16>
    %29 = vector.shape_cast %28 : vector<16x16x8xbf16> to vector<256x8xbf16>
    %30 = tpu.concatenate %13, %15, %17, %19, %21, %23, %25, %27, %29 in 1 : vector<256x8xbf16>, vector<256x8xbf16>, vector<256x8xbf16>, vector<256x8xbf16>, vector<256x8xbf16>, vector<256x8xbf16>, vector<256x8xbf16>, vector<256x8xbf16>, vector<256x8xbf16> -> vector<256x72xbf16>
    %c0_15 = arith.constant 0 : index
    %c0_16 = arith.constant 0 : index
    %31 = vector.load %arg2[%c0_15, %c0_16] : memref<72x8xbf16, #tpu.memory_space<vmem>>, vector<72x8xbf16>
    %cst_17 = arith.constant dense<0.000000e+00> : vector<256x8xf32>
    %32 = tpu.matmul %30, %31, %cst_17 {dimension_numbers = #tpu.dot_dimension_numbers<[1], [0], [0], [1], [0, 0, 1, 1], [], []>} : vector<256x72xbf16>, vector<72x8xbf16>, vector<256x8xf32> -> vector<256x8xf32>
    %c0_18 = arith.constant 0 : index
    %c0_19 = arith.constant 0 : index
    %33 = vector.load %arg4[%c0_18, %c0_19] : memref<1x8xf32, #tpu.memory_space<vmem>>, vector<1x8xf32>
    %34 = vector.broadcast %33 : vector<1x8xf32> to vector<256x8xf32>
    %35 = arith.mulf %32, %34 : vector<256x8xf32>
    %c0_20 = arith.constant 0 : index
    %c0_21 = arith.constant 0 : index
    %36 = vector.load %arg5[%c0_20, %c0_21] : memref<1x8xf32, #tpu.memory_space<vmem>>, vector<1x8xf32>
    %37 = vector.broadcast %36 : vector<1x8xf32> to vector<256x8xf32>
    %38 = arith.addf %35, %37 : vector<256x8xf32>
    %cst_22 = arith.constant 0.000000e+00 : f32
    %39 = vector.broadcast %cst_22 : f32 to vector<256x8xf32>
    %40 = arith.maximumf %38, %39 : vector<256x8xf32>
    %41 = arith.truncf %40 : vector<256x8xf32> to vector<256x8xbf16>
    %42 = vector.shape_cast %41 : vector<256x8xbf16> to vector<16x16x8xbf16>
    %c1 = arith.constant 1 : index
    %c1_23 = arith.constant 1 : index
    %c0_24 = arith.constant 0 : index
    %43 = vector.load %arg9[%c1, %c1_23, %c0_24] : memref<18x18x8xbf16, #tpu.memory_space<vmem>>, vector<16x16x8xbf16>
    tpu.vector_store %arg9[%c1, %c1_23, %c0_24], %42 {strides = array<i32>} : memref<18x18x8xbf16, #tpu.memory_space<vmem>>, vector<16x16x8xbf16>,
    %c0_25 = arith.constant 0 : index
    %c0_26 = arith.constant 0 : index
    %c0_27 = arith.constant 0 : index
    %44 = vector.load %arg9[%c0_25, %c0_26, %c0_27] : memref<18x18x8xbf16, #tpu.memory_space<vmem>>, vector<16x16x8xbf16>
    %45 = vector.shape_cast %44 : vector<16x16x8xbf16> to vector<256x8xbf16>
    %c0_28 = arith.constant 0 : index
    %c1_29 = arith.constant 1 : index
    %c0_30 = arith.constant 0 : index
    %46 = vector.load %arg9[%c0_28, %c1_29, %c0_30] : memref<18x18x8xbf16, #tpu.memory_space<vmem>>, vector<16x16x8xbf16>
    %47 = vector.shape_cast %46 : vector<16x16x8xbf16> to vector<256x8xbf16>
    %c0_31 = arith.constant 0 : index
    %c2 = arith.constant 2 : index
    %c0_32 = arith.constant 0 : index
    %48 = vector.load %arg9[%c0_31, %c2, %c0_32] : memref<18x18x8xbf16, #tpu.memory_space<vmem>>, vector<16x16x8xbf16>
    %49 = vector.shape_cast %48 : vector<16x16x8xbf16> to vector<256x8xbf16>
    %c1_33 = arith.constant 1 : index
    %c0_34 = arith.constant 0 : index
    %c0_35 = arith.constant 0 : index
    %50 = vector.load %arg9[%c1_33, %c0_34, %c0_35] : memref<18x18x8xbf16, #tpu.memory_space<vmem>>, vector<16x16x8xbf16>
    %51 = vector.shape_cast %50 : vector<16x16x8xbf16> to vector<256x8xbf16>
    %c1_36 = arith.constant 1 : index
    %c1_37 = arith.constant 1 : index
    %c0_38 = arith.constant 0 : index
    %52 = vector.load %arg9[%c1_36, %c1_37, %c0_38] : memref<18x18x8xbf16, #tpu.memory_space<vmem>>, vector<16x16x8xbf16>
    %53 = vector.shape_cast %52 : vector<16x16x8xbf16> to vector<256x8xbf16>
    %c1_39 = arith.constant 1 : index
    %c2_40 = arith.constant 2 : index
    %c0_41 = arith.constant 0 : index
    %54 = vector.load %arg9[%c1_39, %c2_40, %c0_41] : memref<18x18x8xbf16, #tpu.memory_space<vmem>>, vector<16x16x8xbf16>
    %55 = vector.shape_cast %54 : vector<16x16x8xbf16> to vector<256x8xbf16>
    %c2_42 = arith.constant 2 : index
    %c0_43 = arith.constant 0 : index
    %c0_44 = arith.constant 0 : index
    %56 = vector.load %arg9[%c2_42, %c0_43, %c0_44] : memref<18x18x8xbf16, #tpu.memory_space<vmem>>, vector<16x16x8xbf16>
    %57 = vector.shape_cast %56 : vector<16x16x8xbf16> to vector<256x8xbf16>
    %c2_45 = arith.constant 2 : index
    %c1_46 = arith.constant 1 : index
    %c0_47 = arith.constant 0 : index
    %58 = vector.load %arg9[%c2_45, %c1_46, %c0_47] : memref<18x18x8xbf16, #tpu.memory_space<vmem>>, vector<16x16x8xbf16>
    %59 = vector.shape_cast %58 : vector<16x16x8xbf16> to vector<256x8xbf16>
    %c2_48 = arith.constant 2 : index
    %c2_49 = arith.constant 2 : index
    %c0_50 = arith.constant 0 : index
    %60 = vector.load %arg9[%c2_48, %c2_49, %c0_50] : memref<18x18x8xbf16, #tpu.memory_space<vmem>>, vector<16x16x8xbf16>
    %61 = vector.shape_cast %60 : vector<16x16x8xbf16> to vector<256x8xbf16>
    %62 = tpu.concatenate %45, %47, %49, %51, %53, %55, %57, %59, %61 in 1 : vector<256x8xbf16>, vector<256x8xbf16>, vector<256x8xbf16>, vector<256x8xbf16>, vector<256x8xbf16>, vector<256x8xbf16>, vector<256x8xbf16>, vector<256x8xbf16>, vector<256x8xbf16> -> vector<256x72xbf16>
    %c0_51 = arith.constant 0 : index
    %c0_52 = arith.constant 0 : index
    %63 = vector.load %arg3[%c0_51, %c0_52] : memref<72x8xbf16, #tpu.memory_space<vmem>>, vector<72x8xbf16>
    %cst_53 = arith.constant dense<0.000000e+00> : vector<256x8xf32>
    %64 = tpu.matmul %62, %63, %cst_53 {dimension_numbers = #tpu.dot_dimension_numbers<[1], [0], [0], [1], [0, 0, 1, 1], [], []>} : vector<256x72xbf16>, vector<72x8xbf16>, vector<256x8xf32> -> vector<256x8xf32>
    %c0_54 = arith.constant 0 : index
    %c0_55 = arith.constant 0 : index
    %65 = vector.load %arg6[%c0_54, %c0_55] : memref<1x8xf32, #tpu.memory_space<vmem>>, vector<1x8xf32>
    %66 = vector.broadcast %65 : vector<1x8xf32> to vector<256x8xf32>
    %67 = arith.mulf %64, %66 : vector<256x8xf32>
    %c0_56 = arith.constant 0 : index
    %c0_57 = arith.constant 0 : index
    %68 = vector.load %arg7[%c0_56, %c0_57] : memref<1x8xf32, #tpu.memory_space<vmem>>, vector<1x8xf32>
    %69 = vector.broadcast %68 : vector<1x8xf32> to vector<256x8xf32>
    %70 = arith.addf %67, %69 : vector<256x8xf32>
    %71 = arith.extf %21 : vector<256x8xbf16> to vector<256x8xf32>
    %72 = arith.addf %70, %71 : vector<256x8xf32>
    %cst_58 = arith.constant 0.000000e+00 : f32
    %73 = vector.broadcast %cst_58 : f32 to vector<256x8xf32>
    %74 = arith.maximumf %72, %73 : vector<256x8xf32>
    %c0_59 = arith.constant 0 : index
    %c0_60 = arith.constant 0 : index
    %c0_61 = arith.constant 0 : index
    %75 = vector.load %arg8[%c0_59, %c0_60, %c0_61] : memref<1x256x8xf32, #tpu.memory_space<vmem>>, vector<1x256x8xf32>
    %76 = vector.shape_cast %75 : vector<1x256x8xf32> to vector<256x8xf32>
    %77 = vector.shape_cast %74 : vector<256x8xf32> to vector<1x256x8xf32>
    tpu.vector_store %arg8[%c0_59, %c0_60, %c0_61], %77 {strides = array<i32>} : memref<1x256x8xf32, #tpu.memory_space<vmem>>, vector<1x256x8xf32>,
    return
  }
  func.func @transform_0(%arg0: i32) -> (i32, i32, i32, i32) {
    %c0_i32 = arith.constant 0 : i32
    %c0_i32_0 = arith.constant 0 : i32
    %c0_i32_1 = arith.constant 0 : i32
    %c0_i32_2 = arith.constant 0 : i32
    return %arg0, %c0_i32, %c0_i32_0, %c0_i32_1 : i32, i32, i32, i32
  }
  func.func @transform_1(%arg0: i32) -> (i32, i32) {
    %c0_i32 = arith.constant 0 : i32
    %c0_i32_0 = arith.constant 0 : i32
    %c0_i32_1 = arith.constant 0 : i32
    return %c0_i32, %c0_i32_0 : i32, i32
  }
  func.func @transform_2(%arg0: i32) -> (i32, i32) {
    %c0_i32 = arith.constant 0 : i32
    %c0_i32_0 = arith.constant 0 : i32
    %c0_i32_1 = arith.constant 0 : i32
    return %c0_i32, %c0_i32_0 : i32, i32
  }
  func.func @transform_3(%arg0: i32) -> (i32, i32) {
    %c0_i32 = arith.constant 0 : i32
    %c0_i32_0 = arith.constant 0 : i32
    %c0_i32_1 = arith.constant 0 : i32
    return %c0_i32, %c0_i32_0 : i32, i32
  }
  func.func @transform_4(%arg0: i32) -> (i32, i32) {
    %c0_i32 = arith.constant 0 : i32
    %c0_i32_0 = arith.constant 0 : i32
    %c0_i32_1 = arith.constant 0 : i32
    return %c0_i32, %c0_i32_0 : i32, i32
  }
  func.func @transform_5(%arg0: i32) -> (i32, i32) {
    %c0_i32 = arith.constant 0 : i32
    %c0_i32_0 = arith.constant 0 : i32
    %c0_i32_1 = arith.constant 0 : i32
    return %c0_i32, %c0_i32_0 : i32, i32
  }
  func.func @transform_6(%arg0: i32) -> (i32, i32) {
    %c0_i32 = arith.constant 0 : i32
    %c0_i32_0 = arith.constant 0 : i32
    %c0_i32_1 = arith.constant 0 : i32
    return %c0_i32, %c0_i32_0 : i32, i32
  }
  func.func @transform_7(%arg0: i32) -> (i32, i32, i32) {
    %c0_i32 = arith.constant 0 : i32
    %c0_i32_0 = arith.constant 0 : i32
    %c0_i32_1 = arith.constant 0 : i32
    return %arg0, %c0_i32, %c0_i32_0 : i32, i32, i32
  }
}

</mosaic_0001>

<llo_original>
// kernel: tpu_custom_call.1
$region0: #{tpu_custom_call.1}
  #allocation0 [shape = 'u32[]', space=smem, size = 0x4, offset = 0x4, fixed_abs, tag = 'smem constant byte address 0x4 - core index']
  #allocation1 [shape = 'u32[72,128]{1,0:T(1,128)}', space=vmem, size = 0x9000, scoped, tag = 'internal scratch']
  #allocation2 [shape = 'bf16[18,18,8]{2,1,0:T(8,128)(2,1)}', space=vmem, size = 0x1b000, scoped, tag = 'scratch operand']
  %s0 = inlined_call_operand.vmem [shape: bf16[2,18,18,8], index: 0, kind: input, shape index: {}]
  %s1 = inlined_call_operand.vmem [shape: bf16[72,8], index: 1, kind: input, shape index: {}]
  %s2 = inlined_call_operand.vmem [shape: bf16[72,8], index: 2, kind: input, shape index: {}]
  %s3 = inlined_call_operand.vmem [shape: f32[1,8], index: 3, kind: input, shape index: {}]
  %s4 = inlined_call_operand.vmem [shape: f32[1,8], index: 4, kind: input, shape index: {}]
  %s5 = inlined_call_operand.vmem [shape: f32[1,8], index: 5, kind: input, shape index: {}]
  %s6 = inlined_call_operand.vmem [shape: f32[1,8], index: 6, kind: input, shape index: {}]
  %s7 = inlined_call_operand.vmem [shape: f32[2,256,8], index: 7, kind: output, shape index: {}]
  %s8 = sld [smem:[#allocation0]]
  $region61: #{tpu_custom_call.1} parent=0
    _
  %s10 = ssub.s32 1, %s8
  %s11 = scalar_select 0, %s10, %s8
  loop: start=0, step=1, limit=4
  $region2: #{tpu_custom_call.1} parent=0 // loop_pre_header
    _
  $region3: #{tpu_custom_call.1} parent=0 // loop_header
    %s13 = sphi 0, %s17
    %p14 = scmp.ge.s32.totalorder %s13, 4
    %s23 = sphi 0, %s25
    %s26 = sphi 0, %s23
    %s27 = sphi 0, %s26
    %s43 = sphi 0, %s27
    %s47 = sphi 0, %s47
    %s49 = sphi 0, %s47
    %s50 = sphi 0, %s49
    %s64 = sphi 0, %s50
    %s68 = sphi 0, %s68
    %s70 = sphi 0, %s68
    %s71 = sphi 0, %s70
    %s85 = sphi 0, %s71
    %s89 = sphi 0, %s89
    %s91 = sphi 0, %s89
    %s92 = sphi 0, %s91
    %s106 = sphi 0, %s92
    %s110 = sphi 0, %s110
    %s112 = sphi 0, %s110
    %s113 = sphi 0, %s112
    %s127 = sphi 0, %s113
    %s131 = sphi 0, %s131
    %s133 = sphi 0, %s131
    %s134 = sphi 0, %s133
    %s148 = sphi 0, %s134
    %s152 = sphi 0, %s152
    %s154 = sphi 0, %s152
    %s155 = sphi 0, %s154
    %s169 = sphi 0, %s155
    %s175 = sphi 0, %s177
    %s178 = sphi 0, %s175
    %s179 = sphi 0, %s178
    %s195 = sphi 0, %s179
  $region4: #{tpu_custom_call.1} parent=0 // loop_header_branch
    %16 = sbr.rel (%p14) target = $region8
  $region5: #{tpu_custom_call.1} parent=0 // loop_body
    %s18 = ssub.s32 %s13, 1
    %s19 = ssub.s32 %s13, 2
    %s20 = sadd.s32 %s13, 1
    %s21 = ssub.s32 %s13, %s20
    %p22 = scmp.eq.s32.totalorder %s21, 0
    %s24 = sadd.s32 %s23, 1
    %s25 = scalar_select %p22, %s23, %s24
    %p28 = pneg %p22
    %p29 = scmp.eq.s32.totalorder %s13, 1
    %p30 = por %p28, %p29
    %p31 = scmp.ne.s32.totalorder %s23, %s26
    %p32 = scmp.eq.s32.totalorder %s13, 0
    %p33 = por %p31, %p32
    %p34 = scmp.ne.s32.totalorder %s23, %s26
    %p35 = scmp.eq.s32.totalorder %s18, 1
    %p36 = por %p34, %p35
    %p37 = scmp.ne.s32.totalorder %s26, %s27
    %p38 = scmp.eq.s32.totalorder %s18, 0
    %p39 = por %p37, %p38
    %p40 = scmp.ne.s32.totalorder %s26, %s27
    %p41 = scmp.eq.s32.totalorder %s19, 1
    %p42 = por %p40, %p41
    %p44 = scmp.ne.s32.totalorder %s27, %s43
    %p45 = scmp.eq.s32.totalorder %s19, 0
    %p46 = por %p44, %p45
    %s48 = sadd.s32 %s47, 1
    %p51 = scmp.eq.s32.totalorder %s13, 1
    %p52 = scmp.ne.s32.totalorder %s47, %s49
    %p53 = scmp.eq.s32.totalorder %s13, 0
    %p54 = por %p52, %p53
    %p55 = scmp.ne.s32.totalorder %s47, %s49
    %p56 = scmp.eq.s32.totalorder %s18, 1
    %p57 = por %p55, %p56
    %p58 = scmp.ne.s32.totalorder %s49, %s50
    %p59 = scmp.eq.s32.totalorder %s18, 0
    %p60 = por %p58, %p59
    %p61 = scmp.ne.s32.totalorder %s49, %s50
    %p62 = scmp.eq.s32.totalorder %s19, 1
    %p63 = por %p61, %p62
    %p65 = scmp.ne.s32.totalorder %s50, %s64
    %p66 = scmp.eq.s32.totalorder %s19, 0
    %p67 = por %p65, %p66
    %s69 = sadd.s32 %s68, 1
    %p72 = scmp.eq.s32.totalorder %s13, 1
    %p73 = scmp.ne.s32.totalorder %s68, %s70
    %p74 = scmp.eq.s32.totalorder %s13, 0
    %p75 = por %p73, %p74
    %p76 = scmp.ne.s32.totalorder %s68, %s70
    %p77 = scmp.eq.s32.totalorder %s18, 1
    %p78 = por %p76, %p77
    %p79 = scmp.ne.s32.totalorder %s70, %s71
    %p80 = scmp.eq.s32.totalorder %s18, 0
    %p81 = por %p79, %p80
    %p82 = scmp.ne.s32.totalorder %s70, %s71
    %p83 = scmp.eq.s32.totalorder %s19, 1
    %p84 = por %p82, %p83
    %p86 = scmp.ne.s32.totalorder %s71, %s85
    %p87 = scmp.eq.s32.totalorder %s19, 0
    %p88 = por %p86, %p87
    %s90 = sadd.s32 %s89, 1
    %p93 = scmp.eq.s32.totalorder %s13, 1
    %p94 = scmp.ne.s32.totalorder %s89, %s91
    %p95 = scmp.eq.s32.totalorder %s13, 0
    %p96 = por %p94, %p95
    %p97 = scmp.ne.s32.totalorder %s89, %s91
    %p98 = scmp.eq.s32.totalorder %s18, 1
    %p99 = por %p97, %p98
    %p100 = scmp.ne.s32.totalorder %s91, %s92
    %p101 = scmp.eq.s32.totalorder %s18, 0
    %p102 = por %p100, %p101
    %p103 = scmp.ne.s32.totalorder %s91, %s92
    %p104 = scmp.eq.s32.totalorder %s19, 1
    %p105 = por %p103, %p104
    %p107 = scmp.ne.s32.totalorder %s92, %s106
    %p108 = scmp.eq.s32.totalorder %s19, 0
    %p109 = por %p107, %p108
    %s111 = sadd.s32 %s110, 1
    %p114 = scmp.eq.s32.totalorder %s13, 1
    %p115 = scmp.ne.s32.totalorder %s110, %s112
    %p116 = scmp.eq.s32.totalorder %s13, 0
    %p117 = por %p115, %p116
    %p118 = scmp.ne.s32.totalorder %s110, %s112
    %p119 = scmp.eq.s32.totalorder %s18, 1
    %p120 = por %p118, %p119
    %p121 = scmp.ne.s32.totalorder %s112, %s113
    %p122 = scmp.eq.s32.totalorder %s18, 0
    %p123 = por %p121, %p122
    %p124 = scmp.ne.s32.totalorder %s112, %s113
    %p125 = scmp.eq.s32.totalorder %s19, 1
    %p126 = por %p124, %p125
    %p128 = scmp.ne.s32.totalorder %s113, %s127
    %p129 = scmp.eq.s32.totalorder %s19, 0
    %p130 = por %p128, %p129
    %s132 = sadd.s32 %s131, 1
    %p135 = scmp.eq.s32.totalorder %s13, 1
    %p136 = scmp.ne.s32.totalorder %s131, %s133
    %p137 = scmp.eq.s32.totalorder %s13, 0
    %p138 = por %p136, %p137
    %p139 = scmp.ne.s32.totalorder %s131, %s133
    %p140 = scmp.eq.s32.totalorder %s18, 1
    %p141 = por %p139, %p140
    %p142 = scmp.ne.s32.totalorder %s133, %s134
    %p143 = scmp.eq.s32.totalorder %s18, 0
    %p144 = por %p142, %p143
    %p145 = scmp.ne.s32.totalorder %s133, %s134
    %p146 = scmp.eq.s32.totalorder %s19, 1
    %p147 = por %p145, %p146
    %p149 = scmp.ne.s32.totalorder %s134, %s148
    %p150 = scmp.eq.s32.totalorder %s19, 0
    %p151 = por %p149, %p150
    %s153 = sadd.s32 %s152, 1
    %p156 = scmp.eq.s32.totalorder %s13, 1
    %p157 = scmp.ne.s32.totalorder %s152, %s154
    %p158 = scmp.eq.s32.totalorder %s13, 0
    %p159 = por %p157, %p158
    %p160 = scmp.ne.s32.totalorder %s152, %s154
    %p161 = scmp.eq.s32.totalorder %s18, 1
    %p162 = por %p160, %p161
    %p163 = scmp.ne.s32.totalorder %s154, %s155
    %p164 = scmp.eq.s32.totalorder %s18, 0
    %p165 = por %p163, %p164
    %p166 = scmp.ne.s32.totalorder %s154, %s155
    %p167 = scmp.eq.s32.totalorder %s19, 1
    %p168 = por %p166, %p167
    %p170 = scmp.ne.s32.totalorder %s155, %s169
    %p171 = scmp.eq.s32.totalorder %s19, 0
    %p172 = por %p170, %p171
    %s173 = ssub.s32 %s13, %s20
    %p174 = scmp.eq.s32.totalorder %s173, 0
    %s176 = sadd.s32 %s175, 1
    %s177 = scalar_select %p174, %s175, %s176
    %p180 = pneg %p174
    %p181 = scmp.eq.s32.totalorder %s13, 1
    %p182 = por %p180, %p181
    %p183 = scmp.ne.s32.totalorder %s175, %s178
    %p184 = scmp.eq.s32.totalorder %s13, 0
    %p185 = por %p183, %p184
    %p186 = scmp.ne.s32.totalorder %s175, %s178
    %p187 = scmp.eq.s32.totalorder %s18, 1
    %p188 = por %p186, %p187
    %p189 = scmp.ne.s32.totalorder %s178, %s179
    %p190 = scmp.eq.s32.totalorder %s18, 0
    %p191 = por %p189, %p190
    %p192 = scmp.ne.s32.totalorder %s178, %s179
    %p193 = scmp.eq.s32.totalorder %s19, 1
    %p194 = por %p192, %p193
    %p196 = scmp.ne.s32.totalorder %s179, %s195
    %p197 = scmp.eq.s32.totalorder %s19, 0
    %p198 = por %p196, %p197
    %p199 = scmp.le.s32.totalorder 1, %s13
    %p200 = scmp.lt.s32.totalorder %s13, 3
    %p201 = pnand %p199, %p200
    %p202 = pneg %p201
    // Predicated region
    $region9: #{tpu_custom_call.1} parent=5 // pred_check
      _
    $region10: #{tpu_custom_call.1} parent=5 // pred_check_branch
      %204 = sbr.rel (%p201) target = $region12
    $region11: #{tpu_custom_call.1} parent=5 // pred_region
      %s205 = ssub.s32 %s13, 1
      // Predicated region
      $region13: #{tpu_custom_call.1} parent=11 // pred_check
        %p206 = pneg %p60
      $region14: #{tpu_custom_call.1} parent=11 // pred_check_branch
        %208 = sbr.rel (%p206) target = $region16
      $region15: #{tpu_custom_call.1} parent=11 // pred_region
        _
      $region16: #{tpu_custom_call.1} parent=11 // pred_fallthru
        _
      // Predicated region
      $region17: #{tpu_custom_call.1} parent=11 // pred_check
        %p209 = pneg %p81
      $region18: #{tpu_custom_call.1} parent=11 // pred_check_branch
        %211 = sbr.rel (%p209) target = $region20
      $region19: #{tpu_custom_call.1} parent=11 // pred_region
        _
      $region20: #{tpu_custom_call.1} parent=11 // pred_fallthru
        _
      // Predicated region
      $region21: #{tpu_custom_call.1} parent=11 // pred_check
        %p212 = pneg %p102
      $region22: #{tpu_custom_call.1} parent=11 // pred_check_branch
        %214 = sbr.rel (%p212) target = $region24
      $region23: #{tpu_custom_call.1} parent=11 // pred_region
        _
      $region24: #{tpu_custom_call.1} parent=11 // pred_fallthru
        _
      // Predicated region
      $region25: #{tpu_custom_call.1} parent=11 // pred_check
        %p215 = pneg %p123
      $region26: #{tpu_custom_call.1} parent=11 // pred_check_branch
        %217 = sbr.rel (%p215) target = $region28
      $region27: #{tpu_custom_call.1} parent=11 // pred_region
        _
      $region28: #{tpu_custom_call.1} parent=11 // pred_fallthru
        _
      // Predicated region
      $region29: #{tpu_custom_call.1} parent=11 // pred_check
        %p218 = pneg %p144
      $region30: #{tpu_custom_call.1} parent=11 // pred_check_branch
        %220 = sbr.rel (%p218) target = $region32
      $region31: #{tpu_custom_call.1} parent=11 // pred_region
        _
      $region32: #{tpu_custom_call.1} parent=11 // pred_fallthru
        _
      // Predicated region
      $region33: #{tpu_custom_call.1} parent=11 // pred_check
        %p221 = pneg %p165
      $region34: #{tpu_custom_call.1} parent=11 // pred_check_branch
        %223 = sbr.rel (%p221) target = $region36
      $region35: #{tpu_custom_call.1} parent=11 // pred_region
        _
      $region36: #{tpu_custom_call.1} parent=11 // pred_fallthru
        _
    $region12: #{tpu_custom_call.1} parent=5 // pred_fallthru
      _
    %p224 = scmp.lt.s32.totalorder %s13, 2
    // Predicated region
    $region37: #{tpu_custom_call.1} parent=5 // pred_check
      %p225 = pneg %p224
    $region38: #{tpu_custom_call.1} parent=5 // pred_check_branch
      %227 = sbr.rel (%p225) target = $region40
    $region39: #{tpu_custom_call.1} parent=5 // pred_region
      // Predicated region
      $region41: #{tpu_custom_call.1} parent=39 // pred_check
        %p228 = pneg %p33
      $region42: #{tpu_custom_call.1} parent=39 // pred_check_branch
        %230 = sbr.rel (%p228) target = $region44
      $region43: #{tpu_custom_call.1} parent=39 // pred_region
        %p231 = scmp.lt.s32.totalorder %s13, 1
        %s232 = scalar_select %p231, %s13, 1
        %s233 = smul.addr %s232, 54
        %s234 = smul.addr %s233, 4
        %s235 = scalar_lea.vmem %s0, %s234
      $region44: #{tpu_custom_call.1} parent=39 // pred_fallthru
        _
    $region40: #{tpu_custom_call.1} parent=5 // pred_fallthru
      _
    %p236 = scmp.le.s32.totalorder 1, %s13
    %p237 = scmp.lt.s32.totalorder %s13, 3
    %p238 = pnand %p236, %p237
    %p239 = pneg %p238
    // Predicated region
    $region45: #{tpu_custom_call.1} parent=5 // pred_check
      _
    $region46: #{tpu_custom_call.1} parent=5 // pred_check_branch
      %241 = sbr.rel (%p238) target = $region48
    $region47: #{tpu_custom_call.1} parent=5 // pred_region
      %s242 = ssub.s32 %s13, 1
      %p243 = scmp.lt.s32.totalorder %s18, 1
      %s244 = scalar_select %p243, %s18, 1
      %s245 = smul.addr %s244, 54
      %s246 = smul.addr %s245, 4
      %s247 = scalar_lea.vmem %s0, %s246
      %p248 = pneg %p39
      %p249 = pneg %p36
      %p250 = pneg %p60
      %p251 = pneg %p57
      %p252 = pneg %p81
      %p253 = pneg %p78
      %p254 = pneg %p102
      %p255 = pneg %p99
      %p256 = pneg %p123
      %p257 = pneg %p120
      %p258 = pneg %p144
      %p259 = pneg %p141
      %p260 = pneg %p165
      %p261 = pneg %p162
      %p262 = pneg %p191
      %p263 = pneg %p188
      %p264 = scmp.lt.s32.totalorder %s18, 1
      %s265 = scalar_select %p264, %s18, 1
      %s266 = smul.addr %s265, 32
      %s267 = smul.addr %s266, 8
      %s268 = scalar_lea.vmem %s7, %s267
      %p269 = scmp.lt.s32.totalorder %s18, 1
      %s270 = scalar_select %p269, %s18, 1
      %s271 = smul.addr %s270, 54
      %s272 = smul.addr %s271, 4
      %s273 = scalar_lea.vmem %s0, %s272
      %p274 = scmp.lt.s32.totalorder %s18, 1
      %s275 = scalar_select %p274, %s18, 1
      %s276 = smul.addr %s275, 32
      %s277 = smul.addr %s276, 8
      %s278 = scalar_lea.vmem %s7, %s277
      %vm280 = vcmask 60416
      %281 = vst.msk [vmem:[#allocation2] sm:$0xf] %vm280, 0
      %282 = vst.msk [vmem:[#allocation2 + $0x4] sm:$0xf] %vm280, 0
      %vm283 = vcmask 57344
      %284 = vst.msk [vmem:[#allocation2 + $0x8] sm:$0x1] %vm283, 0
      %s285 = scalar_lea.vmem [#allocation2], 204
      %286 = vst.msk [vmem:[%s285] sm:$0xf] %vm280, 0
      %287 = vst.msk [vmem:[%s285 + $0x4] sm:$0xf] %vm280, 0
      %288 = vst.msk [vmem:[%s285 + $0x8] sm:$0x1] %vm283, 0
      %vm289 = vcmask 57344
      %vm290 = vsmask.f32 256
      %vm291 = vmand %vm289, %vm290
      %v292 = vld [vmem:[#allocation2] sm:$0x1]
      %v293 = vsel %vm291, 0, %v292
      %294 = vst [vmem:[#allocation2] sm:$0x1] %v293
      %v295 = vld [vmem:[#allocation2 + $0xc] sm:$0x1]
      %v296 = vsel %vm291, 0, %v295
      %297 = vst [vmem:[#allocation2 + $0xc] sm:$0x1] %v296
      %v298 = vld [vmem:[#allocation2 + $0x18] sm:$0x1]
      %v299 = vsel %vm291, 0, %v298
      %300 = vst [vmem:[#allocation2 + $0x18] sm:$0x1] %v299
      %v301 = vld [vmem:[#allocation2 + $0x24] sm:$0x1]
      %v302 = vsel %vm291, 0, %v301
      %303 = vst [vmem:[#allocation2 + $0x24] sm:$0x1] %v302
      %v304 = vld [vmem:[#allocation2 + $0x30] sm:$0x1]
      %v305 = vsel %vm291, 0, %v304
      %306 = vst [vmem:[#allocation2 + $0x30] sm:$0x1] %v305
      %v307 = vld [vmem:[#allocation2 + $0x3c] sm:$0x1]
      %v308 = vsel %vm291, 0, %v307
      %309 = vst [vmem:[#allocation2 + $0x3c] sm:$0x1] %v308
      %v310 = vld [vmem:[#allocation2 + $0x48] sm:$0x1]
      %v311 = vsel %vm291, 0, %v310
      %312 = vst [vmem:[#allocation2 + $0x48] sm:$0x1] %v311
      %v313 = vld [vmem:[#allocation2 + $0x54] sm:$0x1]
      %v314 = vsel %vm291, 0, %v313
      %315 = vst [vmem:[#allocation2 + $0x54] sm:$0x1] %v314
      %v316 = vld [vmem:[#allocation2 + $0x60] sm:$0x1]
      %v317 = vsel %vm291, 0, %v316
      %318 = vst [vmem:[#allocation2 + $0x60] sm:$0x1] %v317
      %v319 = vld [vmem:[#allocation2 + $0x6c] sm:$0x1]
      %v320 = vsel %vm291, 0, %v319
      %321 = vst [vmem:[#allocation2 + $0x6c] sm:$0x1] %v320
      %v322 = vld [vmem:[#allocation2 + $0x78] sm:$0x1]
      %v323 = vsel %vm291, 0, %v322
      %324 = vst [vmem:[#allocation2 + $0x78] sm:$0x1] %v323
      %v325 = vld [vmem:[#allocation2 + $0x84] sm:$0x1]
      %v326 = vsel %vm291, 0, %v325
      %327 = vst [vmem:[#allocation2 + $0x84] sm:$0x1] %v326
      %v328 = vld [vmem:[#allocation2 + $0x90] sm:$0x1]
      %v329 = vsel %vm291, 0, %v328
      %330 = vst [vmem:[#allocation2 + $0x90] sm:$0x1] %v329
      %v331 = vld [vmem:[#allocation2 + $0x9c] sm:$0x1]
      %v332 = vsel %vm291, 0, %v331
      %333 = vst [vmem:[#allocation2 + $0x9c] sm:$0x1] %v332
      %v334 = vld [vmem:[#allocation2 + $0xa8] sm:$0x1]
      %v335 = vsel %vm291, 0, %v334
      %336 = vst [vmem:[#allocation2 + $0xa8] sm:$0x1] %v335
      %v337 = vld [vmem:[#allocation2 + $0xb4] sm:$0x1]
      %v338 = vsel %vm291, 0, %v337
      %339 = vst [vmem:[#allocation2 + $0xb4] sm:$0x1] %v338
      %v340 = vld [vmem:[#allocation2 + $0xc0] sm:$0x1]
      %v341 = vsel %vm291, 0, %v340
      %342 = vst [vmem:[#allocation2 + $0xc0] sm:$0x1] %v341
      %v343 = vld [vmem:[#allocation2 + $0xcc] sm:$0x1]
      %v344 = vsel %vm291, 0, %v343
      %345 = vst [vmem:[#allocation2 + $0xcc] sm:$0x1] %v344
      %vm346 = vsmask.f32 7938
      %vm347 = vmand %vm289, %vm346
      %v348 = vld [vmem:[#allocation2 + $0x8] sm:$0x1]
      %v349 = vsel %vm347, 0, %v348
      %350 = vst [vmem:[#allocation2 + $0x8] sm:$0x1] %v349
      %v351 = vld [vmem:[#allocation2 + $0x14] sm:$0x1]
      %v352 = vsel %vm347, 0, %v351
      %353 = vst [vmem:[#allocation2 + $0x14] sm:$0x1] %v352
      %v354 = vld [vmem:[#allocation2 + $0x20] sm:$0x1]
      %v355 = vsel %vm347, 0, %v354
      %356 = vst [vmem:[#allocation2 + $0x20] sm:$0x1] %v355
      %v357 = vld [vmem:[#allocation2 + $0x2c] sm:$0x1]
      %v358 = vsel %vm347, 0, %v357
      %359 = vst [vmem:[#allocation2 + $0x2c] sm:$0x1] %v358
      %v360 = vld [vmem:[#allocation2 + $0x38] sm:$0x1]
      %v361 = vsel %vm347, 0, %v360
      %362 = vst [vmem:[#allocation2 + $0x38] sm:$0x1] %v361
      %v363 = vld [vmem:[#allocation2 + $0x44] sm:$0x1]
      %v364 = vsel %vm347, 0, %v363
      %365 = vst [vmem:[#allocation2 + $0x44] sm:$0x1] %v364
      %v366 = vld [vmem:[#allocation2 + $0x50] sm:$0x1]
      %v367 = vsel %vm347, 0, %v366
      %368 = vst [vmem:[#allocation2 + $0x50] sm:$0x1] %v367
      %v369 = vld [vmem:[#allocation2 + $0x5c] sm:$0x1]
      %v370 = vsel %vm347, 0, %v369
      %371 = vst [vmem:[#allocation2 + $0x5c] sm:$0x1] %v370
      %v372 = vld [vmem:[#allocation2 + $0x68] sm:$0x1]
      %v373 = vsel %vm347, 0, %v372
      %374 = vst [vmem:[#allocation2 + $0x68] sm:$0x1] %v373
      %v375 = vld [vmem:[#allocation2 + $0x74] sm:$0x1]
      %v376 = vsel %vm347, 0, %v375
      %377 = vst [vmem:[#allocation2 + $0x74] sm:$0x1] %v376
      %v378 = vld [vmem:[#allocation2 + $0x80] sm:$0x1]
      %v379 = vsel %vm347, 0, %v378
      %380 = vst [vmem:[#allocation2 + $0x80] sm:$0x1] %v379
      %v381 = vld [vmem:[#allocation2 + $0x8c] sm:$0x1]
      %v382 = vsel %vm347, 0, %v381
      %383 = vst [vmem:[#allocation2 + $0x8c] sm:$0x1] %v382
      %v384 = vld [vmem:[#allocation2 + $0x98] sm:$0x1]
      %v385 = vsel %vm347, 0, %v384
      %386 = vst [vmem:[#allocation2 + $0x98] sm:$0x1] %v385
      %v387 = vld [vmem:[#allocation2 + $0xa4] sm:$0x1]
      %v388 = vsel %vm347, 0, %v387
      %389 = vst [vmem:[#allocation2 + $0xa4] sm:$0x1] %v388
      %v390 = vld [vmem:[#allocation2 + $0xb0] sm:$0x1]
      %v391 = vsel %vm347, 0, %v390
      %392 = vst [vmem:[#allocation2 + $0xb0] sm:$0x1] %v391
      %v393 = vld [vmem:[#allocation2 + $0xbc] sm:$0x1]
      %v394 = vsel %vm347, 0, %v393
      %395 = vst [vmem:[#allocation2 + $0xbc] sm:$0x1] %v394
      %v396 = vld [vmem:[#allocation2 + $0xc8] sm:$0x1]
      %v397 = vsel %vm347, 0, %v396
      %398 = vst [vmem:[#allocation2 + $0xc8] sm:$0x1] %v397
      %v399 = vld [vmem:[#allocation2 + $0xd4] sm:$0x1]
      %v400 = vsel %vm347, 0, %v399
      %401 = vst [vmem:[#allocation2 + $0xd4] sm:$0x1] %v400
      %v402 = vld [vmem:[%s273] sm:$0xf]
      %v403 = vld [vmem:[%s273 + $0x4] sm:$0xf]
      %v404 = vld [vmem:[%s273 + $0x8] sm:$0x1]
      %v405 = vld [vmem:[%s273 + $0xc] sm:$0xf]
      %v406 = vld [vmem:[%s273 + $0x10] sm:$0xf]
      %v407 = vld [vmem:[%s273 + $0x14] sm:$0x1]
      %v408 = vld [vmem:[%s273 + $0x18] sm:$0xf]
      %v409 = vld [vmem:[%s273 + $0x1c] sm:$0xf]
      %v410 = vld [vmem:[%s273 + $0x20] sm:$0x1]
      %v411 = vld [vmem:[%s273 + $0x24] sm:$0xf]
      %v412 = vld [vmem:[%s273 + $0x28] sm:$0xf]
      %v413 = vld [vmem:[%s273 + $0x2c] sm:$0x1]
      %v414 = vld [vmem:[%s273 + $0x30] sm:$0xf]
      %v415 = vld [vmem:[%s273 + $0x34] sm:$0xf]
      %v416 = vld [vmem:[%s273 + $0x38] sm:$0x1]
      %v417 = vld [vmem:[%s273 + $0x3c] sm:$0xf]
      %v418 = vld [vmem:[%s273 + $0x40] sm:$0xf]
      %v419 = vld [vmem:[%s273 + $0x44] sm:$0x1]
      %v420 = vld [vmem:[%s273 + $0x48] sm:$0xf]
      %v421 = vld [vmem:[%s273 + $0x4c] sm:$0xf]
      %v422 = vld [vmem:[%s273 + $0x50] sm:$0x1]
      %v423 = vld [vmem:[%s273 + $0x54] sm:$0xf]
      %v424 = vld [vmem:[%s273 + $0x58] sm:$0xf]
      %v425 = vld [vmem:[%s273 + $0x5c] sm:$0x1]
      %v426 = vld [vmem:[%s273 + $0x60] sm:$0xf]
      %v427 = vld [vmem:[%s273 + $0x64] sm:$0xf]
      %v428 = vld [vmem:[%s273 + $0x68] sm:$0x1]
      %v429 = vld [vmem:[%s273 + $0x6c] sm:$0xf]
      %v430 = vld [vmem:[%s273 + $0x70] sm:$0xf]
      %v431 = vld [vmem:[%s273 + $0x74] sm:$0x1]
      %v432 = vld [vmem:[%s273 + $0x78] sm:$0xf]
      %v433 = vld [vmem:[%s273 + $0x7c] sm:$0xf]
      %v434 = vld [vmem:[%s273 + $0x80] sm:$0x1]
      %v435 = vld [vmem:[%s273 + $0x84] sm:$0xf]
      %v436 = vld [vmem:[%s273 + $0x88] sm:$0xf]
      %v437 = vld [vmem:[%s273 + $0x8c] sm:$0x1]
      %v438 = vld [vmem:[%s273 + $0x90] sm:$0xf]
      %v439 = vld [vmem:[%s273 + $0x94] sm:$0xf]
      %v440 = vld [vmem:[%s273 + $0x98] sm:$0x1]
      %v441 = vld [vmem:[%s273 + $0x9c] sm:$0xf]
      %v442 = vld [vmem:[%s273 + $0xa0] sm:$0xf]
      %v443 = vld [vmem:[%s273 + $0xa4] sm:$0x1]
      %v444 = vld [vmem:[%s273 + $0xa8] sm:$0xf]
      %v445 = vld [vmem:[%s273 + $0xac] sm:$0xf]
      %v446 = vld [vmem:[%s273 + $0xb0] sm:$0x1]
      %v447 = vld [vmem:[%s273 + $0xb4] sm:$0xf]
      %v448 = vld [vmem:[%s273 + $0xb8] sm:$0xf]
      %v449 = vld [vmem:[%s273 + $0xbc] sm:$0x1]
      %v450 = vld [vmem:[%s273 + $0xc0] sm:$0xf]
      %v451 = vld [vmem:[%s273 + $0xc4] sm:$0xf]
      %v452 = vld [vmem:[%s273 + $0xc8] sm:$0x1]
      %v453 = vld [vmem:[%s273 + $0xcc] sm:$0xf]
      %v454 = vld [vmem:[%s273 + $0xd0] sm:$0xf]
      %v455 = vld [vmem:[%s273 + $0xd4] sm:$0x1]
      %vm456 = vsmask.f32 3328
      %vm457 = vsmask.f32 7440
      %vm458 = vmor %vm456, %vm457
      %v460 = vshrl.u32 %v402, 16
      %v462 = vrot.slane %v460, 4
      %v463 = vshll.u32 %v402, 16
      %v465 = vrot.slane %v463, 5
      %v466 = vor.u32 %v462, %v465
      %v467 = vrot.slane %v466, 4
      %v469 = vshll.u32 %v403, 16
      %v471 = vrot.slane %v469, 5
      %v472 = vsel %vm458, %v467, %v471
      %v473 = vshrl.u32 %v403, 16
      %v475 = vrot.slane %v473, 4
      %v476 = vor.u32 %v475, %v471
      %v477 = vrot.slane %v476, 4
      %v479 = vshll.u32 %v404, 16
      %v481 = vrot.slane %v479, 5
      %v482 = vsel %vm458, %v477, %v481
      %v484 = vshrl.u32 %v405, 16
      %v486 = vrot.slane %v484, 4
      %v487 = vshll.u32 %v405, 16
      %v489 = vrot.slane %v487, 5
      %v490 = vor.u32 %v486, %v489
      %v491 = vrot.slane %v490, 4
      %v493 = vshll.u32 %v406, 16
      %v495 = vrot.slane %v493, 5
      %v496 = vsel %vm458, %v491, %v495
      %v497 = vshrl.u32 %v406, 16
      %v499 = vrot.slane %v497, 4
      %v500 = vor.u32 %v499, %v495
      %v501 = vrot.slane %v500, 4
      %v503 = vshll.u32 %v407, 16
      %v505 = vrot.slane %v503, 5
      %v506 = vsel %vm458, %v501, %v505
      %v508 = vshrl.u32 %v408, 16
      %v510 = vrot.slane %v508, 4
      %v511 = vshll.u32 %v408, 16
      %v513 = vrot.slane %v511, 5
      %v514 = vor.u32 %v510, %v513
      %v515 = vrot.slane %v514, 4
      %v517 = vshll.u32 %v409, 16
      %v519 = vrot.slane %v517, 5
      %v520 = vsel %vm458, %v515, %v519
      %v521 = vshrl.u32 %v409, 16
      %v523 = vrot.slane %v521, 4
      %v524 = vor.u32 %v523, %v519
      %v525 = vrot.slane %v524, 4
      %v527 = vshll.u32 %v410, 16
      %v529 = vrot.slane %v527, 5
      %v530 = vsel %vm458, %v525, %v529
      %v532 = vshrl.u32 %v411, 16
      %v534 = vrot.slane %v532, 4
      %v535 = vshll.u32 %v411, 16
      %v537 = vrot.slane %v535, 5
      %v538 = vor.u32 %v534, %v537
      %v539 = vrot.slane %v538, 4
      %v541 = vshll.u32 %v412, 16
      %v543 = vrot.slane %v541, 5
      %v544 = vsel %vm458, %v539, %v543
      %v545 = vshrl.u32 %v412, 16
      %v547 = vrot.slane %v545, 4
      %v548 = vor.u32 %v547, %v543
      %v549 = vrot.slane %v548, 4
      %v551 = vshll.u32 %v413, 16
      %v553 = vrot.slane %v551, 5
      %v554 = vsel %vm458, %v549, %v553
      %v556 = vshrl.u32 %v414, 16
      %v558 = vrot.slane %v556, 4
      %v559 = vshll.u32 %v414, 16
      %v561 = vrot.slane %v559, 5
      %v562 = vor.u32 %v558, %v561
      %v563 = vrot.slane %v562, 4
      %v565 = vshll.u32 %v415, 16
      %v567 = vrot.slane %v565, 5
      %v568 = vsel %vm458, %v563, %v567
      %v569 = vshrl.u32 %v415, 16
      %v571 = vrot.slane %v569, 4
      %v572 = vor.u32 %v571, %v567
      %v573 = vrot.slane %v572, 4
      %v575 = vshll.u32 %v416, 16
      %v577 = vrot.slane %v575, 5
      %v578 = vsel %vm458, %v573, %v577
      %v580 = vshrl.u32 %v417, 16
      %v582 = vrot.slane %v580, 4
      %v583 = vshll.u32 %v417, 16
      %v585 = vrot.slane %v583, 5
      %v586 = vor.u32 %v582, %v585
      %v587 = vrot.slane %v586, 4
      %v589 = vshll.u32 %v418, 16
      %v591 = vrot.slane %v589, 5
      %v592 = vsel %vm458, %v587, %v591
      %v593 = vshrl.u32 %v418, 16
      %v595 = vrot.slane %v593, 4
      %v596 = vor.u32 %v595, %v591
      %v597 = vrot.slane %v596, 4
      %v599 = vshll.u32 %v419, 16
      %v601 = vrot.slane %v599, 5
      %v602 = vsel %vm458, %v597, %v601
      %v604 = vshrl.u32 %v420, 16
      %v606 = vrot.slane %v604, 4
      %v607 = vshll.u32 %v420, 16
      %v609 = vrot.slane %v607, 5
      %v610 = vor.u32 %v606, %v609
      %v611 = vrot.slane %v610, 4
      %v613 = vshll.u32 %v421, 16
      %v615 = vrot.slane %v613, 5
      %v616 = vsel %vm458, %v611, %v615
      %v617 = vshrl.u32 %v421, 16
      %v619 = vrot.slane %v617, 4
      %v620 = vor.u32 %v619, %v615
      %v621 = vrot.slane %v620, 4
      %v623 = vshll.u32 %v422, 16
      %v625 = vrot.slane %v623, 5
      %v626 = vsel %vm458, %v621, %v625
      %v628 = vshrl.u32 %v423, 16
      %v630 = vrot.slane %v628, 4
      %v631 = vshll.u32 %v423, 16
      %v633 = vrot.slane %v631, 5
      %v634 = vor.u32 %v630, %v633
      %v635 = vrot.slane %v634, 4
      %v637 = vshll.u32 %v424, 16
      %v639 = vrot.slane %v637, 5
      %v640 = vsel %vm458, %v635, %v639
      %v641 = vshrl.u32 %v424, 16
      %v643 = vrot.slane %v641, 4
      %v644 = vor.u32 %v643, %v639
      %v645 = vrot.slane %v644, 4
      %v647 = vshll.u32 %v425, 16
      %v649 = vrot.slane %v647, 5
      %v650 = vsel %vm458, %v645, %v649
      %v652 = vshrl.u32 %v426, 16
      %v654 = vrot.slane %v652, 4
      %v655 = vshll.u32 %v426, 16
      %v657 = vrot.slane %v655, 5
      %v658 = vor.u32 %v654, %v657
      %v659 = vrot.slane %v658, 4
      %v661 = vshll.u32 %v427, 16
      %v663 = vrot.slane %v661, 5
      %v664 = vsel %vm458, %v659, %v663
      %v665 = vshrl.u32 %v427, 16
      %v667 = vrot.slane %v665, 4
      %v668 = vor.u32 %v667, %v663
      %v669 = vrot.slane %v668, 4
      %v671 = vshll.u32 %v428, 16
      %v673 = vrot.slane %v671, 5
      %v674 = vsel %vm458, %v669, %v673
      %v676 = vshrl.u32 %v429, 16
      %v678 = vrot.slane %v676, 4
      %v679 = vshll.u32 %v429, 16
      %v681 = vrot.slane %v679, 5
      %v682 = vor.u32 %v678, %v681
      %v683 = vrot.slane %v682, 4
      %v685 = vshll.u32 %v430, 16
      %v687 = vrot.slane %v685, 5
      %v688 = vsel %vm458, %v683, %v687
      %v689 = vshrl.u32 %v430, 16
      %v691 = vrot.slane %v689, 4
      %v692 = vor.u32 %v691, %v687
      %v693 = vrot.slane %v692, 4
      %v695 = vshll.u32 %v431, 16
      %v697 = vrot.slane %v695, 5
      %v698 = vsel %vm458, %v693, %v697
      %v700 = vshrl.u32 %v432, 16
      %v702 = vrot.slane %v700, 4
      %v703 = vshll.u32 %v432, 16
      %v705 = vrot.slane %v703, 5
      %v706 = vor.u32 %v702, %v705
      %v707 = vrot.slane %v706, 4
      %v709 = vshll.u32 %v433, 16
      %v711 = vrot.slane %v709, 5
      %v712 = vsel %vm458, %v707, %v711
      %v713 = vshrl.u32 %v433, 16
      %v715 = vrot.slane %v713, 4
      %v716 = vor.u32 %v715, %v711
      %v717 = vrot.slane %v716, 4
      %v719 = vshll.u32 %v434, 16
      %v721 = vrot.slane %v719, 5
      %v722 = vsel %vm458, %v717, %v721
      %v724 = vshrl.u32 %v435, 16
      %v726 = vrot.slane %v724, 4
      %v727 = vshll.u32 %v435, 16
      %v729 = vrot.slane %v727, 5
      %v730 = vor.u32 %v726, %v729
      %v731 = vrot.slane %v730, 4
      %v733 = vshll.u32 %v436, 16
      %v735 = vrot.slane %v733, 5
      %v736 = vsel %vm458, %v731, %v735
      %v737 = vshrl.u32 %v436, 16
      %v739 = vrot.slane %v737, 4
      %v740 = vor.u32 %v739, %v735
      %v741 = vrot.slane %v740, 4
      %v743 = vshll.u32 %v437, 16
      %v745 = vrot.slane %v743, 5
      %v746 = vsel %vm458, %v741, %v745
      %v748 = vshrl.u32 %v438, 16
      %v750 = vrot.slane %v748, 4
      %v751 = vshll.u32 %v438, 16
      %v753 = vrot.slane %v751, 5
      %v754 = vor.u32 %v750, %v753
      %v755 = vrot.slane %v754, 4
      %v757 = vshll.u32 %v439, 16
      %v759 = vrot.slane %v757, 5
      %v760 = vsel %vm458, %v755, %v759
      %v761 = vshrl.u32 %v439, 16
      %v763 = vrot.slane %v761, 4
      %v764 = vor.u32 %v763, %v759
      %v765 = vrot.slane %v764, 4
      %v767 = vshll.u32 %v440, 16
      %v769 = vrot.slane %v767, 5
      %v770 = vsel %vm458, %v765, %v769
      %v772 = vshrl.u32 %v441, 16
      %v774 = vrot.slane %v772, 4
      %v775 = vshll.u32 %v441, 16
      %v777 = vrot.slane %v775, 5
      %v778 = vor.u32 %v774, %v777
      %v779 = vrot.slane %v778, 4
      %v781 = vshll.u32 %v442, 16
      %v783 = vrot.slane %v781, 5
      %v784 = vsel %vm458, %v779, %v783
      %v785 = vshrl.u32 %v442, 16
      %v787 = vrot.slane %v785, 4
      %v788 = vor.u32 %v787, %v783
      %v789 = vrot.slane %v788, 4
      %v791 = vshll.u32 %v443, 16
      %v793 = vrot.slane %v791, 5
      %v794 = vsel %vm458, %v789, %v793
      %v796 = vshrl.u32 %v444, 16
      %v798 = vrot.slane %v796, 4
      %v799 = vshll.u32 %v444, 16
      %v801 = vrot.slane %v799, 5
      %v802 = vor.u32 %v798, %v801
      %v803 = vrot.slane %v802, 4
      %v805 = vshll.u32 %v445, 16
      %v807 = vrot.slane %v805, 5
      %v808 = vsel %vm458, %v803, %v807
      %v809 = vshrl.u32 %v445, 16
      %v811 = vrot.slane %v809, 4
      %v812 = vor.u32 %v811, %v807
      %v813 = vrot.slane %v812, 4
      %v815 = vshll.u32 %v446, 16
      %v817 = vrot.slane %v815, 5
      %v818 = vsel %vm458, %v813, %v817
      %v820 = vshrl.u32 %v447, 16
      %v822 = vrot.slane %v820, 4
      %v823 = vshll.u32 %v447, 16
      %v825 = vrot.slane %v823, 5
      %v826 = vor.u32 %v822, %v825
      %v827 = vrot.slane %v826, 4
      %v829 = vshll.u32 %v448, 16
      %v831 = vrot.slane %v829, 5
      %v832 = vsel %vm458, %v827, %v831
      %v833 = vshrl.u32 %v448, 16
      %v835 = vrot.slane %v833, 4
      %v836 = vor.u32 %v835, %v831
      %v837 = vrot.slane %v836, 4
      %v839 = vshll.u32 %v449, 16
      %v841 = vrot.slane %v839, 5
      %v842 = vsel %vm458, %v837, %v841
      %vm891 = vcmask 1042432
      %vm892 = vcmask 1046532
      %vm893 = vmor %vm891, %vm892
      %v894 = vrot.slane %v402, 5
      %v895 = vrot.slane %v894, 4
      %v896 = vrot.slane %v403, 5
      %v897 = vsel %vm893, %v895, %v896
      %v898 = vrot.slane %v896, 4
      %v899 = vrot.slane %v404, 5
      %v900 = vsel %vm893, %v898, %v899
      %v901 = vrot.slane %v405, 5
      %v902 = vrot.slane %v901, 4
      %v903 = vrot.slane %v406, 5
      %v904 = vsel %vm893, %v902, %v903
      %v905 = vrot.slane %v903, 4
      %v906 = vrot.slane %v407, 5
      %v907 = vsel %vm893, %v905, %v906
      %v908 = vrot.slane %v408, 5
      %v909 = vrot.slane %v908, 4
      %v910 = vrot.slane %v409, 5
      %v911 = vsel %vm893, %v909, %v910
      %v912 = vrot.slane %v910, 4
      %v913 = vrot.slane %v410, 5
      %v914 = vsel %vm893, %v912, %v913
      %v915 = vrot.slane %v411, 5
      %v916 = vrot.slane %v915, 4
      %v917 = vrot.slane %v412, 5
      %v918 = vsel %vm893, %v916, %v917
      %v919 = vrot.slane %v917, 4
      %v920 = vrot.slane %v413, 5
      %v921 = vsel %vm893, %v919, %v920
      %v922 = vrot.slane %v414, 5
      %v923 = vrot.slane %v922, 4
      %v924 = vrot.slane %v415, 5
      %v925 = vsel %vm893, %v923, %v924
      %v926 = vrot.slane %v924, 4
      %v927 = vrot.slane %v416, 5
      %v928 = vsel %vm893, %v926, %v927
      %v929 = vrot.slane %v417, 5
      %v930 = vrot.slane %v929, 4
      %v931 = vrot.slane %v418, 5
      %v932 = vsel %vm893, %v930, %v931
      %v933 = vrot.slane %v931, 4
      %v934 = vrot.slane %v419, 5
      %v935 = vsel %vm893, %v933, %v934
      %v936 = vrot.slane %v420, 5
      %v937 = vrot.slane %v936, 4
      %v938 = vrot.slane %v421, 5
      %v939 = vsel %vm893, %v937, %v938
      %v940 = vrot.slane %v938, 4
      %v941 = vrot.slane %v422, 5
      %v942 = vsel %vm893, %v940, %v941
      %v943 = vrot.slane %v423, 5
      %v944 = vrot.slane %v943, 4
      %v945 = vrot.slane %v424, 5
      %v946 = vsel %vm893, %v944, %v945
      %v947 = vrot.slane %v945, 4
      %v948 = vrot.slane %v425, 5
      %v949 = vsel %vm893, %v947, %v948
      %v950 = vrot.slane %v426, 5
      %v951 = vrot.slane %v950, 4
      %v952 = vrot.slane %v427, 5
      %v953 = vsel %vm893, %v951, %v952
      %v954 = vrot.slane %v952, 4
      %v955 = vrot.slane %v428, 5
      %v956 = vsel %vm893, %v954, %v955
      %v957 = vrot.slane %v429, 5
      %v958 = vrot.slane %v957, 4
      %v959 = vrot.slane %v430, 5
      %v960 = vsel %vm893, %v958, %v959
      %v961 = vrot.slane %v959, 4
      %v962 = vrot.slane %v431, 5
      %v963 = vsel %vm893, %v961, %v962
      %v964 = vrot.slane %v432, 5
      %v965 = vrot.slane %v964, 4
      %v966 = vrot.slane %v433, 5
      %v967 = vsel %vm893, %v965, %v966
      %v968 = vrot.slane %v966, 4
      %v969 = vrot.slane %v434, 5
      %v970 = vsel %vm893, %v968, %v969
      %v971 = vrot.slane %v435, 5
      %v972 = vrot.slane %v971, 4
      %v973 = vrot.slane %v436, 5
      %v974 = vsel %vm893, %v972, %v973
      %v975 = vrot.slane %v973, 4
      %v976 = vrot.slane %v437, 5
      %v977 = vsel %vm893, %v975, %v976
      %v978 = vrot.slane %v438, 5
      %v979 = vrot.slane %v978, 4
      %v980 = vrot.slane %v439, 5
      %v981 = vsel %vm893, %v979, %v980
      %v982 = vrot.slane %v980, 4
      %v983 = vrot.slane %v440, 5
      %v984 = vsel %vm893, %v982, %v983
      %v985 = vrot.slane %v441, 5
      %v986 = vrot.slane %v985, 4
      %v987 = vrot.slane %v442, 5
      %v988 = vsel %vm893, %v986, %v987
      %v989 = vrot.slane %v987, 4
      %v990 = vrot.slane %v443, 5
      %v991 = vsel %vm893, %v989, %v990
      %v992 = vrot.slane %v444, 5
      %v993 = vrot.slane %v992, 4
      %v994 = vrot.slane %v445, 5
      %v995 = vsel %vm893, %v993, %v994
      %v996 = vrot.slane %v994, 4
      %v997 = vrot.slane %v446, 5
      %v998 = vsel %vm893, %v996, %v997
      %v999 = vrot.slane %v447, 5
      %v1000 = vrot.slane %v999, 4
      %v1001 = vrot.slane %v448, 5
      %v1002 = vsel %vm893, %v1000, %v1001
      %v1003 = vrot.slane %v1001, 4
      %v1004 = vrot.slane %v449, 5
      %v1005 = vsel %vm893, %v1003, %v1004
      %v1007 = vshrl.u32 %v450, 16
      %v1009 = vrot.slane %v1007, 4
      %v1010 = vshll.u32 %v450, 16
      %v1012 = vrot.slane %v1010, 5
      %v1013 = vor.u32 %v1009, %v1012
      %v1014 = vrot.slane %v1013, 4
      %v1016 = vshll.u32 %v451, 16
      %v1018 = vrot.slane %v1016, 5
      %v1019 = vsel %vm458, %v1014, %v1018
      %v1020 = vshrl.u32 %v451, 16
      %v1022 = vrot.slane %v1020, 4
      %v1023 = vor.u32 %v1022, %v1018
      %v1024 = vrot.slane %v1023, 4
      %v1026 = vshll.u32 %v452, 16
      %v1028 = vrot.slane %v1026, 5
      %v1029 = vsel %vm458, %v1024, %v1028
      %v1065 = vrot.slane %v450, 5
      %v1066 = vrot.slane %v1065, 4
      %v1067 = vrot.slane %v451, 5
      %v1068 = vsel %vm893, %v1066, %v1067
      %v1069 = vrot.slane %v1067, 4
      %v1070 = vrot.slane %v452, 5
      %v1071 = vsel %vm893, %v1069, %v1070
      %v1073 = vshrl.u32 %v453, 16
      %v1075 = vrot.slane %v1073, 4
      %v1076 = vshll.u32 %v453, 16
      %v1078 = vrot.slane %v1076, 5
      %v1079 = vor.u32 %v1075, %v1078
      %v1080 = vrot.slane %v1079, 4
      %v1082 = vshll.u32 %v454, 16
      %v1084 = vrot.slane %v1082, 5
      %v1085 = vsel %vm458, %v1080, %v1084
      %v1086 = vshrl.u32 %v454, 16
      %v1088 = vrot.slane %v1086, 4
      %v1089 = vor.u32 %v1088, %v1084
      %v1090 = vrot.slane %v1089, 4
      %v1092 = vshll.u32 %v455, 16
      %v1094 = vrot.slane %v1092, 5
      %v1095 = vsel %vm458, %v1090, %v1094
      %v1099 = vrot.slane %v453, 5
      %v1100 = vrot.slane %v1099, 4
      %v1101 = vrot.slane %v454, 5
      %v1102 = vsel %vm893, %v1100, %v1101
      %v1103 = vrot.slane %v1101, 4
      %v1104 = vrot.slane %v455, 5
      %v1105 = vsel %vm893, %v1103, %v1104
      %v1106 = vunpack.c.l.b16 %v402
      %v1107 = vunpack.c.l.b16 %v403
      %v1108 = vunpack.c.l.b16 %v405
      %v1109 = vunpack.c.l.b16 %v406
      %v1110 = vunpack.c.l.b16 %v408
      %v1111 = vunpack.c.l.b16 %v409
      %v1112 = vunpack.c.l.b16 %v411
      %v1113 = vunpack.c.l.b16 %v412
      %v1114 = vunpack.c.l.b16 %v414
      %v1115 = vunpack.c.l.b16 %v415
      %v1116 = vunpack.c.l.b16 %v417
      %v1117 = vunpack.c.l.b16 %v418
      %v1118 = vunpack.c.l.b16 %v420
      %v1119 = vunpack.c.l.b16 %v421
      %v1120 = vunpack.c.l.b16 %v423
      %v1121 = vunpack.c.l.b16 %v424
      %v1122 = vunpack.c.l.b16 %v426
      %v1123 = vunpack.c.l.b16 %v427
      %v1124 = vunpack.c.l.b16 %v429
      %v1125 = vunpack.c.l.b16 %v430
      %v1126 = vunpack.c.l.b16 %v432
      %v1127 = vunpack.c.l.b16 %v433
      %v1128 = vunpack.c.l.b16 %v435
      %v1129 = vunpack.c.l.b16 %v436
      %v1130 = vunpack.c.l.b16 %v438
      %v1131 = vunpack.c.l.b16 %v439
      %v1132 = vunpack.c.l.b16 %v441
      %v1133 = vunpack.c.l.b16 %v442
      %v1134 = vunpack.c.l.b16 %v444
      %v1135 = vunpack.c.l.b16 %v445
      %v1136 = vunpack.c.l.b16 %v447
      %v1137 = vunpack.c.l.b16 %v448
      %v1138 = vpack.c.b16 %v1107, %v1106
      %v1139 = vpack.c.b16 %v1109, %v1108
      %v1140 = vpack.c.b16 %v1111, %v1110
      %v1141 = vpack.c.b16 %v1113, %v1112
      %v1142 = vpack.c.b16 %v1115, %v1114
      %v1143 = vpack.c.b16 %v1117, %v1116
      %v1144 = vpack.c.b16 %v1119, %v1118
      %v1145 = vpack.c.b16 %v1121, %v1120
      %v1146 = vpack.c.b16 %v1123, %v1122
      %v1147 = vpack.c.b16 %v1125, %v1124
      %v1148 = vpack.c.b16 %v1127, %v1126
      %v1149 = vpack.c.b16 %v1129, %v1128
      %v1150 = vpack.c.b16 %v1131, %v1130
      %v1151 = vpack.c.b16 %v1133, %v1132
      %v1152 = vpack.c.b16 %v1135, %v1134
      %v1153 = vpack.c.b16 %v1137, %v1136
      %v1154 = vunpack.c.l.b16 %v472
      %v1155 = vunpack.c.l.b16 %v482
      %v1156 = vunpack.c.l.b16 %v496
      %v1157 = vunpack.c.l.b16 %v506
      %v1158 = vunpack.c.l.b16 %v520
      %v1159 = vunpack.c.l.b16 %v530
      %v1160 = vunpack.c.l.b16 %v544
      %v1161 = vunpack.c.l.b16 %v554
      %v1162 = vunpack.c.l.b16 %v568
      %v1163 = vunpack.c.l.b16 %v578
      %v1164 = vunpack.c.l.b16 %v592
      %v1165 = vunpack.c.l.b16 %v602
      %v1166 = vunpack.c.l.b16 %v616
      %v1167 = vunpack.c.l.b16 %v626
      %v1168 = vunpack.c.l.b16 %v640
      %v1169 = vunpack.c.l.b16 %v650
      %v1170 = vunpack.c.l.b16 %v664
      %v1171 = vunpack.c.l.b16 %v674
      %v1172 = vunpack.c.l.b16 %v688
      %v1173 = vunpack.c.l.b16 %v698
      %v1174 = vunpack.c.l.b16 %v712
      %v1175 = vunpack.c.l.b16 %v722
      %v1176 = vunpack.c.l.b16 %v736
      %v1177 = vunpack.c.l.b16 %v746
      %v1178 = vunpack.c.l.b16 %v760
      %v1179 = vunpack.c.l.b16 %v770
      %v1180 = vunpack.c.l.b16 %v784
      %v1181 = vunpack.c.l.b16 %v794
      %v1182 = vunpack.c.l.b16 %v808
      %v1183 = vunpack.c.l.b16 %v818
      %v1184 = vunpack.c.l.b16 %v832
      %v1185 = vunpack.c.l.b16 %v842
      %v1186 = vpack.c.b16 %v1155, %v1154
      %v1187 = vpack.c.b16 %v1157, %v1156
      %v1188 = vpack.c.b16 %v1159, %v1158
      %v1189 = vpack.c.b16 %v1161, %v1160
      %v1190 = vpack.c.b16 %v1163, %v1162
      %v1191 = vpack.c.b16 %v1165, %v1164
      %v1192 = vpack.c.b16 %v1167, %v1166
      %v1193 = vpack.c.b16 %v1169, %v1168
      %v1194 = vpack.c.b16 %v1171, %v1170
      %v1195 = vpack.c.b16 %v1173, %v1172
      %v1196 = vpack.c.b16 %v1175, %v1174
      %v1197 = vpack.c.b16 %v1177, %v1176
      %v1198 = vpack.c.b16 %v1179, %v1178
      %v1199 = vpack.c.b16 %v1181, %v1180
      %v1200 = vpack.c.b16 %v1183, %v1182
      %v1201 = vpack.c.b16 %v1185, %v1184
      %1202 = vrot.lane.b32.xlu0 %v1186, 8
      %v1203 = vpop.permute.xlu0 %1202
      %1204 = vrot.lane.b32.xlu0 %v1187, 8
      %v1205 = vpop.permute.xlu0 %1204
      %1206 = vrot.lane.b32.xlu0 %v1188, 8
      %v1207 = vpop.permute.xlu0 %1206
      %1208 = vrot.lane.b32.xlu0 %v1189, 8
      %v1209 = vpop.permute.xlu0 %1208
      %1210 = vrot.lane.b32.xlu0 %v1190, 8
      %v1211 = vpop.permute.xlu0 %1210
      %1212 = vrot.lane.b32.xlu0 %v1191, 8
      %v1213 = vpop.permute.xlu0 %1212
      %1214 = vrot.lane.b32.xlu0 %v1192, 8
      %v1215 = vpop.permute.xlu0 %1214
      %1216 = vrot.lane.b32.xlu0 %v1193, 8
      %v1217 = vpop.permute.xlu0 %1216
      %1218 = vrot.lane.b32.xlu0 %v1194, 8
      %v1219 = vpop.permute.xlu0 %1218
      %1220 = vrot.lane.b32.xlu0 %v1195, 8
      %v1221 = vpop.permute.xlu0 %1220
      %1222 = vrot.lane.b32.xlu0 %v1196, 8
      %v1223 = vpop.permute.xlu0 %1222
      %1224 = vrot.lane.b32.xlu0 %v1197, 8
      %v1225 = vpop.permute.xlu0 %1224
      %1226 = vrot.lane.b32.xlu0 %v1198, 8
      %v1227 = vpop.permute.xlu0 %1226
      %1228 = vrot.lane.b32.xlu0 %v1199, 8
      %v1229 = vpop.permute.xlu0 %1228
      %1230 = vrot.lane.b32.xlu0 %v1200, 8
      %v1231 = vpop.permute.xlu0 %1230
      %1232 = vrot.lane.b32.xlu0 %v1201, 8
      %v1233 = vpop.permute.xlu0 %1232
      %v1234 = vunpack.c.l.b16 %v897
      %v1235 = vunpack.c.l.b16 %v900
      %v1236 = vunpack.c.l.b16 %v904
      %v1237 = vunpack.c.l.b16 %v907
      %v1238 = vunpack.c.l.b16 %v911
      %v1239 = vunpack.c.l.b16 %v914
      %v1240 = vunpack.c.l.b16 %v918
      %v1241 = vunpack.c.l.b16 %v921
      %v1242 = vunpack.c.l.b16 %v925
      %v1243 = vunpack.c.l.b16 %v928
      %v1244 = vunpack.c.l.b16 %v932
      %v1245 = vunpack.c.l.b16 %v935
      %v1246 = vunpack.c.l.b16 %v939
      %v1247 = vunpack.c.l.b16 %v942
      %v1248 = vunpack.c.l.b16 %v946
      %v1249 = vunpack.c.l.b16 %v949
      %v1250 = vunpack.c.l.b16 %v953
      %v1251 = vunpack.c.l.b16 %v956
      %v1252 = vunpack.c.l.b16 %v960
      %v1253 = vunpack.c.l.b16 %v963
      %v1254 = vunpack.c.l.b16 %v967
      %v1255 = vunpack.c.l.b16 %v970
      %v1256 = vunpack.c.l.b16 %v974
      %v1257 = vunpack.c.l.b16 %v977
      %v1258 = vunpack.c.l.b16 %v981
      %v1259 = vunpack.c.l.b16 %v984
      %v1260 = vunpack.c.l.b16 %v988
      %v1261 = vunpack.c.l.b16 %v991
      %v1262 = vunpack.c.l.b16 %v995
      %v1263 = vunpack.c.l.b16 %v998
      %v1264 = vunpack.c.l.b16 %v1002
      %v1265 = vunpack.c.l.b16 %v1005
      %v1266 = vpack.c.b16 %v1235, %v1234
      %v1267 = vpack.c.b16 %v1237, %v1236
      %v1268 = vpack.c.b16 %v1239, %v1238
      %v1269 = vpack.c.b16 %v1241, %v1240
      %v1270 = vpack.c.b16 %v1243, %v1242
      %v1271 = vpack.c.b16 %v1245, %v1244
      %v1272 = vpack.c.b16 %v1247, %v1246
      %v1273 = vpack.c.b16 %v1249, %v1248
      %v1274 = vpack.c.b16 %v1251, %v1250
      %v1275 = vpack.c.b16 %v1253, %v1252
      %v1276 = vpack.c.b16 %v1255, %v1254
      %v1277 = vpack.c.b16 %v1257, %v1256
      %v1278 = vpack.c.b16 %v1259, %v1258
      %v1279 = vpack.c.b16 %v1261, %v1260
      %v1280 = vpack.c.b16 %v1263, %v1262
      %v1281 = vpack.c.b16 %v1265, %v1264
      %1282 = vrot.lane.b32.xlu0 %v1266, 16
      %v1283 = vpop.permute.xlu0 %1282
      %1284 = vrot.lane.b32.xlu0 %v1267, 16
      %v1285 = vpop.permute.xlu0 %1284
      %1286 = vrot.lane.b32.xlu0 %v1268, 16
      %v1287 = vpop.permute.xlu0 %1286
      %1288 = vrot.lane.b32.xlu0 %v1269, 16
      %v1289 = vpop.permute.xlu0 %1288
      %1290 = vrot.lane.b32.xlu0 %v1270, 16
      %v1291 = vpop.permute.xlu0 %1290
      %1292 = vrot.lane.b32.xlu0 %v1271, 16
      %v1293 = vpop.permute.xlu0 %1292
      %1294 = vrot.lane.b32.xlu0 %v1272, 16
      %v1295 = vpop.permute.xlu0 %1294
      %1296 = vrot.lane.b32.xlu0 %v1273, 16
      %v1297 = vpop.permute.xlu0 %1296
      %1298 = vrot.lane.b32.xlu0 %v1274, 16
      %v1299 = vpop.permute.xlu0 %1298
      %1300 = vrot.lane.b32.xlu0 %v1275, 16
      %v1301 = vpop.permute.xlu0 %1300
      %1302 = vrot.lane.b32.xlu0 %v1276, 16
      %v1303 = vpop.permute.xlu0 %1302
      %1304 = vrot.lane.b32.xlu0 %v1277, 16
      %v1305 = vpop.permute.xlu0 %1304
      %1306 = vrot.lane.b32.xlu0 %v1278, 16
      %v1307 = vpop.permute.xlu0 %1306
      %1308 = vrot.lane.b32.xlu0 %v1279, 16
      %v1309 = vpop.permute.xlu0 %1308
      %1310 = vrot.lane.b32.xlu0 %v1280, 16
      %v1311 = vpop.permute.xlu0 %1310
      %1312 = vrot.lane.b32.xlu0 %v1281, 16
      %v1313 = vpop.permute.xlu0 %1312
      %v1314 = vunpack.c.l.b16 %v450
      %v1315 = vunpack.c.l.b16 %v451
      %v1316 = vpack.c.b16 %v1315, %v1314
      %1317 = vrot.lane.b32.xlu0 %v1139, 24
      %v1318 = vpop.permute.xlu0 %1317
      %1319 = vrot.lane.b32.xlu0 %v1140, 24
      %v1320 = vpop.permute.xlu0 %1319
      %1321 = vrot.lane.b32.xlu0 %v1141, 24
      %v1322 = vpop.permute.xlu0 %1321
      %1323 = vrot.lane.b32.xlu0 %v1142, 24
      %v1324 = vpop.permute.xlu0 %1323
      %1325 = vrot.lane.b32.xlu0 %v1143, 24
      %v1326 = vpop.permute.xlu0 %1325
      %1327 = vrot.lane.b32.xlu0 %v1144, 24
      %v1328 = vpop.permute.xlu0 %1327
      %1329 = vrot.lane.b32.xlu0 %v1145, 24
      %v1330 = vpop.permute.xlu0 %1329
      %1331 = vrot.lane.b32.xlu0 %v1146, 24
      %v1332 = vpop.permute.xlu0 %1331
      %1333 = vrot.lane.b32.xlu0 %v1147, 24
      %v1334 = vpop.permute.xlu0 %1333
      %1335 = vrot.lane.b32.xlu0 %v1148, 24
      %v1336 = vpop.permute.xlu0 %1335
      %1337 = vrot.lane.b32.xlu0 %v1149, 24
      %v1338 = vpop.permute.xlu0 %1337
      %1339 = vrot.lane.b32.xlu0 %v1150, 24
      %v1340 = vpop.permute.xlu0 %1339
      %1341 = vrot.lane.b32.xlu0 %v1151, 24
      %v1342 = vpop.permute.xlu0 %1341
      %1343 = vrot.lane.b32.xlu0 %v1152, 24
      %v1344 = vpop.permute.xlu0 %1343
      %1345 = vrot.lane.b32.xlu0 %v1153, 24
      %v1346 = vpop.permute.xlu0 %1345
      %1347 = vrot.lane.b32.xlu0 %v1316, 24
      %v1348 = vpop.permute.xlu0 %1347
      %v1349 = vunpack.c.l.b16 %v1019
      %v1350 = vunpack.c.l.b16 %v1029
      %v1351 = vpack.c.b16 %v1350, %v1349
      %1352 = vrot.lane.b32.xlu0 %v1187, 32
      %v1353 = vpop.permute.xlu0 %1352
      %1354 = vrot.lane.b32.xlu0 %v1188, 32
      %v1355 = vpop.permute.xlu0 %1354
      %1356 = vrot.lane.b32.xlu0 %v1189, 32
      %v1357 = vpop.permute.xlu0 %1356
      %1358 = vrot.lane.b32.xlu0 %v1190, 32
      %v1359 = vpop.permute.xlu0 %1358
      %1360 = vrot.lane.b32.xlu0 %v1191, 32
      %v1361 = vpop.permute.xlu0 %1360
      %1362 = vrot.lane.b32.xlu0 %v1192, 32
      %v1363 = vpop.permute.xlu0 %1362
      %1364 = vrot.lane.b32.xlu0 %v1193, 32
      %v1365 = vpop.permute.xlu0 %1364
      %1366 = vrot.lane.b32.xlu0 %v1194, 32
      %v1367 = vpop.permute.xlu0 %1366
      %1368 = vrot.lane.b32.xlu0 %v1195, 32
      %v1369 = vpop.permute.xlu0 %1368
      %1370 = vrot.lane.b32.xlu0 %v1196, 32
      %v1371 = vpop.permute.xlu0 %1370
      %1372 = vrot.lane.b32.xlu0 %v1197, 32
      %v1373 = vpop.permute.xlu0 %1372
      %1374 = vrot.lane.b32.xlu0 %v1198, 32
      %v1375 = vpop.permute.xlu0 %1374
      %1376 = vrot.lane.b32.xlu0 %v1199, 32
      %v1377 = vpop.permute.xlu0 %1376
      %1378 = vrot.lane.b32.xlu0 %v1200, 32
      %v1379 = vpop.permute.xlu0 %1378
      %1380 = vrot.lane.b32.xlu0 %v1201, 32
      %v1381 = vpop.permute.xlu0 %1380
      %1382 = vrot.lane.b32.xlu0 %v1351, 32
      %v1383 = vpop.permute.xlu0 %1382
      %v1384 = vunpack.c.l.b16 %v1068
      %v1385 = vunpack.c.l.b16 %v1071
      %v1386 = vpack.c.b16 %v1385, %v1384
      %1387 = vrot.lane.b32.xlu0 %v1267, 40
      %v1388 = vpop.permute.xlu0 %1387
      %1389 = vrot.lane.b32.xlu0 %v1268, 40
      %v1390 = vpop.permute.xlu0 %1389
      %1391 = vrot.lane.b32.xlu0 %v1269, 40
      %v1392 = vpop.permute.xlu0 %1391
      %1393 = vrot.lane.b32.xlu0 %v1270, 40
      %v1394 = vpop.permute.xlu0 %1393
      %1395 = vrot.lane.b32.xlu0 %v1271, 40
      %v1396 = vpop.permute.xlu0 %1395
      %1397 = vrot.lane.b32.xlu0 %v1272, 40
      %v1398 = vpop.permute.xlu0 %1397
      %1399 = vrot.lane.b32.xlu0 %v1273, 40
      %v1400 = vpop.permute.xlu0 %1399
      %1401 = vrot.lane.b32.xlu0 %v1274, 40
      %v1402 = vpop.permute.xlu0 %1401
      %1403 = vrot.lane.b32.xlu0 %v1275, 40
      %v1404 = vpop.permute.xlu0 %1403
      %1405 = vrot.lane.b32.xlu0 %v1276, 40
      %v1406 = vpop.permute.xlu0 %1405
      %1407 = vrot.lane.b32.xlu0 %v1277, 40
      %v1408 = vpop.permute.xlu0 %1407
      %1409 = vrot.lane.b32.xlu0 %v1278, 40
      %v1410 = vpop.permute.xlu0 %1409
      %1411 = vrot.lane.b32.xlu0 %v1279, 40
      %v1412 = vpop.permute.xlu0 %1411
      %1413 = vrot.lane.b32.xlu0 %v1280, 40
      %v1414 = vpop.permute.xlu0 %1413
      %1415 = vrot.lane.b32.xlu0 %v1281, 40
      %v1416 = vpop.permute.xlu0 %1415
      %1417 = vrot.lane.b32.xlu0 %v1386, 40
      %v1418 = vpop.permute.xlu0 %1417
      %v1419 = vunpack.c.l.b16 %v453
      %v1420 = vunpack.c.l.b16 %v454
      %v1421 = vpack.c.b16 %v1420, %v1419
      %1422 = vrot.lane.b32.xlu0 %v1140, 48
      %v1423 = vpop.permute.xlu0 %1422
      %1424 = vrot.lane.b32.xlu0 %v1141, 48
      %v1425 = vpop.permute.xlu0 %1424
      %1426 = vrot.lane.b32.xlu0 %v1142, 48
      %v1427 = vpop.permute.xlu0 %1426
      %1428 = vrot.lane.b32.xlu0 %v1143, 48
      %v1429 = vpop.permute.xlu0 %1428
      %1430 = vrot.lane.b32.xlu0 %v1144, 48
      %v1431 = vpop.permute.xlu0 %1430
      %1432 = vrot.lane.b32.xlu0 %v1145, 48
      %v1433 = vpop.permute.xlu0 %1432
      %1434 = vrot.lane.b32.xlu0 %v1146, 48
      %v1435 = vpop.permute.xlu0 %1434
      %1436 = vrot.lane.b32.xlu0 %v1147, 48
      %v1437 = vpop.permute.xlu0 %1436
      %1438 = vrot.lane.b32.xlu0 %v1148, 48
      %v1439 = vpop.permute.xlu0 %1438
      %1440 = vrot.lane.b32.xlu0 %v1149, 48
      %v1441 = vpop.permute.xlu0 %1440
      %1442 = vrot.lane.b32.xlu0 %v1150, 48
      %v1443 = vpop.permute.xlu0 %1442
      %1444 = vrot.lane.b32.xlu0 %v1151, 48
      %v1445 = vpop.permute.xlu0 %1444
      %1446 = vrot.lane.b32.xlu0 %v1152, 48
      %v1447 = vpop.permute.xlu0 %1446
      %1448 = vrot.lane.b32.xlu0 %v1153, 48
      %v1449 = vpop.permute.xlu0 %1448
      %1450 = vrot.lane.b32.xlu0 %v1316, 48
      %v1451 = vpop.permute.xlu0 %1450
      %1452 = vrot.lane.b32.xlu0 %v1421, 48
      %v1453 = vpop.permute.xlu0 %1452
      %v1454 = vunpack.c.l.b16 %v1085
      %v1455 = vunpack.c.l.b16 %v1095
      %v1456 = vpack.c.b16 %v1455, %v1454
      %1457 = vrot.lane.b32.xlu0 %v1188, 56
      %v1458 = vpop.permute.xlu0 %1457
      %1459 = vrot.lane.b32.xlu0 %v1189, 56
      %v1460 = vpop.permute.xlu0 %1459
      %1461 = vrot.lane.b32.xlu0 %v1190, 56
      %v1462 = vpop.permute.xlu0 %1461
      %1463 = vrot.lane.b32.xlu0 %v1191, 56
      %v1464 = vpop.permute.xlu0 %1463
      %1465 = vrot.lane.b32.xlu0 %v1192, 56
      %v1466 = vpop.permute.xlu0 %1465
      %1467 = vrot.lane.b32.xlu0 %v1193, 56
      %v1468 = vpop.permute.xlu0 %1467
      %1469 = vrot.lane.b32.xlu0 %v1194, 56
      %v1470 = vpop.permute.xlu0 %1469
      %1471 = vrot.lane.b32.xlu0 %v1195, 56
      %v1472 = vpop.permute.xlu0 %1471
      %1473 = vrot.lane.b32.xlu0 %v1196, 56
      %v1474 = vpop.permute.xlu0 %1473
      %1475 = vrot.lane.b32.xlu0 %v1197, 56
      %v1476 = vpop.permute.xlu0 %1475
      %1477 = vrot.lane.b32.xlu0 %v1198, 56
      %v1478 = vpop.permute.xlu0 %1477
      %1479 = vrot.lane.b32.xlu0 %v1199, 56
      %v1480 = vpop.permute.xlu0 %1479
      %1481 = vrot.lane.b32.xlu0 %v1200, 56
      %v1482 = vpop.permute.xlu0 %1481
      %1483 = vrot.lane.b32.xlu0 %v1201, 56
      %v1484 = vpop.permute.xlu0 %1483
      %1485 = vrot.lane.b32.xlu0 %v1351, 56
      %v1486 = vpop.permute.xlu0 %1485
      %1487 = vrot.lane.b32.xlu0 %v1456, 56
      %v1488 = vpop.permute.xlu0 %1487
      %v1489 = vunpack.c.l.b16 %v1102
      %v1490 = vunpack.c.l.b16 %v1105
      %v1491 = vpack.c.b16 %v1490, %v1489
      %1492 = vrot.lane.b32.xlu0 %v1268, 64
      %v1493 = vpop.permute.xlu0 %1492
      %1494 = vrot.lane.b32.xlu0 %v1269, 64
      %v1495 = vpop.permute.xlu0 %1494
      %1496 = vrot.lane.b32.xlu0 %v1270, 64
      %v1497 = vpop.permute.xlu0 %1496
      %1498 = vrot.lane.b32.xlu0 %v1271, 64
      %v1499 = vpop.permute.xlu0 %1498
      %1500 = vrot.lane.b32.xlu0 %v1272, 64
      %v1501 = vpop.permute.xlu0 %1500
      %1502 = vrot.lane.b32.xlu0 %v1273, 64
      %v1503 = vpop.permute.xlu0 %1502
      %1504 = vrot.lane.b32.xlu0 %v1274, 64
      %v1505 = vpop.permute.xlu0 %1504
      %1506 = vrot.lane.b32.xlu0 %v1275, 64
      %v1507 = vpop.permute.xlu0 %1506
      %1508 = vrot.lane.b32.xlu0 %v1276, 64
      %v1509 = vpop.permute.xlu0 %1508
      %1510 = vrot.lane.b32.xlu0 %v1277, 64
      %v1511 = vpop.permute.xlu0 %1510
      %1512 = vrot.lane.b32.xlu0 %v1278, 64
      %v1513 = vpop.permute.xlu0 %1512
      %1514 = vrot.lane.b32.xlu0 %v1279, 64
      %v1515 = vpop.permute.xlu0 %1514
      %1516 = vrot.lane.b32.xlu0 %v1280, 64
      %v1517 = vpop.permute.xlu0 %1516
      %1518 = vrot.lane.b32.xlu0 %v1281, 64
      %v1519 = vpop.permute.xlu0 %1518
      %1520 = vrot.lane.b32.xlu0 %v1386, 64
      %v1521 = vpop.permute.xlu0 %1520
      %1522 = vrot.lane.b32.xlu0 %v1491, 64
      %v1523 = vpop.permute.xlu0 %1522
      %vm1524 = vcmask 64512
      %v1527 = vsel %vm1524, %v1138, %v1203
      %v1530 = vsel %vm1524, %v1139, %v1205
      %v1533 = vsel %vm1524, %v1140, %v1207
      %v1536 = vsel %vm1524, %v1141, %v1209
      %v1539 = vsel %vm1524, %v1142, %v1211
      %v1542 = vsel %vm1524, %v1143, %v1213
      %v1545 = vsel %vm1524, %v1144, %v1215
      %v1548 = vsel %vm1524, %v1145, %v1217
      %v1551 = vsel %vm1524, %v1146, %v1219
      %v1554 = vsel %vm1524, %v1147, %v1221
      %v1557 = vsel %vm1524, %v1148, %v1223
      %v1560 = vsel %vm1524, %v1149, %v1225
      %v1563 = vsel %vm1524, %v1150, %v1227
      %v1566 = vsel %vm1524, %v1151, %v1229
      %v1569 = vsel %vm1524, %v1152, %v1231
      %v1572 = vsel %vm1524, %v1153, %v1233
      %vm1573 = vcmask 130048
      %v1575 = vsel %vm1573, %v1527, %v1283
      %v1577 = vsel %vm1573, %v1530, %v1285
      %v1579 = vsel %vm1573, %v1533, %v1287
      %v1581 = vsel %vm1573, %v1536, %v1289
      %v1583 = vsel %vm1573, %v1539, %v1291
      %v1585 = vsel %vm1573, %v1542, %v1293
      %v1587 = vsel %vm1573, %v1545, %v1295
      %v1589 = vsel %vm1573, %v1548, %v1297
      %v1591 = vsel %vm1573, %v1551, %v1299
      %v1593 = vsel %vm1573, %v1554, %v1301
      %v1595 = vsel %vm1573, %v1557, %v1303
      %v1597 = vsel %vm1573, %v1560, %v1305
      %v1599 = vsel %vm1573, %v1563, %v1307
      %v1601 = vsel %vm1573, %v1566, %v1309
      %v1603 = vsel %vm1573, %v1569, %v1311
      %v1605 = vsel %vm1573, %v1572, %v1313
      %vm1606 = vcmask 195584
      %v1608 = vsel %vm1606, %v1575, %v1318
      %v1610 = vsel %vm1606, %v1577, %v1320
      %v1612 = vsel %vm1606, %v1579, %v1322
      %v1614 = vsel %vm1606, %v1581, %v1324
      %v1616 = vsel %vm1606, %v1583, %v1326
      %v1618 = vsel %vm1606, %v1585, %v1328
      %v1620 = vsel %vm1606, %v1587, %v1330
      %v1622 = vsel %vm1606, %v1589, %v1332
      %v1624 = vsel %vm1606, %v1591, %v1334
      %v1626 = vsel %vm1606, %v1593, %v1336
      %v1628 = vsel %vm1606, %v1595, %v1338
      %v1630 = vsel %vm1606, %v1597, %v1340
      %v1632 = vsel %vm1606, %v1599, %v1342
      %v1634 = vsel %vm1606, %v1601, %v1344
      %v1636 = vsel %vm1606, %v1603, %v1346
      %v1638 = vsel %vm1606, %v1605, %v1348
      %vm1639 = vcmask 261120
      %v1641 = vsel %vm1639, %v1608, %v1353
      %v1643 = vsel %vm1639, %v1610, %v1355
      %v1645 = vsel %vm1639, %v1612, %v1357
      %v1647 = vsel %vm1639, %v1614, %v1359
      %v1649 = vsel %vm1639, %v1616, %v1361
      %v1651 = vsel %vm1639, %v1618, %v1363
      %v1653 = vsel %vm1639, %v1620, %v1365
      %v1655 = vsel %vm1639, %v1622, %v1367
      %v1657 = vsel %vm1639, %v1624, %v1369
      %v1659 = vsel %vm1639, %v1626, %v1371
      %v1661 = vsel %vm1639, %v1628, %v1373
      %v1663 = vsel %vm1639, %v1630, %v1375
      %v1665 = vsel %vm1639, %v1632, %v1377
      %v1667 = vsel %vm1639, %v1634, %v1379
      %v1669 = vsel %vm1639, %v1636, %v1381
      %v1671 = vsel %vm1639, %v1638, %v1383
      %vm1672 = vcmask 326656
      %v1674 = vsel %vm1672, %v1641, %v1388
      %v1676 = vsel %vm1672, %v1643, %v1390
      %v1678 = vsel %vm1672, %v1645, %v1392
      %v1680 = vsel %vm1672, %v1647, %v1394
      %v1682 = vsel %vm1672, %v1649, %v1396
      %v1684 = vsel %vm1672, %v1651, %v1398
      %v1686 = vsel %vm1672, %v1653, %v1400
      %v1688 = vsel %vm1672, %v1655, %v1402
      %v1690 = vsel %vm1672, %v1657, %v1404
      %v1692 = vsel %vm1672, %v1659, %v1406
      %v1694 = vsel %vm1672, %v1661, %v1408
      %v1696 = vsel %vm1672, %v1663, %v1410
      %v1698 = vsel %vm1672, %v1665, %v1412
      %v1700 = vsel %vm1672, %v1667, %v1414
      %v1702 = vsel %vm1672, %v1669, %v1416
      %v1704 = vsel %vm1672, %v1671, %v1418
      %vm1705 = vcmask 392192
      %v1707 = vsel %vm1705, %v1674, %v1423
      %v1709 = vsel %vm1705, %v1676, %v1425
      %v1711 = vsel %vm1705, %v1678, %v1427
      %v1713 = vsel %vm1705, %v1680, %v1429
      %v1715 = vsel %vm1705, %v1682, %v1431
      %v1717 = vsel %vm1705, %v1684, %v1433
      %v1719 = vsel %vm1705, %v1686, %v1435
      %v1721 = vsel %vm1705, %v1688, %v1437
      %v1723 = vsel %vm1705, %v1690, %v1439
      %v1725 = vsel %vm1705, %v1692, %v1441
      %v1727 = vsel %vm1705, %v1694, %v1443
      %v1729 = vsel %vm1705, %v1696, %v1445
      %v1731 = vsel %vm1705, %v1698, %v1447
      %v1733 = vsel %vm1705, %v1700, %v1449
      %v1735 = vsel %vm1705, %v1702, %v1451
      %v1737 = vsel %vm1705, %v1704, %v1453
      %vm1738 = vcmask 457728
      %v1740 = vsel %vm1738, %v1707, %v1458
      %v1742 = vsel %vm1738, %v1709, %v1460
      %v1744 = vsel %vm1738, %v1711, %v1462
      %v1746 = vsel %vm1738, %v1713, %v1464
      %v1748 = vsel %vm1738, %v1715, %v1466
      %v1750 = vsel %vm1738, %v1717, %v1468
      %v1752 = vsel %vm1738, %v1719, %v1470
      %v1754 = vsel %vm1738, %v1721, %v1472
      %v1756 = vsel %vm1738, %v1723, %v1474
      %v1758 = vsel %vm1738, %v1725, %v1476
      %v1760 = vsel %vm1738, %v1727, %v1478
      %v1762 = vsel %vm1738, %v1729, %v1480
      %v1764 = vsel %vm1738, %v1731, %v1482
      %v1766 = vsel %vm1738, %v1733, %v1484
      %v1768 = vsel %vm1738, %v1735, %v1486
      %v1770 = vsel %vm1738, %v1737, %v1488
      %vm1771 = vcmask 523264
      %v1773 = vsel %vm1771, %v1740, %v1493
      %v1775 = vsel %vm1771, %v1742, %v1495
      %v1777 = vsel %vm1771, %v1744, %v1497
      %v1779 = vsel %vm1771, %v1746, %v1499
      %v1781 = vsel %vm1771, %v1748, %v1501
      %v1783 = vsel %vm1771, %v1750, %v1503
      %v1785 = vsel %vm1771, %v1752, %v1505
      %v1787 = vsel %vm1771, %v1754, %v1507
      %v1789 = vsel %vm1771, %v1756, %v1509
      %v1791 = vsel %vm1771, %v1758, %v1511
      %v1793 = vsel %vm1771, %v1760, %v1513
      %v1795 = vsel %vm1771, %v1762, %v1515
      %v1797 = vsel %vm1771, %v1764, %v1517
      %v1799 = vsel %vm1771, %v1766, %v1519
      %v1801 = vsel %vm1771, %v1768, %v1521
      %v1803 = vsel %vm1771, %v1770, %v1523
      %v1804 = vld [vmem:[%s1] sm:$0xf]
      %v1805 = vld [vmem:[%s1 + $0x4] sm:$0xf]
      %v1806 = vld [vmem:[%s1 + $0x8] sm:$0xf]
      %v1807 = vld [vmem:[%s1 + $0xc] sm:$0xf]
      %v1808 = vld [vmem:[%s1 + $0x10] sm:$0xf]
      %v1809 = vld [vmem:[%s1 + $0x14] sm:$0xf]
      %v1810 = vld [vmem:[%s1 + $0x18] sm:$0xf]
      %v1811 = vld [vmem:[%s1 + $0x1c] sm:$0xf]
      %v1812 = vld [vmem:[%s1 + $0x20] sm:$0xf]
      %v1822 = vunpack.c.l.b16 %v1804
      %v1823 = vunpack.c.l.b16 %v1805
      %v1824 = vunpack.c.l.b16 %v1806
      %v1825 = vunpack.c.l.b16 %v1807
      %v1826 = vunpack.c.l.b16 %v1808
      %v1827 = vunpack.c.l.b16 %v1809
      %v1828 = vunpack.c.l.b16 %v1810
      %v1829 = vunpack.c.l.b16 %v1811
      %v1830 = vunpack.c.l.b16 %v1812
      %v1831 = vpack.c.b16 %v1823, %v1822
      %v1832 = vpack.c.b16 %v1825, %v1824
      %v1833 = vpack.c.b16 %v1827, %v1826
      %v1834 = vpack.c.b16 %v1829, %v1828
      %v1835 = vpack.c.b16 %v1830, %v1830
      %vm1840 = vcmask 588800
      %v1841 = vsel %vm1840, %v1773, 0
      %v1843 = vsel %vm1840, %v1775, 0
      %v1845 = vsel %vm1840, %v1777, 0
      %v1847 = vsel %vm1840, %v1779, 0
      %v1849 = vsel %vm1840, %v1781, 0
      %v1851 = vsel %vm1840, %v1783, 0
      %v1853 = vsel %vm1840, %v1785, 0
      %v1855 = vsel %vm1840, %v1787, 0
      %v1857 = vsel %vm1840, %v1789, 0
      %v1859 = vsel %vm1840, %v1791, 0
      %v1861 = vsel %vm1840, %v1793, 0
      %v1863 = vsel %vm1840, %v1795, 0
      %v1865 = vsel %vm1840, %v1797, 0
      %v1867 = vsel %vm1840, %v1799, 0
      %v1869 = vsel %vm1840, %v1801, 0
      %v1871 = vsel %vm1840, %v1803, 0
      %vm1873 = vcmask 1043456
      %v1875 = vsel %vm1873, %v1835, 0
      %1877 = vmatpush.bf16.msra.mxu0 0
      %1878 = vmatpush.bf16.msra.mxu0 0
      %1879 = vmatpush.bf16.msra.mxu0 0
      %1880 = vmatpush.bf16.msra.mxu0 %v1875
      %1881 = vmatpush.bf16.msra.mxu0 %v1834
      %1882 = vmatpush.bf16.msra.mxu0 %v1833
      %1883 = vmatpush.bf16.msra.mxu0 %v1832
      %1884 = vmatpush.bf16.msra.mxu0 %v1831
      %1885 = vmatmul.bf16.gmra.mxu0 %v1841
      %v1886 = vpop.f32.mrf.mxu0
      %v1887 = vadd.f32 0.0, %v1886
      %v1888 = vpop.f32.mrf.mxu0
      %v1889 = vadd.f32 0.0, %v1888
      %1890 = vmatmul.bf16.gmra.mxu0 %v1843
      %v1891 = vpop.f32.mrf.mxu0
      %v1892 = vadd.f32 0.0, %v1891
      %v1893 = vpop.f32.mrf.mxu0
      %v1894 = vadd.f32 0.0, %v1893
      %1895 = vmatmul.bf16.gmra.mxu0 %v1845
      %v1896 = vpop.f32.mrf.mxu0
      %v1897 = vadd.f32 0.0, %v1896
      %v1898 = vpop.f32.mrf.mxu0
      %v1899 = vadd.f32 0.0, %v1898
      %1900 = vmatmul.bf16.gmra.mxu0 %v1847
      %v1901 = vpop.f32.mrf.mxu0
      %v1902 = vadd.f32 0.0, %v1901
      %v1903 = vpop.f32.mrf.mxu0
      %v1904 = vadd.f32 0.0, %v1903
      %1905 = vmatmul.bf16.gmra.mxu0 %v1849
      %v1906 = vpop.f32.mrf.mxu0
      %v1907 = vadd.f32 0.0, %v1906
      %v1908 = vpop.f32.mrf.mxu0
      %v1909 = vadd.f32 0.0, %v1908
      %1910 = vmatmul.bf16.gmra.mxu0 %v1851
      %v1911 = vpop.f32.mrf.mxu0
      %v1912 = vadd.f32 0.0, %v1911
      %v1913 = vpop.f32.mrf.mxu0
      %v1914 = vadd.f32 0.0, %v1913
      %1915 = vmatmul.bf16.gmra.mxu0 %v1853
      %v1916 = vpop.f32.mrf.mxu0
      %v1917 = vadd.f32 0.0, %v1916
      %v1918 = vpop.f32.mrf.mxu0
      %v1919 = vadd.f32 0.0, %v1918
      %1920 = vmatmul.bf16.gmra.mxu0 %v1855
      %v1921 = vpop.f32.mrf.mxu0
      %v1922 = vadd.f32 0.0, %v1921
      %v1923 = vpop.f32.mrf.mxu0
      %v1924 = vadd.f32 0.0, %v1923
      %1925 = vmatmul.bf16.gmra.mxu0 %v1857
      %v1926 = vpop.f32.mrf.mxu0
      %v1927 = vadd.f32 0.0, %v1926
      %v1928 = vpop.f32.mrf.mxu0
      %v1929 = vadd.f32 0.0, %v1928
      %1930 = vmatmul.bf16.gmra.mxu0 %v1859
      %v1931 = vpop.f32.mrf.mxu0
      %v1932 = vadd.f32 0.0, %v1931
      %v1933 = vpop.f32.mrf.mxu0
      %v1934 = vadd.f32 0.0, %v1933
      %1935 = vmatmul.bf16.gmra.mxu0 %v1861
      %v1936 = vpop.f32.mrf.mxu0
      %v1937 = vadd.f32 0.0, %v1936
      %v1938 = vpop.f32.mrf.mxu0
      %v1939 = vadd.f32 0.0, %v1938
      %1940 = vmatmul.bf16.gmra.mxu0 %v1863
      %v1941 = vpop.f32.mrf.mxu0
      %v1942 = vadd.f32 0.0, %v1941
      %v1943 = vpop.f32.mrf.mxu0
      %v1944 = vadd.f32 0.0, %v1943
      %1945 = vmatmul.bf16.gmra.mxu0 %v1865
      %v1946 = vpop.f32.mrf.mxu0
      %v1947 = vadd.f32 0.0, %v1946
      %v1948 = vpop.f32.mrf.mxu0
      %v1949 = vadd.f32 0.0, %v1948
      %1950 = vmatmul.bf16.gmra.mxu0 %v1867
      %v1951 = vpop.f32.mrf.mxu0
      %v1952 = vadd.f32 0.0, %v1951
      %v1953 = vpop.f32.mrf.mxu0
      %v1954 = vadd.f32 0.0, %v1953
      %1955 = vmatmul.bf16.gmra.mxu0 %v1869
      %v1956 = vpop.f32.mrf.mxu0
      %v1957 = vadd.f32 0.0, %v1956
      %v1958 = vpop.f32.mrf.mxu0
      %v1959 = vadd.f32 0.0, %v1958
      %1960 = vmatmul.bf16.gmra.mxu0 %v1871
      %v1961 = vpop.f32.mrf.mxu0
      %v1962 = vadd.f32 0.0, %v1961
      %v1963 = vpop.f32.mrf.mxu0
      %v1964 = vadd.f32 0.0, %v1963
      %1965 = vdwg.mxu0
      %v1966 = vld [vmem:[%s3] sm:$0x1]
      %v1968 = vperm.slane %v1966, 0
      %v1970 = vmul.f32 %v1887, %v1968
      %v1971 = vmul.f32 %v1889, %v1968
      %v1972 = vmul.f32 %v1892, %v1968
      %v1973 = vmul.f32 %v1894, %v1968
      %v1974 = vmul.f32 %v1897, %v1968
      %v1975 = vmul.f32 %v1899, %v1968
      %v1976 = vmul.f32 %v1902, %v1968
      %v1977 = vmul.f32 %v1904, %v1968
      %v1978 = vmul.f32 %v1907, %v1968
      %v1979 = vmul.f32 %v1909, %v1968
      %v1980 = vmul.f32 %v1912, %v1968
      %v1981 = vmul.f32 %v1914, %v1968
      %v1982 = vmul.f32 %v1917, %v1968
      %v1983 = vmul.f32 %v1919, %v1968
      %v1984 = vmul.f32 %v1922, %v1968
      %v1985 = vmul.f32 %v1924, %v1968
      %v1986 = vmul.f32 %v1927, %v1968
      %v1987 = vmul.f32 %v1929, %v1968
      %v1988 = vmul.f32 %v1932, %v1968
      %v1989 = vmul.f32 %v1934, %v1968
      %v1990 = vmul.f32 %v1937, %v1968
      %v1991 = vmul.f32 %v1939, %v1968
      %v1992 = vmul.f32 %v1942, %v1968
      %v1993 = vmul.f32 %v1944, %v1968
      %v1994 = vmul.f32 %v1947, %v1968
      %v1995 = vmul.f32 %v1949, %v1968
      %v1996 = vmul.f32 %v1952, %v1968
      %v1997 = vmul.f32 %v1954, %v1968
      %v1998 = vmul.f32 %v1957, %v1968
      %v1999 = vmul.f32 %v1959, %v1968
      %v2000 = vmul.f32 %v1962, %v1968
      %v2001 = vmul.f32 %v1964, %v1968
      %v2002 = vld [vmem:[%s4] sm:$0x1]
      %v2004 = vperm.slane %v2002, 0
      %v2006 = vadd.f32 %v1970, %v2004
      %v2007 = vadd.f32 %v1971, %v2004
      %v2008 = vadd.f32 %v1972, %v2004
      %v2009 = vadd.f32 %v1973, %v2004
      %v2010 = vadd.f32 %v1974, %v2004
      %v2011 = vadd.f32 %v1975, %v2004
      %v2012 = vadd.f32 %v1976, %v2004
      %v2013 = vadd.f32 %v1977, %v2004
      %v2014 = vadd.f32 %v1978, %v2004
      %v2015 = vadd.f32 %v1979, %v2004
      %v2016 = vadd.f32 %v1980, %v2004
      %v2017 = vadd.f32 %v1981, %v2004
      %v2018 = vadd.f32 %v1982, %v2004
      %v2019 = vadd.f32 %v1983, %v2004
      %v2020 = vadd.f32 %v1984, %v2004
      %v2021 = vadd.f32 %v1985, %v2004
      %v2022 = vadd.f32 %v1986, %v2004
      %v2023 = vadd.f32 %v1987, %v2004
      %v2024 = vadd.f32 %v1988, %v2004
      %v2025 = vadd.f32 %v1989, %v2004
      %v2026 = vadd.f32 %v1990, %v2004
      %v2027 = vadd.f32 %v1991, %v2004
      %v2028 = vadd.f32 %v1992, %v2004
      %v2029 = vadd.f32 %v1993, %v2004
      %v2030 = vadd.f32 %v1994, %v2004
      %v2031 = vadd.f32 %v1995, %v2004
      %v2032 = vadd.f32 %v1996, %v2004
      %v2033 = vadd.f32 %v1997, %v2004
      %v2034 = vadd.f32 %v1998, %v2004
      %v2035 = vadd.f32 %v1999, %v2004
      %v2036 = vadd.f32 %v2000, %v2004
      %v2037 = vadd.f32 %v2001, %v2004
      %v2038 = vmax.f32 %v2006, 0.0
      %v2039 = vmax.f32 %v2007, 0.0
      %v2040 = vmax.f32 %v2008, 0.0
      %v2041 = vmax.f32 %v2009, 0.0
      %v2042 = vmax.f32 %v2010, 0.0
      %v2043 = vmax.f32 %v2011, 0.0
      %v2044 = vmax.f32 %v2012, 0.0
      %v2045 = vmax.f32 %v2013, 0.0
      %v2046 = vmax.f32 %v2014, 0.0
      %v2047 = vmax.f32 %v2015, 0.0
      %v2048 = vmax.f32 %v2016, 0.0
      %v2049 = vmax.f32 %v2017, 0.0
      %v2050 = vmax.f32 %v2018, 0.0
      %v2051 = vmax.f32 %v2019, 0.0
      %v2052 = vmax.f32 %v2020, 0.0
      %v2053 = vmax.f32 %v2021, 0.0
      %v2054 = vmax.f32 %v2022, 0.0
      %v2055 = vmax.f32 %v2023, 0.0
      %v2056 = vmax.f32 %v2024, 0.0
      %v2057 = vmax.f32 %v2025, 0.0
      %v2058 = vmax.f32 %v2026, 0.0
      %v2059 = vmax.f32 %v2027, 0.0
      %v2060 = vmax.f32 %v2028, 0.0
      %v2061 = vmax.f32 %v2029, 0.0
      %v2062 = vmax.f32 %v2030, 0.0
      %v2063 = vmax.f32 %v2031, 0.0
      %v2064 = vmax.f32 %v2032, 0.0
      %v2065 = vmax.f32 %v2033, 0.0
      %v2066 = vmax.f32 %v2034, 0.0
      %v2067 = vmax.f32 %v2035, 0.0
      %v2068 = vmax.f32 %v2036, 0.0
      %v2069 = vmax.f32 %v2037, 0.0
      %v2070 = vpack.c.bf16 %v2038, %v2038
      %v2071 = vpack.c.bf16 %v2039, %v2039
      %v2072 = vpack.c.bf16 %v2040, %v2040
      %v2073 = vpack.c.bf16 %v2041, %v2041
      %v2074 = vpack.c.bf16 %v2042, %v2042
      %v2075 = vpack.c.bf16 %v2043, %v2043
      %v2076 = vpack.c.bf16 %v2044, %v2044
      %v2077 = vpack.c.bf16 %v2045, %v2045
      %v2078 = vpack.c.bf16 %v2046, %v2046
      %v2079 = vpack.c.bf16 %v2047, %v2047
      %v2080 = vpack.c.bf16 %v2048, %v2048
      %v2081 = vpack.c.bf16 %v2049, %v2049
      %v2082 = vpack.c.bf16 %v2050, %v2050
      %v2083 = vpack.c.bf16 %v2051, %v2051
      %v2084 = vpack.c.bf16 %v2052, %v2052
      %v2085 = vpack.c.bf16 %v2053, %v2053
      %v2086 = vpack.c.bf16 %v2054, %v2054
      %v2087 = vpack.c.bf16 %v2055, %v2055
      %v2088 = vpack.c.bf16 %v2056, %v2056
      %v2089 = vpack.c.bf16 %v2057, %v2057
      %v2090 = vpack.c.bf16 %v2058, %v2058
      %v2091 = vpack.c.bf16 %v2059, %v2059
      %v2092 = vpack.c.bf16 %v2060, %v2060
      %v2093 = vpack.c.bf16 %v2061, %v2061
      %v2094 = vpack.c.bf16 %v2062, %v2062
      %v2095 = vpack.c.bf16 %v2063, %v2063
      %v2096 = vpack.c.bf16 %v2064, %v2064
      %v2097 = vpack.c.bf16 %v2065, %v2065
      %v2098 = vpack.c.bf16 %v2066, %v2066
      %v2099 = vpack.c.bf16 %v2067, %v2067
      %v2100 = vpack.c.bf16 %v2068, %v2068
      %v2101 = vpack.c.bf16 %v2069, %v2069
      %vm2102 = vsmask.f32 4368
      %vm2103 = vmor %vm290, %vm2102
      %v2105 = vshrl.u32 %v2070, 16
      %v2107 = vrot.slane %v2105, 7
      %v2108 = vshll.u32 %v2070, 16
      %v2110 = vor.u32 %v2107, %v2108
      %v2111 = vrot.slane %v2107, 4
      %v2113 = vshrl.u32 %v2071, 16
      %v2115 = vrot.slane %v2113, 7
      %v2116 = vshll.u32 %v2071, 16
      %v2118 = vor.u32 %v2115, %v2116
      %v2119 = vsel %vm2103, %v2111, %v2118
      %v2120 = vrot.slane %v2115, 4
      %v2122 = vshrl.u32 %v2072, 16
      %v2124 = vrot.slane %v2122, 7
      %v2125 = vshll.u32 %v2072, 16
      %v2127 = vor.u32 %v2124, %v2125
      %v2128 = vrot.slane %v2124, 4
      %v2130 = vshrl.u32 %v2073, 16
      %v2132 = vrot.slane %v2130, 7
      %v2133 = vshll.u32 %v2073, 16
      %v2135 = vor.u32 %v2132, %v2133
      %v2136 = vsel %vm2103, %v2128, %v2135
      %v2137 = vrot.slane %v2132, 4
      %v2139 = vshrl.u32 %v2074, 16
      %v2141 = vrot.slane %v2139, 7
      %v2142 = vshll.u32 %v2074, 16
      %v2144 = vor.u32 %v2141, %v2142
      %v2145 = vrot.slane %v2141, 4
      %v2147 = vshrl.u32 %v2075, 16
      %v2149 = vrot.slane %v2147, 7
      %v2150 = vshll.u32 %v2075, 16
      %v2152 = vor.u32 %v2149, %v2150
      %v2153 = vsel %vm2103, %v2145, %v2152
      %v2154 = vrot.slane %v2149, 4
      %v2156 = vshrl.u32 %v2076, 16
      %v2158 = vrot.slane %v2156, 7
      %v2159 = vshll.u32 %v2076, 16
      %v2161 = vor.u32 %v2158, %v2159
      %v2162 = vrot.slane %v2158, 4
      %v2164 = vshrl.u32 %v2077, 16
      %v2166 = vrot.slane %v2164, 7
      %v2167 = vshll.u32 %v2077, 16
      %v2169 = vor.u32 %v2166, %v2167
      %v2170 = vsel %vm2103, %v2162, %v2169
      %v2171 = vrot.slane %v2166, 4
      %v2173 = vshrl.u32 %v2078, 16
      %v2175 = vrot.slane %v2173, 7
      %v2176 = vshll.u32 %v2078, 16
      %v2178 = vor.u32 %v2175, %v2176
      %v2179 = vrot.slane %v2175, 4
      %v2181 = vshrl.u32 %v2079, 16
      %v2183 = vrot.slane %v2181, 7
      %v2184 = vshll.u32 %v2079, 16
      %v2186 = vor.u32 %v2183, %v2184
      %v2187 = vsel %vm2103, %v2179, %v2186
      %v2188 = vrot.slane %v2183, 4
      %v2190 = vshrl.u32 %v2080, 16
      %v2192 = vrot.slane %v2190, 7
      %v2193 = vshll.u32 %v2080, 16
      %v2195 = vor.u32 %v2192, %v2193
      %v2196 = vrot.slane %v2192, 4
      %v2198 = vshrl.u32 %v2081, 16
      %v2200 = vrot.slane %v2198, 7
      %v2201 = vshll.u32 %v2081, 16
      %v2203 = vor.u32 %v2200, %v2201
      %v2204 = vsel %vm2103, %v2196, %v2203
      %v2205 = vrot.slane %v2200, 4
      %v2207 = vshrl.u32 %v2082, 16
      %v2209 = vrot.slane %v2207, 7
      %v2210 = vshll.u32 %v2082, 16
      %v2212 = vor.u32 %v2209, %v2210
      %v2213 = vrot.slane %v2209, 4
      %v2215 = vshrl.u32 %v2083, 16
      %v2217 = vrot.slane %v2215, 7
      %v2218 = vshll.u32 %v2083, 16
      %v2220 = vor.u32 %v2217, %v2218
      %v2221 = vsel %vm2103, %v2213, %v2220
      %v2222 = vrot.slane %v2217, 4
      %v2224 = vshrl.u32 %v2084, 16
      %v2226 = vrot.slane %v2224, 7
      %v2227 = vshll.u32 %v2084, 16
      %v2229 = vor.u32 %v2226, %v2227
      %v2230 = vrot.slane %v2226, 4
      %v2232 = vshrl.u32 %v2085, 16
      %v2234 = vrot.slane %v2232, 7
      %v2235 = vshll.u32 %v2085, 16
      %v2237 = vor.u32 %v2234, %v2235
      %v2238 = vsel %vm2103, %v2230, %v2237
      %v2239 = vrot.slane %v2234, 4
      %v2241 = vshrl.u32 %v2086, 16
      %v2243 = vrot.slane %v2241, 7
      %v2244 = vshll.u32 %v2086, 16
      %v2246 = vor.u32 %v2243, %v2244
      %v2247 = vrot.slane %v2243, 4
      %v2249 = vshrl.u32 %v2087, 16
      %v2251 = vrot.slane %v2249, 7
      %v2252 = vshll.u32 %v2087, 16
      %v2254 = vor.u32 %v2251, %v2252
      %v2255 = vsel %vm2103, %v2247, %v2254
      %v2256 = vrot.slane %v2251, 4
      %v2258 = vshrl.u32 %v2088, 16
      %v2260 = vrot.slane %v2258, 7
      %v2261 = vshll.u32 %v2088, 16
      %v2263 = vor.u32 %v2260, %v2261
      %v2264 = vrot.slane %v2260, 4
      %v2266 = vshrl.u32 %v2089, 16
      %v2268 = vrot.slane %v2266, 7
      %v2269 = vshll.u32 %v2089, 16
      %v2271 = vor.u32 %v2268, %v2269
      %v2272 = vsel %vm2103, %v2264, %v2271
      %v2273 = vrot.slane %v2268, 4
      %v2275 = vshrl.u32 %v2090, 16
      %v2277 = vrot.slane %v2275, 7
      %v2278 = vshll.u32 %v2090, 16
      %v2280 = vor.u32 %v2277, %v2278
      %v2281 = vrot.slane %v2277, 4
      %v2283 = vshrl.u32 %v2091, 16
      %v2285 = vrot.slane %v2283, 7
      %v2286 = vshll.u32 %v2091, 16
      %v2288 = vor.u32 %v2285, %v2286
      %v2289 = vsel %vm2103, %v2281, %v2288
      %v2290 = vrot.slane %v2285, 4
      %v2292 = vshrl.u32 %v2092, 16
      %v2294 = vrot.slane %v2292, 7
      %v2295 = vshll.u32 %v2092, 16
      %v2297 = vor.u32 %v2294, %v2295
      %v2298 = vrot.slane %v2294, 4
      %v2300 = vshrl.u32 %v2093, 16
      %v2302 = vrot.slane %v2300, 7
      %v2303 = vshll.u32 %v2093, 16
      %v2305 = vor.u32 %v2302, %v2303
      %v2306 = vsel %vm2103, %v2298, %v2305
      %v2307 = vrot.slane %v2302, 4
      %v2309 = vshrl.u32 %v2094, 16
      %v2311 = vrot.slane %v2309, 7
      %v2312 = vshll.u32 %v2094, 16
      %v2314 = vor.u32 %v2311, %v2312
      %v2315 = vrot.slane %v2311, 4
      %v2317 = vshrl.u32 %v2095, 16
      %v2319 = vrot.slane %v2317, 7
      %v2320 = vshll.u32 %v2095, 16
      %v2322 = vor.u32 %v2319, %v2320
      %v2323 = vsel %vm2103, %v2315, %v2322
      %v2324 = vrot.slane %v2319, 4
      %v2326 = vshrl.u32 %v2096, 16
      %v2328 = vrot.slane %v2326, 7
      %v2329 = vshll.u32 %v2096, 16
      %v2331 = vor.u32 %v2328, %v2329
      %v2332 = vrot.slane %v2328, 4
      %v2334 = vshrl.u32 %v2097, 16
      %v2336 = vrot.slane %v2334, 7
      %v2337 = vshll.u32 %v2097, 16
      %v2339 = vor.u32 %v2336, %v2337
      %v2340 = vsel %vm2103, %v2332, %v2339
      %v2341 = vrot.slane %v2336, 4
      %v2343 = vshrl.u32 %v2098, 16
      %v2345 = vrot.slane %v2343, 7
      %v2346 = vshll.u32 %v2098, 16
      %v2348 = vor.u32 %v2345, %v2346
      %v2349 = vrot.slane %v2345, 4
      %v2351 = vshrl.u32 %v2099, 16
      %v2353 = vrot.slane %v2351, 7
      %v2354 = vshll.u32 %v2099, 16
      %v2356 = vor.u32 %v2353, %v2354
      %v2357 = vsel %vm2103, %v2349, %v2356
      %v2358 = vrot.slane %v2353, 4
      %v2360 = vshrl.u32 %v2100, 16
      %v2362 = vrot.slane %v2360, 7
      %v2363 = vshll.u32 %v2100, 16
      %v2365 = vor.u32 %v2362, %v2363
      %v2366 = vrot.slane %v2362, 4
      %v2368 = vshrl.u32 %v2101, 16
      %v2370 = vrot.slane %v2368, 7
      %v2371 = vshll.u32 %v2101, 16
      %v2373 = vor.u32 %v2370, %v2371
      %v2374 = vsel %vm2103, %v2366, %v2373
      %v2375 = vrot.slane %v2370, 4
      %s2424 = scalar_lea.vmem [#allocation2], 12
      %vm2425 = vcmask 60416
      %vm2426 = vmand %vm2425, %vm346
      %v2427 = vld [vmem:[%s2424] sm:$0xf]
      %v2428 = vsel %vm2426, %v2110, %v2427
      %2429 = vst [vmem:[%s2424] sm:$0xf] %v2428
      %2430 = vst.msk [vmem:[%s2424 + $0x4] sm:$0xf] %vm280, %v2119
      %v2431 = vld [vmem:[%s2424 + $0x8] sm:$0x1]
      %v2432 = vsel %vm291, %v2120, %v2431
      %2433 = vst [vmem:[%s2424 + $0x8] sm:$0x1] %v2432
      %v2434 = vld [vmem:[%s2424 + $0xc] sm:$0xf]
      %v2435 = vsel %vm2426, %v2127, %v2434
      %2436 = vst [vmem:[%s2424 + $0xc] sm:$0xf] %v2435
      %2437 = vst.msk [vmem:[%s2424 + $0x10] sm:$0xf] %vm280, %v2136
      %v2438 = vld [vmem:[%s2424 + $0x14] sm:$0x1]
      %v2439 = vsel %vm291, %v2137, %v2438
      %2440 = vst [vmem:[%s2424 + $0x14] sm:$0x1] %v2439
      %v2441 = vld [vmem:[%s2424 + $0x18] sm:$0xf]
      %v2442 = vsel %vm2426, %v2144, %v2441
      %2443 = vst [vmem:[%s2424 + $0x18] sm:$0xf] %v2442
      %2444 = vst.msk [vmem:[%s2424 + $0x1c] sm:$0xf] %vm280, %v2153
      %v2445 = vld [vmem:[%s2424 + $0x20] sm:$0x1]
      %v2446 = vsel %vm291, %v2154, %v2445
      %2447 = vst [vmem:[%s2424 + $0x20] sm:$0x1] %v2446
      %v2448 = vld [vmem:[%s2424 + $0x24] sm:$0xf]
      %v2449 = vsel %vm2426, %v2161, %v2448
      %2450 = vst [vmem:[%s2424 + $0x24] sm:$0xf] %v2449
      %2451 = vst.msk [vmem:[%s2424 + $0x28] sm:$0xf] %vm280, %v2170
      %v2452 = vld [vmem:[%s2424 + $0x2c] sm:$0x1]
      %v2453 = vsel %vm291, %v2171, %v2452
      %2454 = vst [vmem:[%s2424 + $0x2c] sm:$0x1] %v2453
      %v2455 = vld [vmem:[%s2424 + $0x30] sm:$0xf]
      %v2456 = vsel %vm2426, %v2178, %v2455
      %2457 = vst [vmem:[%s2424 + $0x30] sm:$0xf] %v2456
      %2458 = vst.msk [vmem:[%s2424 + $0x34] sm:$0xf] %vm280, %v2187
      %v2459 = vld [vmem:[%s2424 + $0x38] sm:$0x1]
      %v2460 = vsel %vm291, %v2188, %v2459
      %2461 = vst [vmem:[%s2424 + $0x38] sm:$0x1] %v2460
      %v2462 = vld [vmem:[%s2424 + $0x3c] sm:$0xf]
      %v2463 = vsel %vm2426, %v2195, %v2462
      %2464 = vst [vmem:[%s2424 + $0x3c] sm:$0xf] %v2463
      %2465 = vst.msk [vmem:[%s2424 + $0x40] sm:$0xf] %vm280, %v2204
      %v2466 = vld [vmem:[%s2424 + $0x44] sm:$0x1]
      %v2467 = vsel %vm291, %v2205, %v2466
      %2468 = vst [vmem:[%s2424 + $0x44] sm:$0x1] %v2467
      %v2469 = vld [vmem:[%s2424 + $0x48] sm:$0xf]
      %v2470 = vsel %vm2426, %v2212, %v2469
      %2471 = vst [vmem:[%s2424 + $0x48] sm:$0xf] %v2470
      %2472 = vst.msk [vmem:[%s2424 + $0x4c] sm:$0xf] %vm280, %v2221
      %v2473 = vld [vmem:[%s2424 + $0x50] sm:$0x1]
      %v2474 = vsel %vm291, %v2222, %v2473
      %2475 = vst [vmem:[%s2424 + $0x50] sm:$0x1] %v2474
      %v2476 = vld [vmem:[%s2424 + $0x54] sm:$0xf]
      %v2477 = vsel %vm2426, %v2229, %v2476
      %2478 = vst [vmem:[%s2424 + $0x54] sm:$0xf] %v2477
      %2479 = vst.msk [vmem:[%s2424 + $0x58] sm:$0xf] %vm280, %v2238
      %v2480 = vld [vmem:[%s2424 + $0x5c] sm:$0x1]
      %v2481 = vsel %vm291, %v2239, %v2480
      %2482 = vst [vmem:[%s2424 + $0x5c] sm:$0x1] %v2481
      %v2483 = vld [vmem:[%s2424 + $0x60] sm:$0xf]
      %v2484 = vsel %vm2426, %v2246, %v2483
      %2485 = vst [vmem:[%s2424 + $0x60] sm:$0xf] %v2484
      %2486 = vst.msk [vmem:[%s2424 + $0x64] sm:$0xf] %vm280, %v2255
      %v2487 = vld [vmem:[%s2424 + $0x68] sm:$0x1]
      %v2488 = vsel %vm291, %v2256, %v2487
      %2489 = vst [vmem:[%s2424 + $0x68] sm:$0x1] %v2488
      %v2490 = vld [vmem:[%s2424 + $0x6c] sm:$0xf]
      %v2491 = vsel %vm2426, %v2263, %v2490
      %2492 = vst [vmem:[%s2424 + $0x6c] sm:$0xf] %v2491
      %2493 = vst.msk [vmem:[%s2424 + $0x70] sm:$0xf] %vm280, %v2272
      %v2494 = vld [vmem:[%s2424 + $0x74] sm:$0x1]
      %v2495 = vsel %vm291, %v2273, %v2494
      %2496 = vst [vmem:[%s2424 + $0x74] sm:$0x1] %v2495
      %v2497 = vld [vmem:[%s2424 + $0x78] sm:$0xf]
      %v2498 = vsel %vm2426, %v2280, %v2497
      %2499 = vst [vmem:[%s2424 + $0x78] sm:$0xf] %v2498
      %2500 = vst.msk [vmem:[%s2424 + $0x7c] sm:$0xf] %vm280, %v2289
      %v2501 = vld [vmem:[%s2424 + $0x80] sm:$0x1]
      %v2502 = vsel %vm291, %v2290, %v2501
      %2503 = vst [vmem:[%s2424 + $0x80] sm:$0x1] %v2502
      %v2504 = vld [vmem:[%s2424 + $0x84] sm:$0xf]
      %v2505 = vsel %vm2426, %v2297, %v2504
      %2506 = vst [vmem:[%s2424 + $0x84] sm:$0xf] %v2505
      %2507 = vst.msk [vmem:[%s2424 + $0x88] sm:$0xf] %vm280, %v2306
      %v2508 = vld [vmem:[%s2424 + $0x8c] sm:$0x1]
      %v2509 = vsel %vm291, %v2307, %v2508
      %2510 = vst [vmem:[%s2424 + $0x8c] sm:$0x1] %v2509
      %v2511 = vld [vmem:[%s2424 + $0x90] sm:$0xf]
      %v2512 = vsel %vm2426, %v2314, %v2511
      %2513 = vst [vmem:[%s2424 + $0x90] sm:$0xf] %v2512
      %2514 = vst.msk [vmem:[%s2424 + $0x94] sm:$0xf] %vm280, %v2323
      %v2515 = vld [vmem:[%s2424 + $0x98] sm:$0x1]
      %v2516 = vsel %vm291, %v2324, %v2515
      %2517 = vst [vmem:[%s2424 + $0x98] sm:$0x1] %v2516
      %v2518 = vld [vmem:[%s2424 + $0x9c] sm:$0xf]
      %v2519 = vsel %vm2426, %v2331, %v2518
      %2520 = vst [vmem:[%s2424 + $0x9c] sm:$0xf] %v2519
      %2521 = vst.msk [vmem:[%s2424 + $0xa0] sm:$0xf] %vm280, %v2340
      %v2522 = vld [vmem:[%s2424 + $0xa4] sm:$0x1]
      %v2523 = vsel %vm291, %v2341, %v2522
      %2524 = vst [vmem:[%s2424 + $0xa4] sm:$0x1] %v2523
      %v2525 = vld [vmem:[%s2424 + $0xa8] sm:$0xf]
      %v2526 = vsel %vm2426, %v2348, %v2525
      %2527 = vst [vmem:[%s2424 + $0xa8] sm:$0xf] %v2526
      %2528 = vst.msk [vmem:[%s2424 + $0xac] sm:$0xf] %vm280, %v2357
      %v2529 = vld [vmem:[%s2424 + $0xb0] sm:$0x1]
      %v2530 = vsel %vm291, %v2358, %v2529
      %2531 = vst [vmem:[%s2424 + $0xb0] sm:$0x1] %v2530
      %v2532 = vld [vmem:[%s2424 + $0xb4] sm:$0xf]
      %v2533 = vsel %vm2426, %v2365, %v2532
      %2534 = vst [vmem:[%s2424 + $0xb4] sm:$0xf] %v2533
      %2535 = vst.msk [vmem:[%s2424 + $0xb8] sm:$0xf] %vm280, %v2374
      %v2536 = vld [vmem:[%s2424 + $0xbc] sm:$0x1]
      %v2537 = vsel %vm291, %v2375, %v2536
      %2538 = vst [vmem:[%s2424 + $0xbc] sm:$0x1] %v2537
      %v2539 = vld [vmem:[#allocation2] sm:$0xf]
      %v2540 = vld [vmem:[#allocation2 + $0x4] sm:$0xf]
      %v2541 = vld [vmem:[#allocation2 + $0xc] sm:$0xf]
      %v2542 = vld [vmem:[#allocation2 + $0x10] sm:$0xf]
      %v2543 = vld [vmem:[#allocation2 + $0x18] sm:$0xf]
      %v2544 = vld [vmem:[#allocation2 + $0x1c] sm:$0xf]
      %v2545 = vld [vmem:[#allocation2 + $0x24] sm:$0xf]
      %v2546 = vld [vmem:[#allocation2 + $0x28] sm:$0xf]
      %v2547 = vld [vmem:[#allocation2 + $0x30] sm:$0xf]
      %v2548 = vld [vmem:[#allocation2 + $0x34] sm:$0xf]
      %v2549 = vld [vmem:[#allocation2 + $0x3c] sm:$0xf]
      %v2550 = vld [vmem:[#allocation2 + $0x40] sm:$0xf]
      %v2551 = vld [vmem:[#allocation2 + $0x48] sm:$0xf]
      %v2552 = vld [vmem:[#allocation2 + $0x4c] sm:$0xf]
      %v2553 = vld [vmem:[#allocation2 + $0x54] sm:$0xf]
      %v2554 = vld [vmem:[#allocation2 + $0x58] sm:$0xf]
      %v2555 = vld [vmem:[#allocation2 + $0x60] sm:$0xf]
      %v2556 = vld [vmem:[#allocation2 + $0x64] sm:$0xf]
      %v2557 = vld [vmem:[#allocation2 + $0x6c] sm:$0xf]
      %v2558 = vld [vmem:[#allocation2 + $0x70] sm:$0xf]
      %v2559 = vld [vmem:[#allocation2 + $0x78] sm:$0xf]
      %v2560 = vld [vmem:[#allocation2 + $0x7c] sm:$0xf]
      %v2561 = vld [vmem:[#allocation2 + $0x84] sm:$0xf]
      %v2562 = vld [vmem:[#allocation2 + $0x88] sm:$0xf]
      %v2563 = vld [vmem:[#allocation2 + $0x90] sm:$0xf]
      %v2564 = vld [vmem:[#allocation2 + $0x94] sm:$0xf]
      %v2565 = vld [vmem:[#allocation2 + $0x9c] sm:$0xf]
      %v2566 = vld [vmem:[#allocation2 + $0xa0] sm:$0xf]
      %v2567 = vld [vmem:[#allocation2 + $0xa8] sm:$0xf]
      %v2568 = vld [vmem:[#allocation2 + $0xac] sm:$0xf]
      %v2569 = vld [vmem:[#allocation2 + $0xb4] sm:$0xf]
      %v2570 = vld [vmem:[#allocation2 + $0xb8] sm:$0xf]
      %v2571 = vld [vmem:[#allocation2 + $0x8] sm:$0x1]
      %v2572 = vld [vmem:[#allocation2 + $0x14] sm:$0x1]
      %v2573 = vld [vmem:[#allocation2 + $0x20] sm:$0x1]
      %v2574 = vld [vmem:[#allocation2 + $0x2c] sm:$0x1]
      %v2575 = vld [vmem:[#allocation2 + $0x38] sm:$0x1]
      %v2576 = vld [vmem:[#allocation2 + $0x44] sm:$0x1]
      %v2577 = vld [vmem:[#allocation2 + $0x50] sm:$0x1]
      %v2578 = vld [vmem:[#allocation2 + $0x5c] sm:$0x1]
      %v2579 = vld [vmem:[#allocation2 + $0x68] sm:$0x1]
      %v2580 = vld [vmem:[#allocation2 + $0x74] sm:$0x1]
      %v2581 = vld [vmem:[#allocation2 + $0x80] sm:$0x1]
      %v2582 = vld [vmem:[#allocation2 + $0x8c] sm:$0x1]
      %v2583 = vld [vmem:[#allocation2 + $0x98] sm:$0x1]
      %v2584 = vld [vmem:[#allocation2 + $0xa4] sm:$0x1]
      %v2585 = vld [vmem:[#allocation2 + $0xb0] sm:$0x1]
      %v2586 = vld [vmem:[#allocation2 + $0xbc] sm:$0x1]
      %v2588 = vshrl.u32 %v2539, 16
      %v2590 = vrot.slane %v2588, 4
      %v2591 = vshll.u32 %v2539, 16
      %v2593 = vrot.slane %v2591, 5
      %v2594 = vor.u32 %v2590, %v2593
      %v2595 = vrot.slane %v2594, 4
      %v2597 = vshll.u32 %v2540, 16
      %v2599 = vrot.slane %v2597, 5
      %v2600 = vsel %vm458, %v2595, %v2599
      %v2601 = vshrl.u32 %v2540, 16
      %v2603 = vrot.slane %v2601, 4
      %v2604 = vor.u32 %v2603, %v2599
      %v2605 = vrot.slane %v2604, 4
      %v2607 = vshll.u32 %v2571, 16
      %v2609 = vrot.slane %v2607, 5
      %v2610 = vsel %vm458, %v2605, %v2609
      %v2612 = vshrl.u32 %v2541, 16
      %v2614 = vrot.slane %v2612, 4
      %v2615 = vshll.u32 %v2541, 16
      %v2617 = vrot.slane %v2615, 5
      %v2618 = vor.u32 %v2614, %v2617
      %v2619 = vrot.slane %v2618, 4
      %v2621 = vshll.u32 %v2542, 16
      %v2623 = vrot.slane %v2621, 5
      %v2624 = vsel %vm458, %v2619, %v2623
      %v2625 = vshrl.u32 %v2542, 16
      %v2627 = vrot.slane %v2625, 4
      %v2628 = vor.u32 %v2627, %v2623
      %v2629 = vrot.slane %v2628, 4
      %v2631 = vshll.u32 %v2572, 16
      %v2633 = vrot.slane %v2631, 5
      %v2634 = vsel %vm458, %v2629, %v2633
      %v2636 = vshrl.u32 %v2543, 16
      %v2638 = vrot.slane %v2636, 4
      %v2639 = vshll.u32 %v2543, 16
      %v2641 = vrot.slane %v2639, 5
      %v2642 = vor.u32 %v2638, %v2641
      %v2643 = vrot.slane %v2642, 4
      %v2645 = vshll.u32 %v2544, 16
      %v2647 = vrot.slane %v2645, 5
      %v2648 = vsel %vm458, %v2643, %v2647
      %v2649 = vshrl.u32 %v2544, 16
      %v2651 = vrot.slane %v2649, 4
      %v2652 = vor.u32 %v2651, %v2647
      %v2653 = vrot.slane %v2652, 4
      %v2655 = vshll.u32 %v2573, 16
      %v2657 = vrot.slane %v2655, 5
      %v2658 = vsel %vm458, %v2653, %v2657
      %v2660 = vshrl.u32 %v2545, 16
      %v2662 = vrot.slane %v2660, 4
      %v2663 = vshll.u32 %v2545, 16
      %v2665 = vrot.slane %v2663, 5
      %v2666 = vor.u32 %v2662, %v2665
      %v2667 = vrot.slane %v2666, 4
      %v2669 = vshll.u32 %v2546, 16
      %v2671 = vrot.slane %v2669, 5
      %v2672 = vsel %vm458, %v2667, %v2671
      %v2673 = vshrl.u32 %v2546, 16
      %v2675 = vrot.slane %v2673, 4
      %v2676 = vor.u32 %v2675, %v2671
      %v2677 = vrot.slane %v2676, 4
      %v2679 = vshll.u32 %v2574, 16
      %v2681 = vrot.slane %v2679, 5
      %v2682 = vsel %vm458, %v2677, %v2681
      %v2684 = vshrl.u32 %v2547, 16
      %v2686 = vrot.slane %v2684, 4
      %v2687 = vshll.u32 %v2547, 16
      %v2689 = vrot.slane %v2687, 5
      %v2690 = vor.u32 %v2686, %v2689
      %v2691 = vrot.slane %v2690, 4
      %v2693 = vshll.u32 %v2548, 16
      %v2695 = vrot.slane %v2693, 5
      %v2696 = vsel %vm458, %v2691, %v2695
      %v2697 = vshrl.u32 %v2548, 16
      %v2699 = vrot.slane %v2697, 4
      %v2700 = vor.u32 %v2699, %v2695
      %v2701 = vrot.slane %v2700, 4
      %v2703 = vshll.u32 %v2575, 16
      %v2705 = vrot.slane %v2703, 5
      %v2706 = vsel %vm458, %v2701, %v2705
      %v2708 = vshrl.u32 %v2549, 16
      %v2710 = vrot.slane %v2708, 4
      %v2711 = vshll.u32 %v2549, 16
      %v2713 = vrot.slane %v2711, 5
      %v2714 = vor.u32 %v2710, %v2713
      %v2715 = vrot.slane %v2714, 4
      %v2717 = vshll.u32 %v2550, 16
      %v2719 = vrot.slane %v2717, 5
      %v2720 = vsel %vm458, %v2715, %v2719
      %v2721 = vshrl.u32 %v2550, 16
      %v2723 = vrot.slane %v2721, 4
      %v2724 = vor.u32 %v2723, %v2719
      %v2725 = vrot.slane %v2724, 4
      %v2727 = vshll.u32 %v2576, 16
      %v2729 = vrot.slane %v2727, 5
      %v2730 = vsel %vm458, %v2725, %v2729
      %v2732 = vshrl.u32 %v2551, 16
      %v2734 = vrot.slane %v2732, 4
      %v2735 = vshll.u32 %v2551, 16
      %v2737 = vrot.slane %v2735, 5
      %v2738 = vor.u32 %v2734, %v2737
      %v2739 = vrot.slane %v2738, 4
      %v2741 = vshll.u32 %v2552, 16
      %v2743 = vrot.slane %v2741, 5
      %v2744 = vsel %vm458, %v2739, %v2743
      %v2745 = vshrl.u32 %v2552, 16
      %v2747 = vrot.slane %v2745, 4
      %v2748 = vor.u32 %v2747, %v2743
      %v2749 = vrot.slane %v2748, 4
      %v2751 = vshll.u32 %v2577, 16
      %v2753 = vrot.slane %v2751, 5
      %v2754 = vsel %vm458, %v2749, %v2753
      %v2756 = vshrl.u32 %v2553, 16
      %v2758 = vrot.slane %v2756, 4
      %v2759 = vshll.u32 %v2553, 16
      %v2761 = vrot.slane %v2759, 5
      %v2762 = vor.u32 %v2758, %v2761
      %v2763 = vrot.slane %v2762, 4
      %v2765 = vshll.u32 %v2554, 16
      %v2767 = vrot.slane %v2765, 5
      %v2768 = vsel %vm458, %v2763, %v2767
      %v2769 = vshrl.u32 %v2554, 16
      %v2771 = vrot.slane %v2769, 4
      %v2772 = vor.u32 %v2771, %v2767
      %v2773 = vrot.slane %v2772, 4
      %v2775 = vshll.u32 %v2578, 16
      %v2777 = vrot.slane %v2775, 5
      %v2778 = vsel %vm458, %v2773, %v2777
      %v2780 = vshrl.u32 %v2555, 16
      %v2782 = vrot.slane %v2780, 4
      %v2783 = vshll.u32 %v2555, 16
      %v2785 = vrot.slane %v2783, 5
      %v2786 = vor.u32 %v2782, %v2785
      %v2787 = vrot.slane %v2786, 4
      %v2789 = vshll.u32 %v2556, 16
      %v2791 = vrot.slane %v2789, 5
      %v2792 = vsel %vm458, %v2787, %v2791
      %v2793 = vshrl.u32 %v2556, 16
      %v2795 = vrot.slane %v2793, 4
      %v2796 = vor.u32 %v2795, %v2791
      %v2797 = vrot.slane %v2796, 4
      %v2799 = vshll.u32 %v2579, 16
      %v2801 = vrot.slane %v2799, 5
      %v2802 = vsel %vm458, %v2797, %v2801
      %v2804 = vshrl.u32 %v2557, 16
      %v2806 = vrot.slane %v2804, 4
      %v2807 = vshll.u32 %v2557, 16
      %v2809 = vrot.slane %v2807, 5
      %v2810 = vor.u32 %v2806, %v2809
      %v2811 = vrot.slane %v2810, 4
      %v2813 = vshll.u32 %v2558, 16
      %v2815 = vrot.slane %v2813, 5
      %v2816 = vsel %vm458, %v2811, %v2815
      %v2817 = vshrl.u32 %v2558, 16
      %v2819 = vrot.slane %v2817, 4
      %v2820 = vor.u32 %v2819, %v2815
      %v2821 = vrot.slane %v2820, 4
      %v2823 = vshll.u32 %v2580, 16
      %v2825 = vrot.slane %v2823, 5
      %v2826 = vsel %vm458, %v2821, %v2825
      %v2828 = vshrl.u32 %v2559, 16
      %v2830 = vrot.slane %v2828, 4
      %v2831 = vshll.u32 %v2559, 16
      %v2833 = vrot.slane %v2831, 5
      %v2834 = vor.u32 %v2830, %v2833
      %v2835 = vrot.slane %v2834, 4
      %v2837 = vshll.u32 %v2560, 16
      %v2839 = vrot.slane %v2837, 5
      %v2840 = vsel %vm458, %v2835, %v2839
      %v2841 = vshrl.u32 %v2560, 16
      %v2843 = vrot.slane %v2841, 4
      %v2844 = vor.u32 %v2843, %v2839
      %v2845 = vrot.slane %v2844, 4
      %v2847 = vshll.u32 %v2581, 16
      %v2849 = vrot.slane %v2847, 5
      %v2850 = vsel %vm458, %v2845, %v2849
      %v2852 = vshrl.u32 %v2561, 16
      %v2854 = vrot.slane %v2852, 4
      %v2855 = vshll.u32 %v2561, 16
      %v2857 = vrot.slane %v2855, 5
      %v2858 = vor.u32 %v2854, %v2857
      %v2859 = vrot.slane %v2858, 4
      %v2861 = vshll.u32 %v2562, 16
      %v2863 = vrot.slane %v2861, 5
      %v2864 = vsel %vm458, %v2859, %v2863
      %v2865 = vshrl.u32 %v2562, 16
      %v2867 = vrot.slane %v2865, 4
      %v2868 = vor.u32 %v2867, %v2863
      %v2869 = vrot.slane %v2868, 4
      %v2871 = vshll.u32 %v2582, 16
      %v2873 = vrot.slane %v2871, 5
      %v2874 = vsel %vm458, %v2869, %v2873
      %v2876 = vshrl.u32 %v2563, 16
      %v2878 = vrot.slane %v2876, 4
      %v2879 = vshll.u32 %v2563, 16
      %v2881 = vrot.slane %v2879, 5
      %v2882 = vor.u32 %v2878, %v2881
      %v2883 = vrot.slane %v2882, 4
      %v2885 = vshll.u32 %v2564, 16
      %v2887 = vrot.slane %v2885, 5
      %v2888 = vsel %vm458, %v2883, %v2887
      %v2889 = vshrl.u32 %v2564, 16
      %v2891 = vrot.slane %v2889, 4
      %v2892 = vor.u32 %v2891, %v2887
      %v2893 = vrot.slane %v2892, 4
      %v2895 = vshll.u32 %v2583, 16
      %v2897 = vrot.slane %v2895, 5
      %v2898 = vsel %vm458, %v2893, %v2897
      %v2900 = vshrl.u32 %v2565, 16
      %v2902 = vrot.slane %v2900, 4
      %v2903 = vshll.u32 %v2565, 16
      %v2905 = vrot.slane %v2903, 5
      %v2906 = vor.u32 %v2902, %v2905
      %v2907 = vrot.slane %v2906, 4
      %v2909 = vshll.u32 %v2566, 16
      %v2911 = vrot.slane %v2909, 5
      %v2912 = vsel %vm458, %v2907, %v2911
      %v2913 = vshrl.u32 %v2566, 16
      %v2915 = vrot.slane %v2913, 4
      %v2916 = vor.u32 %v2915, %v2911
      %v2917 = vrot.slane %v2916, 4
      %v2919 = vshll.u32 %v2584, 16
      %v2921 = vrot.slane %v2919, 5
      %v2922 = vsel %vm458, %v2917, %v2921
      %v2924 = vshrl.u32 %v2567, 16
      %v2926 = vrot.slane %v2924, 4
      %v2927 = vshll.u32 %v2567, 16
      %v2929 = vrot.slane %v2927, 5
      %v2930 = vor.u32 %v2926, %v2929
      %v2931 = vrot.slane %v2930, 4
      %v2933 = vshll.u32 %v2568, 16
      %v2935 = vrot.slane %v2933, 5
      %v2936 = vsel %vm458, %v2931, %v2935
      %v2937 = vshrl.u32 %v2568, 16
      %v2939 = vrot.slane %v2937, 4
      %v2940 = vor.u32 %v2939, %v2935
      %v2941 = vrot.slane %v2940, 4
      %v2943 = vshll.u32 %v2585, 16
      %v2945 = vrot.slane %v2943, 5
      %v2946 = vsel %vm458, %v2941, %v2945
      %v2948 = vshrl.u32 %v2569, 16
      %v2950 = vrot.slane %v2948, 4
      %v2951 = vshll.u32 %v2569, 16
      %v2953 = vrot.slane %v2951, 5
      %v2954 = vor.u32 %v2950, %v2953
      %v2955 = vrot.slane %v2954, 4
      %v2957 = vshll.u32 %v2570, 16
      %v2959 = vrot.slane %v2957, 5
      %v2960 = vsel %vm458, %v2955, %v2959
      %v2961 = vshrl.u32 %v2570, 16
      %v2963 = vrot.slane %v2961, 4
      %v2964 = vor.u32 %v2963, %v2959
      %v2965 = vrot.slane %v2964, 4
      %v2967 = vshll.u32 %v2586, 16
      %v2969 = vrot.slane %v2967, 5
      %v2970 = vsel %vm458, %v2965, %v2969
      %v2971 = vld [vmem:[#allocation2] sm:$0xe]
      %v2972 = vld [vmem:[#allocation2 + $0xc] sm:$0xe]
      %v2973 = vld [vmem:[#allocation2 + $0x18] sm:$0xe]
      %v2974 = vld [vmem:[#allocation2 + $0x24] sm:$0xe]
      %v2975 = vld [vmem:[#allocation2 + $0x30] sm:$0xe]
      %v2976 = vld [vmem:[#allocation2 + $0x3c] sm:$0xe]
      %v2977 = vld [vmem:[#allocation2 + $0x48] sm:$0xe]
      %v2978 = vld [vmem:[#allocation2 + $0x54] sm:$0xe]
      %v2979 = vld [vmem:[#allocation2 + $0x60] sm:$0xe]
      %v2980 = vld [vmem:[#allocation2 + $0x6c] sm:$0xe]
      %v2981 = vld [vmem:[#allocation2 + $0x78] sm:$0xe]
      %v2982 = vld [vmem:[#allocation2 + $0x84] sm:$0xe]
      %v2983 = vld [vmem:[#allocation2 + $0x90] sm:$0xe]
      %v2984 = vld [vmem:[#allocation2 + $0x9c] sm:$0xe]
      %v2985 = vld [vmem:[#allocation2 + $0xa8] sm:$0xe]
      %v2986 = vld [vmem:[#allocation2 + $0xb4] sm:$0xe]
      %v3035 = vrot.slane %v2971, 5
      %v3036 = vrot.slane %v3035, 4
      %v3037 = vrot.slane %v2540, 5
      %v3038 = vsel %vm893, %v3036, %v3037
      %v3039 = vrot.slane %v3037, 4
      %v3040 = vrot.slane %v2571, 5
      %v3041 = vsel %vm893, %v3039, %v3040
      %v3042 = vrot.slane %v2972, 5
      %v3043 = vrot.slane %v3042, 4
      %v3044 = vrot.slane %v2542, 5
      %v3045 = vsel %vm893, %v3043, %v3044
      %v3046 = vrot.slane %v3044, 4
      %v3047 = vrot.slane %v2572, 5
      %v3048 = vsel %vm893, %v3046, %v3047
      %v3049 = vrot.slane %v2973, 5
      %v3050 = vrot.slane %v3049, 4
      %v3051 = vrot.slane %v2544, 5
      %v3052 = vsel %vm893, %v3050, %v3051
      %v3053 = vrot.slane %v3051, 4
      %v3054 = vrot.slane %v2573, 5
      %v3055 = vsel %vm893, %v3053, %v3054
      %v3056 = vrot.slane %v2974, 5
      %v3057 = vrot.slane %v3056, 4
      %v3058 = vrot.slane %v2546, 5
      %v3059 = vsel %vm893, %v3057, %v3058
      %v3060 = vrot.slane %v3058, 4
      %v3061 = vrot.slane %v2574, 5
      %v3062 = vsel %vm893, %v3060, %v3061
      %v3063 = vrot.slane %v2975, 5
      %v3064 = vrot.slane %v3063, 4
      %v3065 = vrot.slane %v2548, 5
      %v3066 = vsel %vm893, %v3064, %v3065
      %v3067 = vrot.slane %v3065, 4
      %v3068 = vrot.slane %v2575, 5
      %v3069 = vsel %vm893, %v3067, %v3068
      %v3070 = vrot.slane %v2976, 5
      %v3071 = vrot.slane %v3070, 4
      %v3072 = vrot.slane %v2550, 5
      %v3073 = vsel %vm893, %v3071, %v3072
      %v3074 = vrot.slane %v3072, 4
      %v3075 = vrot.slane %v2576, 5
      %v3076 = vsel %vm893, %v3074, %v3075
      %v3077 = vrot.slane %v2977, 5
      %v3078 = vrot.slane %v3077, 4
      %v3079 = vrot.slane %v2552, 5
      %v3080 = vsel %vm893, %v3078, %v3079
      %v3081 = vrot.slane %v3079, 4
      %v3082 = vrot.slane %v2577, 5
      %v3083 = vsel %vm893, %v3081, %v3082
      %v3084 = vrot.slane %v2978, 5
      %v3085 = vrot.slane %v3084, 4
      %v3086 = vrot.slane %v2554, 5
      %v3087 = vsel %vm893, %v3085, %v3086
      %v3088 = vrot.slane %v3086, 4
      %v3089 = vrot.slane %v2578, 5
      %v3090 = vsel %vm893, %v3088, %v3089
      %v3091 = vrot.slane %v2979, 5
      %v3092 = vrot.slane %v3091, 4
      %v3093 = vrot.slane %v2556, 5
      %v3094 = vsel %vm893, %v3092, %v3093
      %v3095 = vrot.slane %v3093, 4
      %v3096 = vrot.slane %v2579, 5
      %v3097 = vsel %vm893, %v3095, %v3096
      %v3098 = vrot.slane %v2980, 5
      %v3099 = vrot.slane %v3098, 4
      %v3100 = vrot.slane %v2558, 5
      %v3101 = vsel %vm893, %v3099, %v3100
      %v3102 = vrot.slane %v3100, 4
      %v3103 = vrot.slane %v2580, 5
      %v3104 = vsel %vm893, %v3102, %v3103
      %v3105 = vrot.slane %v2981, 5
      %v3106 = vrot.slane %v3105, 4
      %v3107 = vrot.slane %v2560, 5
      %v3108 = vsel %vm893, %v3106, %v3107
      %v3109 = vrot.slane %v3107, 4
      %v3110 = vrot.slane %v2581, 5
      %v3111 = vsel %vm893, %v3109, %v3110
      %v3112 = vrot.slane %v2982, 5
      %v3113 = vrot.slane %v3112, 4
      %v3114 = vrot.slane %v2562, 5
      %v3115 = vsel %vm893, %v3113, %v3114
      %v3116 = vrot.slane %v3114, 4
      %v3117 = vrot.slane %v2582, 5
      %v3118 = vsel %vm893, %v3116, %v3117
      %v3119 = vrot.slane %v2983, 5
      %v3120 = vrot.slane %v3119, 4
      %v3121 = vrot.slane %v2564, 5
      %v3122 = vsel %vm893, %v3120, %v3121
      %v3123 = vrot.slane %v3121, 4
      %v3124 = vrot.slane %v2583, 5
      %v3125 = vsel %vm893, %v3123, %v3124
      %v3126 = vrot.slane %v2984, 5
      %v3127 = vrot.slane %v3126, 4
      %v3128 = vrot.slane %v2566, 5
      %v3129 = vsel %vm893, %v3127, %v3128
      %v3130 = vrot.slane %v3128, 4
      %v3131 = vrot.slane %v2584, 5
      %v3132 = vsel %vm893, %v3130, %v3131
      %v3133 = vrot.slane %v2985, 5
      %v3134 = vrot.slane %v3133, 4
      %v3135 = vrot.slane %v2568, 5
      %v3136 = vsel %vm893, %v3134, %v3135
      %v3137 = vrot.slane %v3135, 4
      %v3138 = vrot.slane %v2585, 5
      %v3139 = vsel %vm893, %v3137, %v3138
      %v3140 = vrot.slane %v2986, 5
      %v3141 = vrot.slane %v3140, 4
      %v3142 = vrot.slane %v2570, 5
      %v3143 = vsel %vm893, %v3141, %v3142
      %v3144 = vrot.slane %v3142, 4
      %v3145 = vrot.slane %v2586, 5
      %v3146 = vsel %vm893, %v3144, %v3145
      %v3147 = vld [vmem:[%s2424] sm:$0xf]
      %v3148 = vld [vmem:[%s2424 + $0x4] sm:$0xf]
      %v3149 = vld [vmem:[%s2424 + $0xc] sm:$0xf]
      %v3150 = vld [vmem:[%s2424 + $0x10] sm:$0xf]
      %v3151 = vld [vmem:[%s2424 + $0x18] sm:$0xf]
      %v3152 = vld [vmem:[%s2424 + $0x1c] sm:$0xf]
      %v3153 = vld [vmem:[%s2424 + $0x24] sm:$0xf]
      %v3154 = vld [vmem:[%s2424 + $0x28] sm:$0xf]
      %v3155 = vld [vmem:[%s2424 + $0x30] sm:$0xf]
      %v3156 = vld [vmem:[%s2424 + $0x34] sm:$0xf]
      %v3157 = vld [vmem:[%s2424 + $0x3c] sm:$0xf]
      %v3158 = vld [vmem:[%s2424 + $0x40] sm:$0xf]
      %v3159 = vld [vmem:[%s2424 + $0x48] sm:$0xf]
      %v3160 = vld [vmem:[%s2424 + $0x4c] sm:$0xf]
      %v3161 = vld [vmem:[%s2424 + $0x54] sm:$0xf]
      %v3162 = vld [vmem:[%s2424 + $0x58] sm:$0xf]
      %v3163 = vld [vmem:[%s2424 + $0x60] sm:$0xf]
      %v3164 = vld [vmem:[%s2424 + $0x64] sm:$0xf]
      %v3165 = vld [vmem:[%s2424 + $0x6c] sm:$0xf]
      %v3166 = vld [vmem:[%s2424 + $0x70] sm:$0xf]
      %v3167 = vld [vmem:[%s2424 + $0x78] sm:$0xf]
      %v3168 = vld [vmem:[%s2424 + $0x7c] sm:$0xf]
      %v3169 = vld [vmem:[%s2424 + $0x84] sm:$0xf]
      %v3170 = vld [vmem:[%s2424 + $0x88] sm:$0xf]
      %v3171 = vld [vmem:[%s2424 + $0x90] sm:$0xf]
      %v3172 = vld [vmem:[%s2424 + $0x94] sm:$0xf]
      %v3173 = vld [vmem:[%s2424 + $0x9c] sm:$0xf]
      %v3174 = vld [vmem:[%s2424 + $0xa0] sm:$0xf]
      %v3175 = vld [vmem:[%s2424 + $0xa8] sm:$0xf]
      %v3176 = vld [vmem:[%s2424 + $0xac] sm:$0xf]
      %v3177 = vld [vmem:[%s2424 + $0xb4] sm:$0xf]
      %v3178 = vld [vmem:[%s2424 + $0xb8] sm:$0xf]
      %v3179 = vld [vmem:[%s2424 + $0x8] sm:$0x1]
      %v3180 = vld [vmem:[%s2424 + $0x14] sm:$0x1]
      %v3181 = vld [vmem:[%s2424 + $0x20] sm:$0x1]
      %v3182 = vld [vmem:[%s2424 + $0x2c] sm:$0x1]
      %v3183 = vld [vmem:[%s2424 + $0x38] sm:$0x1]
      %v3184 = vld [vmem:[%s2424 + $0x44] sm:$0x1]
      %v3185 = vld [vmem:[%s2424 + $0x50] sm:$0x1]
      %v3186 = vld [vmem:[%s2424 + $0x5c] sm:$0x1]
      %v3187 = vld [vmem:[%s2424 + $0x68] sm:$0x1]
      %v3188 = vld [vmem:[%s2424 + $0x74] sm:$0x1]
      %v3189 = vld [vmem:[%s2424 + $0x80] sm:$0x1]
      %v3190 = vld [vmem:[%s2424 + $0x8c] sm:$0x1]
      %v3191 = vld [vmem:[%s2424 + $0x98] sm:$0x1]
      %v3192 = vld [vmem:[%s2424 + $0xa4] sm:$0x1]
      %v3193 = vld [vmem:[%s2424 + $0xb0] sm:$0x1]
      %v3194 = vld [vmem:[%s2424 + $0xbc] sm:$0x1]
      %v3196 = vshrl.u32 %v3147, 16
      %v3198 = vrot.slane %v3196, 4
      %v3199 = vshll.u32 %v3147, 16
      %v3201 = vrot.slane %v3199, 5
      %v3202 = vor.u32 %v3198, %v3201
      %v3203 = vrot.slane %v3202, 4
      %v3205 = vshll.u32 %v3148, 16
      %v3207 = vrot.slane %v3205, 5
      %v3208 = vsel %vm458, %v3203, %v3207
      %v3209 = vshrl.u32 %v3148, 16
      %v3211 = vrot.slane %v3209, 4
      %v3212 = vor.u32 %v3211, %v3207
      %v3213 = vrot.slane %v3212, 4
      %v3215 = vshll.u32 %v3179, 16
      %v3217 = vrot.slane %v3215, 5
      %v3218 = vsel %vm458, %v3213, %v3217
      %v3220 = vshrl.u32 %v3149, 16
      %v3222 = vrot.slane %v3220, 4
      %v3223 = vshll.u32 %v3149, 16
      %v3225 = vrot.slane %v3223, 5
      %v3226 = vor.u32 %v3222, %v3225
      %v3227 = vrot.slane %v3226, 4
      %v3229 = vshll.u32 %v3150, 16
      %v3231 = vrot.slane %v3229, 5
      %v3232 = vsel %vm458, %v3227, %v3231
      %v3233 = vshrl.u32 %v3150, 16
      %v3235 = vrot.slane %v3233, 4
      %v3236 = vor.u32 %v3235, %v3231
      %v3237 = vrot.slane %v3236, 4
      %v3239 = vshll.u32 %v3180, 16
      %v3241 = vrot.slane %v3239, 5
      %v3242 = vsel %vm458, %v3237, %v3241
      %v3244 = vshrl.u32 %v3151, 16
      %v3246 = vrot.slane %v3244, 4
      %v3247 = vshll.u32 %v3151, 16
      %v3249 = vrot.slane %v3247, 5
      %v3250 = vor.u32 %v3246, %v3249
      %v3251 = vrot.slane %v3250, 4
      %v3253 = vshll.u32 %v3152, 16
      %v3255 = vrot.slane %v3253, 5
      %v3256 = vsel %vm458, %v3251, %v3255
      %v3257 = vshrl.u32 %v3152, 16
      %v3259 = vrot.slane %v3257, 4
      %v3260 = vor.u32 %v3259, %v3255
      %v3261 = vrot.slane %v3260, 4
      %v3263 = vshll.u32 %v3181, 16
      %v3265 = vrot.slane %v3263, 5
      %v3266 = vsel %vm458, %v3261, %v3265
      %v3268 = vshrl.u32 %v3153, 16
      %v3270 = vrot.slane %v3268, 4
      %v3271 = vshll.u32 %v3153, 16
      %v3273 = vrot.slane %v3271, 5
      %v3274 = vor.u32 %v3270, %v3273
      %v3275 = vrot.slane %v3274, 4
      %v3277 = vshll.u32 %v3154, 16
      %v3279 = vrot.slane %v3277, 5
      %v3280 = vsel %vm458, %v3275, %v3279
      %v3281 = vshrl.u32 %v3154, 16
      %v3283 = vrot.slane %v3281, 4
      %v3284 = vor.u32 %v3283, %v3279
      %v3285 = vrot.slane %v3284, 4
      %v3287 = vshll.u32 %v3182, 16
      %v3289 = vrot.slane %v3287, 5
      %v3290 = vsel %vm458, %v3285, %v3289
      %v3292 = vshrl.u32 %v3155, 16
      %v3294 = vrot.slane %v3292, 4
      %v3295 = vshll.u32 %v3155, 16
      %v3297 = vrot.slane %v3295, 5
      %v3298 = vor.u32 %v3294, %v3297
      %v3299 = vrot.slane %v3298, 4
      %v3301 = vshll.u32 %v3156, 16
      %v3303 = vrot.slane %v3301, 5
      %v3304 = vsel %vm458, %v3299, %v3303
      %v3305 = vshrl.u32 %v3156, 16
      %v3307 = vrot.slane %v3305, 4
      %v3308 = vor.u32 %v3307, %v3303
      %v3309 = vrot.slane %v3308, 4
      %v3311 = vshll.u32 %v3183, 16
      %v3313 = vrot.slane %v3311, 5
      %v3314 = vsel %vm458, %v3309, %v3313
      %v3316 = vshrl.u32 %v3157, 16
      %v3318 = vrot.slane %v3316, 4
      %v3319 = vshll.u32 %v3157, 16
      %v3321 = vrot.slane %v3319, 5
      %v3322 = vor.u32 %v3318, %v3321
      %v3323 = vrot.slane %v3322, 4
      %v3325 = vshll.u32 %v3158, 16
      %v3327 = vrot.slane %v3325, 5
      %v3328 = vsel %vm458, %v3323, %v3327
      %v3329 = vshrl.u32 %v3158, 16
      %v3331 = vrot.slane %v3329, 4
      %v3332 = vor.u32 %v3331, %v3327
      %v3333 = vrot.slane %v3332, 4
      %v3335 = vshll.u32 %v3184, 16
      %v3337 = vrot.slane %v3335, 5
      %v3338 = vsel %vm458, %v3333, %v3337
      %v3340 = vshrl.u32 %v3159, 16
      %v3342 = vrot.slane %v3340, 4
      %v3343 = vshll.u32 %v3159, 16
      %v3345 = vrot.slane %v3343, 5
      %v3346 = vor.u32 %v3342, %v3345
      %v3347 = vrot.slane %v3346, 4
      %v3349 = vshll.u32 %v3160, 16
      %v3351 = vrot.slane %v3349, 5
      %v3352 = vsel %vm458, %v3347, %v3351
      %v3353 = vshrl.u32 %v3160, 16
      %v3355 = vrot.slane %v3353, 4
      %v3356 = vor.u32 %v3355, %v3351
      %v3357 = vrot.slane %v3356, 4
      %v3359 = vshll.u32 %v3185, 16
      %v3361 = vrot.slane %v3359, 5
      %v3362 = vsel %vm458, %v3357, %v3361
      %v3364 = vshrl.u32 %v3161, 16
      %v3366 = vrot.slane %v3364, 4
      %v3367 = vshll.u32 %v3161, 16
      %v3369 = vrot.slane %v3367, 5
      %v3370 = vor.u32 %v3366, %v3369
      %v3371 = vrot.slane %v3370, 4
      %v3373 = vshll.u32 %v3162, 16
      %v3375 = vrot.slane %v3373, 5
      %v3376 = vsel %vm458, %v3371, %v3375
      %v3377 = vshrl.u32 %v3162, 16
      %v3379 = vrot.slane %v3377, 4
      %v3380 = vor.u32 %v3379, %v3375
      %v3381 = vrot.slane %v3380, 4
      %v3383 = vshll.u32 %v3186, 16
      %v3385 = vrot.slane %v3383, 5
      %v3386 = vsel %vm458, %v3381, %v3385
      %v3388 = vshrl.u32 %v3163, 16
      %v3390 = vrot.slane %v3388, 4
      %v3391 = vshll.u32 %v3163, 16
      %v3393 = vrot.slane %v3391, 5
      %v3394 = vor.u32 %v3390, %v3393
      %v3395 = vrot.slane %v3394, 4
      %v3397 = vshll.u32 %v3164, 16
      %v3399 = vrot.slane %v3397, 5
      %v3400 = vsel %vm458, %v3395, %v3399
      %v3401 = vshrl.u32 %v3164, 16
      %v3403 = vrot.slane %v3401, 4
      %v3404 = vor.u32 %v3403, %v3399
      %v3405 = vrot.slane %v3404, 4
      %v3407 = vshll.u32 %v3187, 16
      %v3409 = vrot.slane %v3407, 5
      %v3410 = vsel %vm458, %v3405, %v3409
      %v3412 = vshrl.u32 %v3165, 16
      %v3414 = vrot.slane %v3412, 4
      %v3415 = vshll.u32 %v3165, 16
      %v3417 = vrot.slane %v3415, 5
      %v3418 = vor.u32 %v3414, %v3417
      %v3419 = vrot.slane %v3418, 4
      %v3421 = vshll.u32 %v3166, 16
      %v3423 = vrot.slane %v3421, 5
      %v3424 = vsel %vm458, %v3419, %v3423
      %v3425 = vshrl.u32 %v3166, 16
      %v3427 = vrot.slane %v3425, 4
      %v3428 = vor.u32 %v3427, %v3423
      %v3429 = vrot.slane %v3428, 4
      %v3431 = vshll.u32 %v3188, 16
      %v3433 = vrot.slane %v3431, 5
      %v3434 = vsel %vm458, %v3429, %v3433
      %v3436 = vshrl.u32 %v3167, 16
      %v3438 = vrot.slane %v3436, 4
      %v3439 = vshll.u32 %v3167, 16
      %v3441 = vrot.slane %v3439, 5
      %v3442 = vor.u32 %v3438, %v3441
      %v3443 = vrot.slane %v3442, 4
      %v3445 = vshll.u32 %v3168, 16
      %v3447 = vrot.slane %v3445, 5
      %v3448 = vsel %vm458, %v3443, %v3447
      %v3449 = vshrl.u32 %v3168, 16
      %v3451 = vrot.slane %v3449, 4
      %v3452 = vor.u32 %v3451, %v3447
      %v3453 = vrot.slane %v3452, 4
      %v3455 = vshll.u32 %v3189, 16
      %v3457 = vrot.slane %v3455, 5
      %v3458 = vsel %vm458, %v3453, %v3457
      %v3460 = vshrl.u32 %v3169, 16
      %v3462 = vrot.slane %v3460, 4
      %v3463 = vshll.u32 %v3169, 16
      %v3465 = vrot.slane %v3463, 5
      %v3466 = vor.u32 %v3462, %v3465
      %v3467 = vrot.slane %v3466, 4
      %v3469 = vshll.u32 %v3170, 16
      %v3471 = vrot.slane %v3469, 5
      %v3472 = vsel %vm458, %v3467, %v3471
      %v3473 = vshrl.u32 %v3170, 16
      %v3475 = vrot.slane %v3473, 4
      %v3476 = vor.u32 %v3475, %v3471
      %v3477 = vrot.slane %v3476, 4
      %v3479 = vshll.u32 %v3190, 16
      %v3481 = vrot.slane %v3479, 5
      %v3482 = vsel %vm458, %v3477, %v3481
      %v3484 = vshrl.u32 %v3171, 16
      %v3486 = vrot.slane %v3484, 4
      %v3487 = vshll.u32 %v3171, 16
      %v3489 = vrot.slane %v3487, 5
      %v3490 = vor.u32 %v3486, %v3489
      %v3491 = vrot.slane %v3490, 4
      %v3493 = vshll.u32 %v3172, 16
      %v3495 = vrot.slane %v3493, 5
      %v3496 = vsel %vm458, %v3491, %v3495
      %v3497 = vshrl.u32 %v3172, 16
      %v3499 = vrot.slane %v3497, 4
      %v3500 = vor.u32 %v3499, %v3495
      %v3501 = vrot.slane %v3500, 4
      %v3503 = vshll.u32 %v3191, 16
      %v3505 = vrot.slane %v3503, 5
      %v3506 = vsel %vm458, %v3501, %v3505
      %v3508 = vshrl.u32 %v3173, 16
      %v3510 = vrot.slane %v3508, 4
      %v3511 = vshll.u32 %v3173, 16
      %v3513 = vrot.slane %v3511, 5
      %v3514 = vor.u32 %v3510, %v3513
      %v3515 = vrot.slane %v3514, 4
      %v3517 = vshll.u32 %v3174, 16
      %v3519 = vrot.slane %v3517, 5
      %v3520 = vsel %vm458, %v3515, %v3519
      %v3521 = vshrl.u32 %v3174, 16
      %v3523 = vrot.slane %v3521, 4
      %v3524 = vor.u32 %v3523, %v3519
      %v3525 = vrot.slane %v3524, 4
      %v3527 = vshll.u32 %v3192, 16
      %v3529 = vrot.slane %v3527, 5
      %v3530 = vsel %vm458, %v3525, %v3529
      %v3532 = vshrl.u32 %v3175, 16
      %v3534 = vrot.slane %v3532, 4
      %v3535 = vshll.u32 %v3175, 16
      %v3537 = vrot.slane %v3535, 5
      %v3538 = vor.u32 %v3534, %v3537
      %v3539 = vrot.slane %v3538, 4
      %v3541 = vshll.u32 %v3176, 16
      %v3543 = vrot.slane %v3541, 5
      %v3544 = vsel %vm458, %v3539, %v3543
      %v3545 = vshrl.u32 %v3176, 16
      %v3547 = vrot.slane %v3545, 4
      %v3548 = vor.u32 %v3547, %v3543
      %v3549 = vrot.slane %v3548, 4
      %v3551 = vshll.u32 %v3193, 16
      %v3553 = vrot.slane %v3551, 5
      %v3554 = vsel %vm458, %v3549, %v3553
      %v3556 = vshrl.u32 %v3177, 16
      %v3558 = vrot.slane %v3556, 4
      %v3559 = vshll.u32 %v3177, 16
      %v3561 = vrot.slane %v3559, 5
      %v3562 = vor.u32 %v3558, %v3561
      %v3563 = vrot.slane %v3562, 4
      %v3565 = vshll.u32 %v3178, 16
      %v3567 = vrot.slane %v3565, 5
      %v3568 = vsel %vm458, %v3563, %v3567
      %v3569 = vshrl.u32 %v3178, 16
      %v3571 = vrot.slane %v3569, 4
      %v3572 = vor.u32 %v3571, %v3567
      %v3573 = vrot.slane %v3572, 4
      %v3575 = vshll.u32 %v3194, 16
      %v3577 = vrot.slane %v3575, 5
      %v3578 = vsel %vm458, %v3573, %v3577
      %v3579 = vld [vmem:[%s2424] sm:$0xe]
      %v3580 = vld [vmem:[%s2424 + $0xc] sm:$0xe]
      %v3581 = vld [vmem:[%s2424 + $0x18] sm:$0xe]
      %v3582 = vld [vmem:[%s2424 + $0x24] sm:$0xe]
      %v3583 = vld [vmem:[%s2424 + $0x30] sm:$0xe]
      %v3584 = vld [vmem:[%s2424 + $0x3c] sm:$0xe]
      %v3585 = vld [vmem:[%s2424 + $0x48] sm:$0xe]
      %v3586 = vld [vmem:[%s2424 + $0x54] sm:$0xe]
      %v3587 = vld [vmem:[%s2424 + $0x60] sm:$0xe]
      %v3588 = vld [vmem:[%s2424 + $0x6c] sm:$0xe]
      %v3589 = vld [vmem:[%s2424 + $0x78] sm:$0xe]
      %v3590 = vld [vmem:[%s2424 + $0x84] sm:$0xe]
      %v3591 = vld [vmem:[%s2424 + $0x90] sm:$0xe]
      %v3592 = vld [vmem:[%s2424 + $0x9c] sm:$0xe]
      %v3593 = vld [vmem:[%s2424 + $0xa8] sm:$0xe]
      %v3594 = vld [vmem:[%s2424 + $0xb4] sm:$0xe]
      %v3643 = vrot.slane %v3579, 5
      %v3644 = vrot.slane %v3643, 4
      %v3645 = vrot.slane %v3148, 5
      %v3646 = vsel %vm893, %v3644, %v3645
      %v3647 = vrot.slane %v3645, 4
      %v3648 = vrot.slane %v3179, 5
      %v3649 = vsel %vm893, %v3647, %v3648
      %v3650 = vrot.slane %v3580, 5
      %v3651 = vrot.slane %v3650, 4
      %v3652 = vrot.slane %v3150, 5
      %v3653 = vsel %vm893, %v3651, %v3652
      %v3654 = vrot.slane %v3652, 4
      %v3655 = vrot.slane %v3180, 5
      %v3656 = vsel %vm893, %v3654, %v3655
      %v3657 = vrot.slane %v3581, 5
      %v3658 = vrot.slane %v3657, 4
      %v3659 = vrot.slane %v3152, 5
      %v3660 = vsel %vm893, %v3658, %v3659
      %v3661 = vrot.slane %v3659, 4
      %v3662 = vrot.slane %v3181, 5
      %v3663 = vsel %vm893, %v3661, %v3662
      %v3664 = vrot.slane %v3582, 5
      %v3665 = vrot.slane %v3664, 4
      %v3666 = vrot.slane %v3154, 5
      %v3667 = vsel %vm893, %v3665, %v3666
      %v3668 = vrot.slane %v3666, 4
      %v3669 = vrot.slane %v3182, 5
      %v3670 = vsel %vm893, %v3668, %v3669
      %v3671 = vrot.slane %v3583, 5
      %v3672 = vrot.slane %v3671, 4
      %v3673 = vrot.slane %v3156, 5
      %v3674 = vsel %vm893, %v3672, %v3673
      %v3675 = vrot.slane %v3673, 4
      %v3676 = vrot.slane %v3183, 5
      %v3677 = vsel %vm893, %v3675, %v3676
      %v3678 = vrot.slane %v3584, 5
      %v3679 = vrot.slane %v3678, 4
      %v3680 = vrot.slane %v3158, 5
      %v3681 = vsel %vm893, %v3679, %v3680
      %v3682 = vrot.slane %v3680, 4
      %v3683 = vrot.slane %v3184, 5
      %v3684 = vsel %vm893, %v3682, %v3683
      %v3685 = vrot.slane %v3585, 5
      %v3686 = vrot.slane %v3685, 4
      %v3687 = vrot.slane %v3160, 5
      %v3688 = vsel %vm893, %v3686, %v3687
      %v3689 = vrot.slane %v3687, 4
      %v3690 = vrot.slane %v3185, 5
      %v3691 = vsel %vm893, %v3689, %v3690
      %v3692 = vrot.slane %v3586, 5
      %v3693 = vrot.slane %v3692, 4
      %v3694 = vrot.slane %v3162, 5
      %v3695 = vsel %vm893, %v3693, %v3694
      %v3696 = vrot.slane %v3694, 4
      %v3697 = vrot.slane %v3186, 5
      %v3698 = vsel %vm893, %v3696, %v3697
      %v3699 = vrot.slane %v3587, 5
      %v3700 = vrot.slane %v3699, 4
      %v3701 = vrot.slane %v3164, 5
      %v3702 = vsel %vm893, %v3700, %v3701
      %v3703 = vrot.slane %v3701, 4
      %v3704 = vrot.slane %v3187, 5
      %v3705 = vsel %vm893, %v3703, %v3704
      %v3706 = vrot.slane %v3588, 5
      %v3707 = vrot.slane %v3706, 4
      %v3708 = vrot.slane %v3166, 5
      %v3709 = vsel %vm893, %v3707, %v3708
      %v3710 = vrot.slane %v3708, 4
      %v3711 = vrot.slane %v3188, 5
      %v3712 = vsel %vm893, %v3710, %v3711
      %v3713 = vrot.slane %v3589, 5
      %v3714 = vrot.slane %v3713, 4
      %v3715 = vrot.slane %v3168, 5
      %v3716 = vsel %vm893, %v3714, %v3715
      %v3717 = vrot.slane %v3715, 4
      %v3718 = vrot.slane %v3189, 5
      %v3719 = vsel %vm893, %v3717, %v3718
      %v3720 = vrot.slane %v3590, 5
      %v3721 = vrot.slane %v3720, 4
      %v3722 = vrot.slane %v3170, 5
      %v3723 = vsel %vm893, %v3721, %v3722
      %v3724 = vrot.slane %v3722, 4
      %v3725 = vrot.slane %v3190, 5
      %v3726 = vsel %vm893, %v3724, %v3725
      %v3727 = vrot.slane %v3591, 5
      %v3728 = vrot.slane %v3727, 4
      %v3729 = vrot.slane %v3172, 5
      %v3730 = vsel %vm893, %v3728, %v3729
      %v3731 = vrot.slane %v3729, 4
      %v3732 = vrot.slane %v3191, 5
      %v3733 = vsel %vm893, %v3731, %v3732
      %v3734 = vrot.slane %v3592, 5
      %v3735 = vrot.slane %v3734, 4
      %v3736 = vrot.slane %v3174, 5
      %v3737 = vsel %vm893, %v3735, %v3736
      %v3738 = vrot.slane %v3736, 4
      %v3739 = vrot.slane %v3192, 5
      %v3740 = vsel %vm893, %v3738, %v3739
      %v3741 = vrot.slane %v3593, 5
      %v3742 = vrot.slane %v3741, 4
      %v3743 = vrot.slane %v3176, 5
      %v3744 = vsel %vm893, %v3742, %v3743
      %v3745 = vrot.slane %v3743, 4
      %v3746 = vrot.slane %v3193, 5
      %v3747 = vsel %vm893, %v3745, %v3746
      %v3748 = vrot.slane %v3594, 5
      %v3749 = vrot.slane %v3748, 4
      %v3750 = vrot.slane %v3178, 5
      %v3751 = vsel %vm893, %v3749, %v3750
      %v3752 = vrot.slane %v3750, 4
      %v3753 = vrot.slane %v3194, 5
      %v3754 = vsel %vm893, %v3752, %v3753
      %s3755 = scalar_lea.vmem [#allocation2], 24
      %v3756 = vld [vmem:[%s3755] sm:$0xf]
      %v3757 = vld [vmem:[%s3755 + $0x4] sm:$0xf]
      %v3758 = vld [vmem:[%s3755 + $0xc] sm:$0xf]
      %v3759 = vld [vmem:[%s3755 + $0x10] sm:$0xf]
      %v3760 = vld [vmem:[%s3755 + $0x18] sm:$0xf]
      %v3761 = vld [vmem:[%s3755 + $0x1c] sm:$0xf]
      %v3762 = vld [vmem:[%s3755 + $0x24] sm:$0xf]
      %v3763 = vld [vmem:[%s3755 + $0x28] sm:$0xf]
      %v3764 = vld [vmem:[%s3755 + $0x30] sm:$0xf]
      %v3765 = vld [vmem:[%s3755 + $0x34] sm:$0xf]
      %v3766 = vld [vmem:[%s3755 + $0x3c] sm:$0xf]
      %v3767 = vld [vmem:[%s3755 + $0x40] sm:$0xf]
      %v3768 = vld [vmem:[%s3755 + $0x48] sm:$0xf]
      %v3769 = vld [vmem:[%s3755 + $0x4c] sm:$0xf]
      %v3770 = vld [vmem:[%s3755 + $0x54] sm:$0xf]
      %v3771 = vld [vmem:[%s3755 + $0x58] sm:$0xf]
      %v3772 = vld [vmem:[%s3755 + $0x60] sm:$0xf]
      %v3773 = vld [vmem:[%s3755 + $0x64] sm:$0xf]
      %v3774 = vld [vmem:[%s3755 + $0x6c] sm:$0xf]
      %v3775 = vld [vmem:[%s3755 + $0x70] sm:$0xf]
      %v3776 = vld [vmem:[%s3755 + $0x78] sm:$0xf]
      %v3777 = vld [vmem:[%s3755 + $0x7c] sm:$0xf]
      %v3778 = vld [vmem:[%s3755 + $0x84] sm:$0xf]
      %v3779 = vld [vmem:[%s3755 + $0x88] sm:$0xf]
      %v3780 = vld [vmem:[%s3755 + $0x90] sm:$0xf]
      %v3781 = vld [vmem:[%s3755 + $0x94] sm:$0xf]
      %v3782 = vld [vmem:[%s3755 + $0x9c] sm:$0xf]
      %v3783 = vld [vmem:[%s3755 + $0xa0] sm:$0xf]
      %v3784 = vld [vmem:[%s3755 + $0xa8] sm:$0xf]
      %v3785 = vld [vmem:[%s3755 + $0xac] sm:$0xf]
      %v3786 = vld [vmem:[%s3755 + $0xb4] sm:$0xf]
      %v3787 = vld [vmem:[%s3755 + $0xb8] sm:$0xf]
      %v3788 = vld [vmem:[%s3755 + $0x8] sm:$0x1]
      %v3789 = vld [vmem:[%s3755 + $0x14] sm:$0x1]
      %v3790 = vld [vmem:[%s3755 + $0x20] sm:$0x1]
      %v3791 = vld [vmem:[%s3755 + $0x2c] sm:$0x1]
      %v3792 = vld [vmem:[%s3755 + $0x38] sm:$0x1]
      %v3793 = vld [vmem:[%s3755 + $0x44] sm:$0x1]
      %v3794 = vld [vmem:[%s3755 + $0x50] sm:$0x1]
      %v3795 = vld [vmem:[%s3755 + $0x5c] sm:$0x1]
      %v3796 = vld [vmem:[%s3755 + $0x68] sm:$0x1]
      %v3797 = vld [vmem:[%s3755 + $0x74] sm:$0x1]
      %v3798 = vld [vmem:[%s3755 + $0x80] sm:$0x1]
      %v3799 = vld [vmem:[%s3755 + $0x8c] sm:$0x1]
      %v3800 = vld [vmem:[%s3755 + $0x98] sm:$0x1]
      %v3801 = vld [vmem:[%s3755 + $0xa4] sm:$0x1]
      %v3802 = vld [vmem:[%s3755 + $0xb0] sm:$0x1]
      %v3803 = vld [vmem:[%s3755 + $0xbc] sm:$0x1]
      %v3805 = vshrl.u32 %v3756, 16
      %v3807 = vrot.slane %v3805, 4
      %v3808 = vshll.u32 %v3756, 16
      %v3810 = vrot.slane %v3808, 5
      %v3811 = vor.u32 %v3807, %v3810
      %v3812 = vrot.slane %v3811, 4
      %v3814 = vshll.u32 %v3757, 16
      %v3816 = vrot.slane %v3814, 5
      %v3817 = vsel %vm458, %v3812, %v3816
      %v3818 = vshrl.u32 %v3757, 16
      %v3820 = vrot.slane %v3818, 4
      %v3821 = vor.u32 %v3820, %v3816
      %v3822 = vrot.slane %v3821, 4
      %v3824 = vshll.u32 %v3788, 16
      %v3826 = vrot.slane %v3824, 5
      %v3827 = vsel %vm458, %v3822, %v3826
      %v3829 = vshrl.u32 %v3758, 16
      %v3831 = vrot.slane %v3829, 4
      %v3832 = vshll.u32 %v3758, 16
      %v3834 = vrot.slane %v3832, 5
      %v3835 = vor.u32 %v3831, %v3834
      %v3836 = vrot.slane %v3835, 4
      %v3838 = vshll.u32 %v3759, 16
      %v3840 = vrot.slane %v3838, 5
      %v3841 = vsel %vm458, %v3836, %v3840
      %v3842 = vshrl.u32 %v3759, 16
      %v3844 = vrot.slane %v3842, 4
      %v3845 = vor.u32 %v3844, %v3840
      %v3846 = vrot.slane %v3845, 4
      %v3848 = vshll.u32 %v3789, 16
      %v3850 = vrot.slane %v3848, 5
      %v3851 = vsel %vm458, %v3846, %v3850
      %v3853 = vshrl.u32 %v3760, 16
      %v3855 = vrot.slane %v3853, 4
      %v3856 = vshll.u32 %v3760, 16
      %v3858 = vrot.slane %v3856, 5
      %v3859 = vor.u32 %v3855, %v3858
      %v3860 = vrot.slane %v3859, 4
      %v3862 = vshll.u32 %v3761, 16
      %v3864 = vrot.slane %v3862, 5
      %v3865 = vsel %vm458, %v3860, %v3864
      %v3866 = vshrl.u32 %v3761, 16
      %v3868 = vrot.slane %v3866, 4
      %v3869 = vor.u32 %v3868, %v3864
      %v3870 = vrot.slane %v3869, 4
      %v3872 = vshll.u32 %v3790, 16
      %v3874 = vrot.slane %v3872, 5
      %v3875 = vsel %vm458, %v3870, %v3874
      %v3877 = vshrl.u32 %v3762, 16
      %v3879 = vrot.slane %v3877, 4
      %v3880 = vshll.u32 %v3762, 16
      %v3882 = vrot.slane %v3880, 5
      %v3883 = vor.u32 %v3879, %v3882
      %v3884 = vrot.slane %v3883, 4
      %v3886 = vshll.u32 %v3763, 16
      %v3888 = vrot.slane %v3886, 5
      %v3889 = vsel %vm458, %v3884, %v3888
      %v3890 = vshrl.u32 %v3763, 16
      %v3892 = vrot.slane %v3890, 4
      %v3893 = vor.u32 %v3892, %v3888
      %v3894 = vrot.slane %v3893, 4
      %v3896 = vshll.u32 %v3791, 16
      %v3898 = vrot.slane %v3896, 5
      %v3899 = vsel %vm458, %v3894, %v3898
      %v3901 = vshrl.u32 %v3764, 16
      %v3903 = vrot.slane %v3901, 4
      %v3904 = vshll.u32 %v3764, 16
      %v3906 = vrot.slane %v3904, 5
      %v3907 = vor.u32 %v3903, %v3906
      %v3908 = vrot.slane %v3907, 4
      %v3910 = vshll.u32 %v3765, 16
      %v3912 = vrot.slane %v3910, 5
      %v3913 = vsel %vm458, %v3908, %v3912
      %v3914 = vshrl.u32 %v3765, 16
      %v3916 = vrot.slane %v3914, 4
      %v3917 = vor.u32 %v3916, %v3912
      %v3918 = vrot.slane %v3917, 4
      %v3920 = vshll.u32 %v3792, 16
      %v3922 = vrot.slane %v3920, 5
      %v3923 = vsel %vm458, %v3918, %v3922
      %v3925 = vshrl.u32 %v3766, 16
      %v3927 = vrot.slane %v3925, 4
      %v3928 = vshll.u32 %v3766, 16
      %v3930 = vrot.slane %v3928, 5
      %v3931 = vor.u32 %v3927, %v3930
      %v3932 = vrot.slane %v3931, 4
      %v3934 = vshll.u32 %v3767, 16
      %v3936 = vrot.slane %v3934, 5
      %v3937 = vsel %vm458, %v3932, %v3936
      %v3938 = vshrl.u32 %v3767, 16
      %v3940 = vrot.slane %v3938, 4
      %v3941 = vor.u32 %v3940, %v3936
      %v3942 = vrot.slane %v3941, 4
      %v3944 = vshll.u32 %v3793, 16
      %v3946 = vrot.slane %v3944, 5
      %v3947 = vsel %vm458, %v3942, %v3946
      %v3949 = vshrl.u32 %v3768, 16
      %v3951 = vrot.slane %v3949, 4
      %v3952 = vshll.u32 %v3768, 16
      %v3954 = vrot.slane %v3952, 5
      %v3955 = vor.u32 %v3951, %v3954
      %v3956 = vrot.slane %v3955, 4
      %v3958 = vshll.u32 %v3769, 16
      %v3960 = vrot.slane %v3958, 5
      %v3961 = vsel %vm458, %v3956, %v3960
      %v3962 = vshrl.u32 %v3769, 16
      %v3964 = vrot.slane %v3962, 4
      %v3965 = vor.u32 %v3964, %v3960
      %v3966 = vrot.slane %v3965, 4
      %v3968 = vshll.u32 %v3794, 16
      %v3970 = vrot.slane %v3968, 5
      %v3971 = vsel %vm458, %v3966, %v3970
      %v3973 = vshrl.u32 %v3770, 16
      %v3975 = vrot.slane %v3973, 4
      %v3976 = vshll.u32 %v3770, 16
      %v3978 = vrot.slane %v3976, 5
      %v3979 = vor.u32 %v3975, %v3978
      %v3980 = vrot.slane %v3979, 4
      %v3982 = vshll.u32 %v3771, 16
      %v3984 = vrot.slane %v3982, 5
      %v3985 = vsel %vm458, %v3980, %v3984
      %v3986 = vshrl.u32 %v3771, 16
      %v3988 = vrot.slane %v3986, 4
      %v3989 = vor.u32 %v3988, %v3984
      %v3990 = vrot.slane %v3989, 4
      %v3992 = vshll.u32 %v3795, 16
      %v3994 = vrot.slane %v3992, 5
      %v3995 = vsel %vm458, %v3990, %v3994
      %v3997 = vshrl.u32 %v3772, 16
      %v3999 = vrot.slane %v3997, 4
      %v4000 = vshll.u32 %v3772, 16
      %v4002 = vrot.slane %v4000, 5
      %v4003 = vor.u32 %v3999, %v4002
      %v4004 = vrot.slane %v4003, 4
      %v4006 = vshll.u32 %v3773, 16
      %v4008 = vrot.slane %v4006, 5
      %v4009 = vsel %vm458, %v4004, %v4008
      %v4010 = vshrl.u32 %v3773, 16
      %v4012 = vrot.slane %v4010, 4
      %v4013 = vor.u32 %v4012, %v4008
      %v4014 = vrot.slane %v4013, 4
      %v4016 = vshll.u32 %v3796, 16
      %v4018 = vrot.slane %v4016, 5
      %v4019 = vsel %vm458, %v4014, %v4018
      %v4021 = vshrl.u32 %v3774, 16
      %v4023 = vrot.slane %v4021, 4
      %v4024 = vshll.u32 %v3774, 16
      %v4026 = vrot.slane %v4024, 5
      %v4027 = vor.u32 %v4023, %v4026
      %v4028 = vrot.slane %v4027, 4
      %v4030 = vshll.u32 %v3775, 16
      %v4032 = vrot.slane %v4030, 5
      %v4033 = vsel %vm458, %v4028, %v4032
      %v4034 = vshrl.u32 %v3775, 16
      %v4036 = vrot.slane %v4034, 4
      %v4037 = vor.u32 %v4036, %v4032
      %v4038 = vrot.slane %v4037, 4
      %v4040 = vshll.u32 %v3797, 16
      %v4042 = vrot.slane %v4040, 5
      %v4043 = vsel %vm458, %v4038, %v4042
      %v4045 = vshrl.u32 %v3776, 16
      %v4047 = vrot.slane %v4045, 4
      %v4048 = vshll.u32 %v3776, 16
      %v4050 = vrot.slane %v4048, 5
      %v4051 = vor.u32 %v4047, %v4050
      %v4052 = vrot.slane %v4051, 4
      %v4054 = vshll.u32 %v3777, 16
      %v4056 = vrot.slane %v4054, 5
      %v4057 = vsel %vm458, %v4052, %v4056
      %v4058 = vshrl.u32 %v3777, 16
      %v4060 = vrot.slane %v4058, 4
      %v4061 = vor.u32 %v4060, %v4056
      %v4062 = vrot.slane %v4061, 4
      %v4064 = vshll.u32 %v3798, 16
      %v4066 = vrot.slane %v4064, 5
      %v4067 = vsel %vm458, %v4062, %v4066
      %v4069 = vshrl.u32 %v3778, 16
      %v4071 = vrot.slane %v4069, 4
      %v4072 = vshll.u32 %v3778, 16
      %v4074 = vrot.slane %v4072, 5
      %v4075 = vor.u32 %v4071, %v4074
      %v4076 = vrot.slane %v4075, 4
      %v4078 = vshll.u32 %v3779, 16
      %v4080 = vrot.slane %v4078, 5
      %v4081 = vsel %vm458, %v4076, %v4080
      %v4082 = vshrl.u32 %v3779, 16
      %v4084 = vrot.slane %v4082, 4
      %v4085 = vor.u32 %v4084, %v4080
      %v4086 = vrot.slane %v4085, 4
      %v4088 = vshll.u32 %v3799, 16
      %v4090 = vrot.slane %v4088, 5
      %v4091 = vsel %vm458, %v4086, %v4090
      %v4093 = vshrl.u32 %v3780, 16
      %v4095 = vrot.slane %v4093, 4
      %v4096 = vshll.u32 %v3780, 16
      %v4098 = vrot.slane %v4096, 5
      %v4099 = vor.u32 %v4095, %v4098
      %v4100 = vrot.slane %v4099, 4
      %v4102 = vshll.u32 %v3781, 16
      %v4104 = vrot.slane %v4102, 5
      %v4105 = vsel %vm458, %v4100, %v4104
      %v4106 = vshrl.u32 %v3781, 16
      %v4108 = vrot.slane %v4106, 4
      %v4109 = vor.u32 %v4108, %v4104
      %v4110 = vrot.slane %v4109, 4
      %v4112 = vshll.u32 %v3800, 16
      %v4114 = vrot.slane %v4112, 5
      %v4115 = vsel %vm458, %v4110, %v4114
      %v4117 = vshrl.u32 %v3782, 16
      %v4119 = vrot.slane %v4117, 4
      %v4120 = vshll.u32 %v3782, 16
      %v4122 = vrot.slane %v4120, 5
      %v4123 = vor.u32 %v4119, %v4122
      %v4124 = vrot.slane %v4123, 4
      %v4126 = vshll.u32 %v3783, 16
      %v4128 = vrot.slane %v4126, 5
      %v4129 = vsel %vm458, %v4124, %v4128
      %v4130 = vshrl.u32 %v3783, 16
      %v4132 = vrot.slane %v4130, 4
      %v4133 = vor.u32 %v4132, %v4128
      %v4134 = vrot.slane %v4133, 4
      %v4136 = vshll.u32 %v3801, 16
      %v4138 = vrot.slane %v4136, 5
      %v4139 = vsel %vm458, %v4134, %v4138
      %v4141 = vshrl.u32 %v3784, 16
      %v4143 = vrot.slane %v4141, 4
      %v4144 = vshll.u32 %v3784, 16
      %v4146 = vrot.slane %v4144, 5
      %v4147 = vor.u32 %v4143, %v4146
      %v4148 = vrot.slane %v4147, 4
      %v4150 = vshll.u32 %v3785, 16
      %v4152 = vrot.slane %v4150, 5
      %v4153 = vsel %vm458, %v4148, %v4152
      %v4154 = vshrl.u32 %v3785, 16
      %v4156 = vrot.slane %v4154, 4
      %v4157 = vor.u32 %v4156, %v4152
      %v4158 = vrot.slane %v4157, 4
      %v4160 = vshll.u32 %v3802, 16
      %v4162 = vrot.slane %v4160, 5
      %v4163 = vsel %vm458, %v4158, %v4162
      %v4165 = vshrl.u32 %v3786, 16
      %v4167 = vrot.slane %v4165, 4
      %v4168 = vshll.u32 %v3786, 16
      %v4170 = vrot.slane %v4168, 5
      %v4171 = vor.u32 %v4167, %v4170
      %v4172 = vrot.slane %v4171, 4
      %v4174 = vshll.u32 %v3787, 16
      %v4176 = vrot.slane %v4174, 5
      %v4177 = vsel %vm458, %v4172, %v4176
      %v4178 = vshrl.u32 %v3787, 16
      %v4180 = vrot.slane %v4178, 4
      %v4181 = vor.u32 %v4180, %v4176
      %v4182 = vrot.slane %v4181, 4
      %v4184 = vshll.u32 %v3803, 16
      %v4186 = vrot.slane %v4184, 5
      %v4187 = vsel %vm458, %v4182, %v4186
      %v4188 = vld [vmem:[%s3755] sm:$0xe]
      %v4189 = vld [vmem:[%s3755 + $0xc] sm:$0xe]
      %v4190 = vld [vmem:[%s3755 + $0x18] sm:$0xe]
      %v4191 = vld [vmem:[%s3755 + $0x24] sm:$0xe]
      %v4192 = vld [vmem:[%s3755 + $0x30] sm:$0xe]
      %v4193 = vld [vmem:[%s3755 + $0x3c] sm:$0xe]
      %v4194 = vld [vmem:[%s3755 + $0x48] sm:$0xe]
      %v4195 = vld [vmem:[%s3755 + $0x54] sm:$0xe]
      %v4196 = vld [vmem:[%s3755 + $0x60] sm:$0xe]
      %v4197 = vld [vmem:[%s3755 + $0x6c] sm:$0xe]
      %v4198 = vld [vmem:[%s3755 + $0x78] sm:$0xe]
      %v4199 = vld [vmem:[%s3755 + $0x84] sm:$0xe]
      %v4200 = vld [vmem:[%s3755 + $0x90] sm:$0xe]
      %v4201 = vld [vmem:[%s3755 + $0x9c] sm:$0xe]
      %v4202 = vld [vmem:[%s3755 + $0xa8] sm:$0xe]
      %v4203 = vld [vmem:[%s3755 + $0xb4] sm:$0xe]
      %v4252 = vrot.slane %v4188, 5
      %v4253 = vrot.slane %v4252, 4
      %v4254 = vrot.slane %v3757, 5
      %v4255 = vsel %vm893, %v4253, %v4254
      %v4256 = vrot.slane %v4254, 4
      %v4257 = vrot.slane %v3788, 5
      %v4258 = vsel %vm893, %v4256, %v4257
      %v4259 = vrot.slane %v4189, 5
      %v4260 = vrot.slane %v4259, 4
      %v4261 = vrot.slane %v3759, 5
      %v4262 = vsel %vm893, %v4260, %v4261
      %v4263 = vrot.slane %v4261, 4
      %v4264 = vrot.slane %v3789, 5
      %v4265 = vsel %vm893, %v4263, %v4264
      %v4266 = vrot.slane %v4190, 5
      %v4267 = vrot.slane %v4266, 4
      %v4268 = vrot.slane %v3761, 5
      %v4269 = vsel %vm893, %v4267, %v4268
      %v4270 = vrot.slane %v4268, 4
      %v4271 = vrot.slane %v3790, 5
      %v4272 = vsel %vm893, %v4270, %v4271
      %v4273 = vrot.slane %v4191, 5
      %v4274 = vrot.slane %v4273, 4
      %v4275 = vrot.slane %v3763, 5
      %v4276 = vsel %vm893, %v4274, %v4275
      %v4277 = vrot.slane %v4275, 4
      %v4278 = vrot.slane %v3791, 5
      %v4279 = vsel %vm893, %v4277, %v4278
      %v4280 = vrot.slane %v4192, 5
      %v4281 = vrot.slane %v4280, 4
      %v4282 = vrot.slane %v3765, 5
      %v4283 = vsel %vm893, %v4281, %v4282
      %v4284 = vrot.slane %v4282, 4
      %v4285 = vrot.slane %v3792, 5
      %v4286 = vsel %vm893, %v4284, %v4285
      %v4287 = vrot.slane %v4193, 5
      %v4288 = vrot.slane %v4287, 4
      %v4289 = vrot.slane %v3767, 5
      %v4290 = vsel %vm893, %v4288, %v4289
      %v4291 = vrot.slane %v4289, 4
      %v4292 = vrot.slane %v3793, 5
      %v4293 = vsel %vm893, %v4291, %v4292
      %v4294 = vrot.slane %v4194, 5
      %v4295 = vrot.slane %v4294, 4
      %v4296 = vrot.slane %v3769, 5
      %v4297 = vsel %vm893, %v4295, %v4296
      %v4298 = vrot.slane %v4296, 4
      %v4299 = vrot.slane %v3794, 5
      %v4300 = vsel %vm893, %v4298, %v4299
      %v4301 = vrot.slane %v4195, 5
      %v4302 = vrot.slane %v4301, 4
      %v4303 = vrot.slane %v3771, 5
      %v4304 = vsel %vm893, %v4302, %v4303
      %v4305 = vrot.slane %v4303, 4
      %v4306 = vrot.slane %v3795, 5
      %v4307 = vsel %vm893, %v4305, %v4306
      %v4308 = vrot.slane %v4196, 5
      %v4309 = vrot.slane %v4308, 4
      %v4310 = vrot.slane %v3773, 5
      %v4311 = vsel %vm893, %v4309, %v4310
      %v4312 = vrot.slane %v4310, 4
      %v4313 = vrot.slane %v3796, 5
      %v4314 = vsel %vm893, %v4312, %v4313
      %v4315 = vrot.slane %v4197, 5
      %v4316 = vrot.slane %v4315, 4
      %v4317 = vrot.slane %v3775, 5
      %v4318 = vsel %vm893, %v4316, %v4317
      %v4319 = vrot.slane %v4317, 4
      %v4320 = vrot.slane %v3797, 5
      %v4321 = vsel %vm893, %v4319, %v4320
      %v4322 = vrot.slane %v4198, 5
      %v4323 = vrot.slane %v4322, 4
      %v4324 = vrot.slane %v3777, 5
      %v4325 = vsel %vm893, %v4323, %v4324
      %v4326 = vrot.slane %v4324, 4
      %v4327 = vrot.slane %v3798, 5
      %v4328 = vsel %vm893, %v4326, %v4327
      %v4329 = vrot.slane %v4199, 5
      %v4330 = vrot.slane %v4329, 4
      %v4331 = vrot.slane %v3779, 5
      %v4332 = vsel %vm893, %v4330, %v4331
      %v4333 = vrot.slane %v4331, 4
      %v4334 = vrot.slane %v3799, 5
      %v4335 = vsel %vm893, %v4333, %v4334
      %v4336 = vrot.slane %v4200, 5
      %v4337 = vrot.slane %v4336, 4
      %v4338 = vrot.slane %v3781, 5
      %v4339 = vsel %vm893, %v4337, %v4338
      %v4340 = vrot.slane %v4338, 4
      %v4341 = vrot.slane %v3800, 5
      %v4342 = vsel %vm893, %v4340, %v4341
      %v4343 = vrot.slane %v4201, 5
      %v4344 = vrot.slane %v4343, 4
      %v4345 = vrot.slane %v3783, 5
      %v4346 = vsel %vm893, %v4344, %v4345
      %v4347 = vrot.slane %v4345, 4
      %v4348 = vrot.slane %v3801, 5
      %v4349 = vsel %vm893, %v4347, %v4348
      %v4350 = vrot.slane %v4202, 5
      %v4351 = vrot.slane %v4350, 4
      %v4352 = vrot.slane %v3785, 5
      %v4353 = vsel %vm893, %v4351, %v4352
      %v4354 = vrot.slane %v4352, 4
      %v4355 = vrot.slane %v3802, 5
      %v4356 = vsel %vm893, %v4354, %v4355
      %v4357 = vrot.slane %v4203, 5
      %v4358 = vrot.slane %v4357, 4
      %v4359 = vrot.slane %v3787, 5
      %v4360 = vsel %vm893, %v4358, %v4359
      %v4361 = vrot.slane %v4359, 4
      %v4362 = vrot.slane %v3803, 5
      %v4363 = vsel %vm893, %v4361, %v4362
      %v4380 = vunpack.c.l.b16 %v2539
      %v4381 = vunpack.c.l.b16 %v2540
      %v4382 = vunpack.c.l.b16 %v2541
      %v4383 = vunpack.c.l.b16 %v2542
      %v4384 = vunpack.c.l.b16 %v2543
      %v4385 = vunpack.c.l.b16 %v2544
      %v4386 = vunpack.c.l.b16 %v2545
      %v4387 = vunpack.c.l.b16 %v2546
      %v4388 = vunpack.c.l.b16 %v2547
      %v4389 = vunpack.c.l.b16 %v2548
      %v4390 = vunpack.c.l.b16 %v2549
      %v4391 = vunpack.c.l.b16 %v2550
      %v4392 = vunpack.c.l.b16 %v2551
      %v4393 = vunpack.c.l.b16 %v2552
      %v4394 = vunpack.c.l.b16 %v2553
      %v4395 = vunpack.c.l.b16 %v2554
      %v4396 = vunpack.c.l.b16 %v2555
      %v4397 = vunpack.c.l.b16 %v2556
      %v4398 = vunpack.c.l.b16 %v2557
      %v4399 = vunpack.c.l.b16 %v2558
      %v4400 = vunpack.c.l.b16 %v2559
      %v4401 = vunpack.c.l.b16 %v2560
      %v4402 = vunpack.c.l.b16 %v2561
      %v4403 = vunpack.c.l.b16 %v2562
      %v4404 = vunpack.c.l.b16 %v2563
      %v4405 = vunpack.c.l.b16 %v2564
      %v4406 = vunpack.c.l.b16 %v2565
      %v4407 = vunpack.c.l.b16 %v2566
      %v4408 = vunpack.c.l.b16 %v2567
      %v4409 = vunpack.c.l.b16 %v2568
      %v4410 = vunpack.c.l.b16 %v2569
      %v4411 = vunpack.c.l.b16 %v2570
      %v4412 = vpack.c.b16 %v4381, %v4380
      %v4413 = vpack.c.b16 %v4383, %v4382
      %v4414 = vpack.c.b16 %v4385, %v4384
      %v4415 = vpack.c.b16 %v4387, %v4386
      %v4416 = vpack.c.b16 %v4389, %v4388
      %v4417 = vpack.c.b16 %v4391, %v4390
      %v4418 = vpack.c.b16 %v4393, %v4392
      %v4419 = vpack.c.b16 %v4395, %v4394
      %v4420 = vpack.c.b16 %v4397, %v4396
      %v4421 = vpack.c.b16 %v4399, %v4398
      %v4422 = vpack.c.b16 %v4401, %v4400
      %v4423 = vpack.c.b16 %v4403, %v4402
      %v4424 = vpack.c.b16 %v4405, %v4404
      %v4425 = vpack.c.b16 %v4407, %v4406
      %v4426 = vpack.c.b16 %v4409, %v4408
      %v4427 = vpack.c.b16 %v4411, %v4410
      %v4428 = vunpack.c.l.b16 %v2600
      %v4429 = vunpack.c.l.b16 %v2610
      %v4430 = vunpack.c.l.b16 %v2624
      %v4431 = vunpack.c.l.b16 %v2634
      %v4432 = vunpack.c.l.b16 %v2648
      %v4433 = vunpack.c.l.b16 %v2658
      %v4434 = vunpack.c.l.b16 %v2672
      %v4435 = vunpack.c.l.b16 %v2682
      %v4436 = vunpack.c.l.b16 %v2696
      %v4437 = vunpack.c.l.b16 %v2706
      %v4438 = vunpack.c.l.b16 %v2720
      %v4439 = vunpack.c.l.b16 %v2730
      %v4440 = vunpack.c.l.b16 %v2744
      %v4441 = vunpack.c.l.b16 %v2754
      %v4442 = vunpack.c.l.b16 %v2768
      %v4443 = vunpack.c.l.b16 %v2778
      %v4444 = vunpack.c.l.b16 %v2792
      %v4445 = vunpack.c.l.b16 %v2802
      %v4446 = vunpack.c.l.b16 %v2816
      %v4447 = vunpack.c.l.b16 %v2826
      %v4448 = vunpack.c.l.b16 %v2840
      %v4449 = vunpack.c.l.b16 %v2850
      %v4450 = vunpack.c.l.b16 %v2864
      %v4451 = vunpack.c.l.b16 %v2874
      %v4452 = vunpack.c.l.b16 %v2888
      %v4453 = vunpack.c.l.b16 %v2898
      %v4454 = vunpack.c.l.b16 %v2912
      %v4455 = vunpack.c.l.b16 %v2922
      %v4456 = vunpack.c.l.b16 %v2936
      %v4457 = vunpack.c.l.b16 %v2946
      %v4458 = vunpack.c.l.b16 %v2960
      %v4459 = vunpack.c.l.b16 %v2970
      %v4460 = vpack.c.b16 %v4429, %v4428
      %v4461 = vpack.c.b16 %v4431, %v4430
      %v4462 = vpack.c.b16 %v4433, %v4432
      %v4463 = vpack.c.b16 %v4435, %v4434
      %v4464 = vpack.c.b16 %v4437, %v4436
      %v4465 = vpack.c.b16 %v4439, %v4438
      %v4466 = vpack.c.b16 %v4441, %v4440
      %v4467 = vpack.c.b16 %v4443, %v4442
      %v4468 = vpack.c.b16 %v4445, %v4444
      %v4469 = vpack.c.b16 %v4447, %v4446
      %v4470 = vpack.c.b16 %v4449, %v4448
      %v4471 = vpack.c.b16 %v4451, %v4450
      %v4472 = vpack.c.b16 %v4453, %v4452
      %v4473 = vpack.c.b16 %v4455, %v4454
      %v4474 = vpack.c.b16 %v4457, %v4456
      %v4475 = vpack.c.b16 %v4459, %v4458
      %4476 = vrot.lane.b32.xlu0 %v4460, 8
      %v4477 = vpop.permute.xlu0 %4476
      %4478 = vrot.lane.b32.xlu0 %v4461, 8
      %v4479 = vpop.permute.xlu0 %4478
      %4480 = vrot.lane.b32.xlu0 %v4462, 8
      %v4481 = vpop.permute.xlu0 %4480
      %4482 = vrot.lane.b32.xlu0 %v4463, 8
      %v4483 = vpop.permute.xlu0 %4482
      %4484 = vrot.lane.b32.xlu0 %v4464, 8
      %v4485 = vpop.permute.xlu0 %4484
      %4486 = vrot.lane.b32.xlu0 %v4465, 8
      %v4487 = vpop.permute.xlu0 %4486
      %4488 = vrot.lane.b32.xlu0 %v4466, 8
      %v4489 = vpop.permute.xlu0 %4488
      %4490 = vrot.lane.b32.xlu0 %v4467, 8
      %v4491 = vpop.permute.xlu0 %4490
      %4492 = vrot.lane.b32.xlu0 %v4468, 8
      %v4493 = vpop.permute.xlu0 %4492
      %4494 = vrot.lane.b32.xlu0 %v4469, 8
      %v4495 = vpop.permute.xlu0 %4494
      %4496 = vrot.lane.b32.xlu0 %v4470, 8
      %v4497 = vpop.permute.xlu0 %4496
      %4498 = vrot.lane.b32.xlu0 %v4471, 8
      %v4499 = vpop.permute.xlu0 %4498
      %4500 = vrot.lane.b32.xlu0 %v4472, 8
      %v4501 = vpop.permute.xlu0 %4500
      %4502 = vrot.lane.b32.xlu0 %v4473, 8
      %v4503 = vpop.permute.xlu0 %4502
      %4504 = vrot.lane.b32.xlu0 %v4474, 8
      %v4505 = vpop.permute.xlu0 %4504
      %4506 = vrot.lane.b32.xlu0 %v4475, 8
      %v4507 = vpop.permute.xlu0 %4506
      %v4508 = vunpack.c.l.b16 %v3038
      %v4509 = vunpack.c.l.b16 %v3041
      %v4510 = vunpack.c.l.b16 %v3045
      %v4511 = vunpack.c.l.b16 %v3048
      %v4512 = vunpack.c.l.b16 %v3052
      %v4513 = vunpack.c.l.b16 %v3055
      %v4514 = vunpack.c.l.b16 %v3059
      %v4515 = vunpack.c.l.b16 %v3062
      %v4516 = vunpack.c.l.b16 %v3066
      %v4517 = vunpack.c.l.b16 %v3069
      %v4518 = vunpack.c.l.b16 %v3073
      %v4519 = vunpack.c.l.b16 %v3076
      %v4520 = vunpack.c.l.b16 %v3080
      %v4521 = vunpack.c.l.b16 %v3083
      %v4522 = vunpack.c.l.b16 %v3087
      %v4523 = vunpack.c.l.b16 %v3090
      %v4524 = vunpack.c.l.b16 %v3094
      %v4525 = vunpack.c.l.b16 %v3097
      %v4526 = vunpack.c.l.b16 %v3101
      %v4527 = vunpack.c.l.b16 %v3104
      %v4528 = vunpack.c.l.b16 %v3108
      %v4529 = vunpack.c.l.b16 %v3111
      %v4530 = vunpack.c.l.b16 %v3115
      %v4531 = vunpack.c.l.b16 %v3118
      %v4532 = vunpack.c.l.b16 %v3122
      %v4533 = vunpack.c.l.b16 %v3125
      %v4534 = vunpack.c.l.b16 %v3129
      %v4535 = vunpack.c.l.b16 %v3132
      %v4536 = vunpack.c.l.b16 %v3136
      %v4537 = vunpack.c.l.b16 %v3139
      %v4538 = vunpack.c.l.b16 %v3143
      %v4539 = vunpack.c.l.b16 %v3146
      %v4540 = vpack.c.b16 %v4509, %v4508
      %v4541 = vpack.c.b16 %v4511, %v4510
      %v4542 = vpack.c.b16 %v4513, %v4512
      %v4543 = vpack.c.b16 %v4515, %v4514
      %v4544 = vpack.c.b16 %v4517, %v4516
      %v4545 = vpack.c.b16 %v4519, %v4518
      %v4546 = vpack.c.b16 %v4521, %v4520
      %v4547 = vpack.c.b16 %v4523, %v4522
      %v4548 = vpack.c.b16 %v4525, %v4524
      %v4549 = vpack.c.b16 %v4527, %v4526
      %v4550 = vpack.c.b16 %v4529, %v4528
      %v4551 = vpack.c.b16 %v4531, %v4530
      %v4552 = vpack.c.b16 %v4533, %v4532
      %v4553 = vpack.c.b16 %v4535, %v4534
      %v4554 = vpack.c.b16 %v4537, %v4536
      %v4555 = vpack.c.b16 %v4539, %v4538
      %4556 = vrot.lane.b32.xlu0 %v4540, 16
      %v4557 = vpop.permute.xlu0 %4556
      %4558 = vrot.lane.b32.xlu0 %v4541, 16
      %v4559 = vpop.permute.xlu0 %4558
      %4560 = vrot.lane.b32.xlu0 %v4542, 16
      %v4561 = vpop.permute.xlu0 %4560
      %4562 = vrot.lane.b32.xlu0 %v4543, 16
      %v4563 = vpop.permute.xlu0 %4562
      %4564 = vrot.lane.b32.xlu0 %v4544, 16
      %v4565 = vpop.permute.xlu0 %4564
      %4566 = vrot.lane.b32.xlu0 %v4545, 16
      %v4567 = vpop.permute.xlu0 %4566
      %4568 = vrot.lane.b32.xlu0 %v4546, 16
      %v4569 = vpop.permute.xlu0 %4568
      %4570 = vrot.lane.b32.xlu0 %v4547, 16
      %v4571 = vpop.permute.xlu0 %4570
      %4572 = vrot.lane.b32.xlu0 %v4548, 16
      %v4573 = vpop.permute.xlu0 %4572
      %4574 = vrot.lane.b32.xlu0 %v4549, 16
      %v4575 = vpop.permute.xlu0 %4574
      %4576 = vrot.lane.b32.xlu0 %v4550, 16
      %v4577 = vpop.permute.xlu0 %4576
      %4578 = vrot.lane.b32.xlu0 %v4551, 16
      %v4579 = vpop.permute.xlu0 %4578
      %4580 = vrot.lane.b32.xlu0 %v4552, 16
      %v4581 = vpop.permute.xlu0 %4580
      %4582 = vrot.lane.b32.xlu0 %v4553, 16
      %v4583 = vpop.permute.xlu0 %4582
      %4584 = vrot.lane.b32.xlu0 %v4554, 16
      %v4585 = vpop.permute.xlu0 %4584
      %4586 = vrot.lane.b32.xlu0 %v4555, 16
      %v4587 = vpop.permute.xlu0 %4586
      %v4604 = vunpack.c.l.b16 %v3147
      %v4605 = vunpack.c.l.b16 %v3148
      %v4606 = vunpack.c.l.b16 %v3149
      %v4607 = vunpack.c.l.b16 %v3150
      %v4608 = vunpack.c.l.b16 %v3151
      %v4609 = vunpack.c.l.b16 %v3152
      %v4610 = vunpack.c.l.b16 %v3153
      %v4611 = vunpack.c.l.b16 %v3154
      %v4612 = vunpack.c.l.b16 %v3155
      %v4613 = vunpack.c.l.b16 %v3156
      %v4614 = vunpack.c.l.b16 %v3157
      %v4615 = vunpack.c.l.b16 %v3158
      %v4616 = vunpack.c.l.b16 %v3159
      %v4617 = vunpack.c.l.b16 %v3160
      %v4618 = vunpack.c.l.b16 %v3161
      %v4619 = vunpack.c.l.b16 %v3162
      %v4620 = vunpack.c.l.b16 %v3163
      %v4621 = vunpack.c.l.b16 %v3164
      %v4622 = vunpack.c.l.b16 %v3165
      %v4623 = vunpack.c.l.b16 %v3166
      %v4624 = vunpack.c.l.b16 %v3167
      %v4625 = vunpack.c.l.b16 %v3168
      %v4626 = vunpack.c.l.b16 %v3169
      %v4627 = vunpack.c.l.b16 %v3170
      %v4628 = vunpack.c.l.b16 %v3171
      %v4629 = vunpack.c.l.b16 %v3172
      %v4630 = vunpack.c.l.b16 %v3173
      %v4631 = vunpack.c.l.b16 %v3174
      %v4632 = vunpack.c.l.b16 %v3175
      %v4633 = vunpack.c.l.b16 %v3176
      %v4634 = vunpack.c.l.b16 %v3177
      %v4635 = vunpack.c.l.b16 %v3178
      %v4636 = vpack.c.b16 %v4605, %v4604
      %v4637 = vpack.c.b16 %v4607, %v4606
      %v4638 = vpack.c.b16 %v4609, %v4608
      %v4639 = vpack.c.b16 %v4611, %v4610
      %v4640 = vpack.c.b16 %v4613, %v4612
      %v4641 = vpack.c.b16 %v4615, %v4614
      %v4642 = vpack.c.b16 %v4617, %v4616
      %v4643 = vpack.c.b16 %v4619, %v4618
      %v4644 = vpack.c.b16 %v4621, %v4620
      %v4645 = vpack.c.b16 %v4623, %v4622
      %v4646 = vpack.c.b16 %v4625, %v4624
      %v4647 = vpack.c.b16 %v4627, %v4626
      %v4648 = vpack.c.b16 %v4629, %v4628
      %v4649 = vpack.c.b16 %v4631, %v4630
      %v4650 = vpack.c.b16 %v4633, %v4632
      %v4651 = vpack.c.b16 %v4635, %v4634
      %4652 = vrot.lane.b32.xlu0 %v4636, 24
      %v4653 = vpop.permute.xlu0 %4652
      %4654 = vrot.lane.b32.xlu0 %v4637, 24
      %v4655 = vpop.permute.xlu0 %4654
      %4656 = vrot.lane.b32.xlu0 %v4638, 24
      %v4657 = vpop.permute.xlu0 %4656
      %4658 = vrot.lane.b32.xlu0 %v4639, 24
      %v4659 = vpop.permute.xlu0 %4658
      %4660 = vrot.lane.b32.xlu0 %v4640, 24
      %v4661 = vpop.permute.xlu0 %4660
      %4662 = vrot.lane.b32.xlu0 %v4641, 24
      %v4663 = vpop.permute.xlu0 %4662
      %4664 = vrot.lane.b32.xlu0 %v4642, 24
      %v4665 = vpop.permute.xlu0 %4664
      %4666 = vrot.lane.b32.xlu0 %v4643, 24
      %v4667 = vpop.permute.xlu0 %4666
      %4668 = vrot.lane.b32.xlu0 %v4644, 24
      %v4669 = vpop.permute.xlu0 %4668
      %4670 = vrot.lane.b32.xlu0 %v4645, 24
      %v4671 = vpop.permute.xlu0 %4670
      %4672 = vrot.lane.b32.xlu0 %v4646, 24
      %v4673 = vpop.permute.xlu0 %4672
      %4674 = vrot.lane.b32.xlu0 %v4647, 24
      %v4675 = vpop.permute.xlu0 %4674
      %4676 = vrot.lane.b32.xlu0 %v4648, 24
      %v4677 = vpop.permute.xlu0 %4676
      %4678 = vrot.lane.b32.xlu0 %v4649, 24
      %v4679 = vpop.permute.xlu0 %4678
      %4680 = vrot.lane.b32.xlu0 %v4650, 24
      %v4681 = vpop.permute.xlu0 %4680
      %4682 = vrot.lane.b32.xlu0 %v4651, 24
      %v4683 = vpop.permute.xlu0 %4682
      %v4684 = vunpack.c.l.b16 %v3208
      %v4685 = vunpack.c.l.b16 %v3218
      %v4686 = vunpack.c.l.b16 %v3232
      %v4687 = vunpack.c.l.b16 %v3242
      %v4688 = vunpack.c.l.b16 %v3256
      %v4689 = vunpack.c.l.b16 %v3266
      %v4690 = vunpack.c.l.b16 %v3280
      %v4691 = vunpack.c.l.b16 %v3290
      %v4692 = vunpack.c.l.b16 %v3304
      %v4693 = vunpack.c.l.b16 %v3314
      %v4694 = vunpack.c.l.b16 %v3328
      %v4695 = vunpack.c.l.b16 %v3338
      %v4696 = vunpack.c.l.b16 %v3352
      %v4697 = vunpack.c.l.b16 %v3362
      %v4698 = vunpack.c.l.b16 %v3376
      %v4699 = vunpack.c.l.b16 %v3386
      %v4700 = vunpack.c.l.b16 %v3400
      %v4701 = vunpack.c.l.b16 %v3410
      %v4702 = vunpack.c.l.b16 %v3424
      %v4703 = vunpack.c.l.b16 %v3434
      %v4704 = vunpack.c.l.b16 %v3448
      %v4705 = vunpack.c.l.b16 %v3458
      %v4706 = vunpack.c.l.b16 %v3472
      %v4707 = vunpack.c.l.b16 %v3482
      %v4708 = vunpack.c.l.b16 %v3496
      %v4709 = vunpack.c.l.b16 %v3506
      %v4710 = vunpack.c.l.b16 %v3520
      %v4711 = vunpack.c.l.b16 %v3530
      %v4712 = vunpack.c.l.b16 %v3544
      %v4713 = vunpack.c.l.b16 %v3554
      %v4714 = vunpack.c.l.b16 %v3568
      %v4715 = vunpack.c.l.b16 %v3578
      %v4716 = vpack.c.b16 %v4685, %v4684
      %v4717 = vpack.c.b16 %v4687, %v4686
      %v4718 = vpack.c.b16 %v4689, %v4688
      %v4719 = vpack.c.b16 %v4691, %v4690
      %v4720 = vpack.c.b16 %v4693, %v4692
      %v4721 = vpack.c.b16 %v4695, %v4694
      %v4722 = vpack.c.b16 %v4697, %v4696
      %v4723 = vpack.c.b16 %v4699, %v4698
      %v4724 = vpack.c.b16 %v4701, %v4700
      %v4725 = vpack.c.b16 %v4703, %v4702
      %v4726 = vpack.c.b16 %v4705, %v4704
      %v4727 = vpack.c.b16 %v4707, %v4706
      %v4728 = vpack.c.b16 %v4709, %v4708
      %v4729 = vpack.c.b16 %v4711, %v4710
      %v4730 = vpack.c.b16 %v4713, %v4712
      %v4731 = vpack.c.b16 %v4715, %v4714
      %4732 = vrot.lane.b32.xlu0 %v4716, 32
      %v4733 = vpop.permute.xlu0 %4732
      %4734 = vrot.lane.b32.xlu0 %v4717, 32
      %v4735 = vpop.permute.xlu0 %4734
      %4736 = vrot.lane.b32.xlu0 %v4718, 32
      %v4737 = vpop.permute.xlu0 %4736
      %4738 = vrot.lane.b32.xlu0 %v4719, 32
      %v4739 = vpop.permute.xlu0 %4738
      %4740 = vrot.lane.b32.xlu0 %v4720, 32
      %v4741 = vpop.permute.xlu0 %4740
      %4742 = vrot.lane.b32.xlu0 %v4721, 32
      %v4743 = vpop.permute.xlu0 %4742
      %4744 = vrot.lane.b32.xlu0 %v4722, 32
      %v4745 = vpop.permute.xlu0 %4744
      %4746 = vrot.lane.b32.xlu0 %v4723, 32
      %v4747 = vpop.permute.xlu0 %4746
      %4748 = vrot.lane.b32.xlu0 %v4724, 32
      %v4749 = vpop.permute.xlu0 %4748
      %4750 = vrot.lane.b32.xlu0 %v4725, 32
      %v4751 = vpop.permute.xlu0 %4750
      %4752 = vrot.lane.b32.xlu0 %v4726, 32
      %v4753 = vpop.permute.xlu0 %4752
      %4754 = vrot.lane.b32.xlu0 %v4727, 32
      %v4755 = vpop.permute.xlu0 %4754
      %4756 = vrot.lane.b32.xlu0 %v4728, 32
      %v4757 = vpop.permute.xlu0 %4756
      %4758 = vrot.lane.b32.xlu0 %v4729, 32
      %v4759 = vpop.permute.xlu0 %4758
      %4760 = vrot.lane.b32.xlu0 %v4730, 32
      %v4761 = vpop.permute.xlu0 %4760
      %4762 = vrot.lane.b32.xlu0 %v4731, 32
      %v4763 = vpop.permute.xlu0 %4762
      %v4764 = vunpack.c.l.b16 %v3646
      %v4765 = vunpack.c.l.b16 %v3649
      %v4766 = vunpack.c.l.b16 %v3653
      %v4767 = vunpack.c.l.b16 %v3656
      %v4768 = vunpack.c.l.b16 %v3660
      %v4769 = vunpack.c.l.b16 %v3663
      %v4770 = vunpack.c.l.b16 %v3667
      %v4771 = vunpack.c.l.b16 %v3670
      %v4772 = vunpack.c.l.b16 %v3674
      %v4773 = vunpack.c.l.b16 %v3677
      %v4774 = vunpack.c.l.b16 %v3681
      %v4775 = vunpack.c.l.b16 %v3684
      %v4776 = vunpack.c.l.b16 %v3688
      %v4777 = vunpack.c.l.b16 %v3691
      %v4778 = vunpack.c.l.b16 %v3695
      %v4779 = vunpack.c.l.b16 %v3698
      %v4780 = vunpack.c.l.b16 %v3702
      %v4781 = vunpack.c.l.b16 %v3705
      %v4782 = vunpack.c.l.b16 %v3709
      %v4783 = vunpack.c.l.b16 %v3712
      %v4784 = vunpack.c.l.b16 %v3716
      %v4785 = vunpack.c.l.b16 %v3719
      %v4786 = vunpack.c.l.b16 %v3723
      %v4787 = vunpack.c.l.b16 %v3726
      %v4788 = vunpack.c.l.b16 %v3730
      %v4789 = vunpack.c.l.b16 %v3733
      %v4790 = vunpack.c.l.b16 %v3737
      %v4791 = vunpack.c.l.b16 %v3740
      %v4792 = vunpack.c.l.b16 %v3744
      %v4793 = vunpack.c.l.b16 %v3747
      %v4794 = vunpack.c.l.b16 %v3751
      %v4795 = vunpack.c.l.b16 %v3754
      %v4796 = vpack.c.b16 %v4765, %v4764
      %v4797 = vpack.c.b16 %v4767, %v4766
      %v4798 = vpack.c.b16 %v4769, %v4768
      %v4799 = vpack.c.b16 %v4771, %v4770
      %v4800 = vpack.c.b16 %v4773, %v4772
      %v4801 = vpack.c.b16 %v4775, %v4774
      %v4802 = vpack.c.b16 %v4777, %v4776
      %v4803 = vpack.c.b16 %v4779, %v4778
      %v4804 = vpack.c.b16 %v4781, %v4780
      %v4805 = vpack.c.b16 %v4783, %v4782
      %v4806 = vpack.c.b16 %v4785, %v4784
      %v4807 = vpack.c.b16 %v4787, %v4786
      %v4808 = vpack.c.b16 %v4789, %v4788
      %v4809 = vpack.c.b16 %v4791, %v4790
      %v4810 = vpack.c.b16 %v4793, %v4792
      %v4811 = vpack.c.b16 %v4795, %v4794
      %4812 = vrot.lane.b32.xlu0 %v4796, 40
      %v4813 = vpop.permute.xlu0 %4812
      %4814 = vrot.lane.b32.xlu0 %v4797, 40
      %v4815 = vpop.permute.xlu0 %4814
      %4816 = vrot.lane.b32.xlu0 %v4798, 40
      %v4817 = vpop.permute.xlu0 %4816
      %4818 = vrot.lane.b32.xlu0 %v4799, 40
      %v4819 = vpop.permute.xlu0 %4818
      %4820 = vrot.lane.b32.xlu0 %v4800, 40
      %v4821 = vpop.permute.xlu0 %4820
      %4822 = vrot.lane.b32.xlu0 %v4801, 40
      %v4823 = vpop.permute.xlu0 %4822
      %4824 = vrot.lane.b32.xlu0 %v4802, 40
      %v4825 = vpop.permute.xlu0 %4824
      %4826 = vrot.lane.b32.xlu0 %v4803, 40
      %v4827 = vpop.permute.xlu0 %4826
      %4828 = vrot.lane.b32.xlu0 %v4804, 40
      %v4829 = vpop.permute.xlu0 %4828
      %4830 = vrot.lane.b32.xlu0 %v4805, 40
      %v4831 = vpop.permute.xlu0 %4830
      %4832 = vrot.lane.b32.xlu0 %v4806, 40
      %v4833 = vpop.permute.xlu0 %4832
      %4834 = vrot.lane.b32.xlu0 %v4807, 40
      %v4835 = vpop.permute.xlu0 %4834
      %4836 = vrot.lane.b32.xlu0 %v4808, 40
      %v4837 = vpop.permute.xlu0 %4836
      %4838 = vrot.lane.b32.xlu0 %v4809, 40
      %v4839 = vpop.permute.xlu0 %4838
      %4840 = vrot.lane.b32.xlu0 %v4810, 40
      %v4841 = vpop.permute.xlu0 %4840
      %4842 = vrot.lane.b32.xlu0 %v4811, 40
      %v4843 = vpop.permute.xlu0 %4842
      %v4860 = vunpack.c.l.b16 %v3756
      %v4861 = vunpack.c.l.b16 %v3757
      %v4862 = vunpack.c.l.b16 %v3758
      %v4863 = vunpack.c.l.b16 %v3759
      %v4864 = vunpack.c.l.b16 %v3760
      %v4865 = vunpack.c.l.b16 %v3761
      %v4866 = vunpack.c.l.b16 %v3762
      %v4867 = vunpack.c.l.b16 %v3763
      %v4868 = vunpack.c.l.b16 %v3764
      %v4869 = vunpack.c.l.b16 %v3765
      %v4870 = vunpack.c.l.b16 %v3766
      %v4871 = vunpack.c.l.b16 %v3767
      %v4872 = vunpack.c.l.b16 %v3768
      %v4873 = vunpack.c.l.b16 %v3769
      %v4874 = vunpack.c.l.b16 %v3770
      %v4875 = vunpack.c.l.b16 %v3771
      %v4876 = vunpack.c.l.b16 %v3772
      %v4877 = vunpack.c.l.b16 %v3773
      %v4878 = vunpack.c.l.b16 %v3774
      %v4879 = vunpack.c.l.b16 %v3775
      %v4880 = vunpack.c.l.b16 %v3776
      %v4881 = vunpack.c.l.b16 %v3777
      %v4882 = vunpack.c.l.b16 %v3778
      %v4883 = vunpack.c.l.b16 %v3779
      %v4884 = vunpack.c.l.b16 %v3780
      %v4885 = vunpack.c.l.b16 %v3781
      %v4886 = vunpack.c.l.b16 %v3782
      %v4887 = vunpack.c.l.b16 %v3783
      %v4888 = vunpack.c.l.b16 %v3784
      %v4889 = vunpack.c.l.b16 %v3785
      %v4890 = vunpack.c.l.b16 %v3786
      %v4891 = vunpack.c.l.b16 %v3787
      %v4892 = vpack.c.b16 %v4861, %v4860
      %v4893 = vpack.c.b16 %v4863, %v4862
      %v4894 = vpack.c.b16 %v4865, %v4864
      %v4895 = vpack.c.b16 %v4867, %v4866
      %v4896 = vpack.c.b16 %v4869, %v4868
      %v4897 = vpack.c.b16 %v4871, %v4870
      %v4898 = vpack.c.b16 %v4873, %v4872
      %v4899 = vpack.c.b16 %v4875, %v4874
      %v4900 = vpack.c.b16 %v4877, %v4876
      %v4901 = vpack.c.b16 %v4879, %v4878
      %v4902 = vpack.c.b16 %v4881, %v4880
      %v4903 = vpack.c.b16 %v4883, %v4882
      %v4904 = vpack.c.b16 %v4885, %v4884
      %v4905 = vpack.c.b16 %v4887, %v4886
      %v4906 = vpack.c.b16 %v4889, %v4888
      %v4907 = vpack.c.b16 %v4891, %v4890
      %4908 = vrot.lane.b32.xlu0 %v4892, 48
      %v4909 = vpop.permute.xlu0 %4908
      %4910 = vrot.lane.b32.xlu0 %v4893, 48
      %v4911 = vpop.permute.xlu0 %4910
      %4912 = vrot.lane.b32.xlu0 %v4894, 48
      %v4913 = vpop.permute.xlu0 %4912
      %4914 = vrot.lane.b32.xlu0 %v4895, 48
      %v4915 = vpop.permute.xlu0 %4914
      %4916 = vrot.lane.b32.xlu0 %v4896, 48
      %v4917 = vpop.permute.xlu0 %4916
      %4918 = vrot.lane.b32.xlu0 %v4897, 48
      %v4919 = vpop.permute.xlu0 %4918
      %4920 = vrot.lane.b32.xlu0 %v4898, 48
      %v4921 = vpop.permute.xlu0 %4920
      %4922 = vrot.lane.b32.xlu0 %v4899, 48
      %v4923 = vpop.permute.xlu0 %4922
      %4924 = vrot.lane.b32.xlu0 %v4900, 48
      %v4925 = vpop.permute.xlu0 %4924
      %4926 = vrot.lane.b32.xlu0 %v4901, 48
      %v4927 = vpop.permute.xlu0 %4926
      %4928 = vrot.lane.b32.xlu0 %v4902, 48
      %v4929 = vpop.permute.xlu0 %4928
      %4930 = vrot.lane.b32.xlu0 %v4903, 48
      %v4931 = vpop.permute.xlu0 %4930
      %4932 = vrot.lane.b32.xlu0 %v4904, 48
      %v4933 = vpop.permute.xlu0 %4932
      %4934 = vrot.lane.b32.xlu0 %v4905, 48
      %v4935 = vpop.permute.xlu0 %4934
      %4936 = vrot.lane.b32.xlu0 %v4906, 48
      %v4937 = vpop.permute.xlu0 %4936
      %4938 = vrot.lane.b32.xlu0 %v4907, 48
      %v4939 = vpop.permute.xlu0 %4938
      %v4940 = vunpack.c.l.b16 %v3817
      %v4941 = vunpack.c.l.b16 %v3827
      %v4942 = vunpack.c.l.b16 %v3841
      %v4943 = vunpack.c.l.b16 %v3851
      %v4944 = vunpack.c.l.b16 %v3865
      %v4945 = vunpack.c.l.b16 %v3875
      %v4946 = vunpack.c.l.b16 %v3889
      %v4947 = vunpack.c.l.b16 %v3899
      %v4948 = vunpack.c.l.b16 %v3913
      %v4949 = vunpack.c.l.b16 %v3923
      %v4950 = vunpack.c.l.b16 %v3937
      %v4951 = vunpack.c.l.b16 %v3947
      %v4952 = vunpack.c.l.b16 %v3961
      %v4953 = vunpack.c.l.b16 %v3971
      %v4954 = vunpack.c.l.b16 %v3985
      %v4955 = vunpack.c.l.b16 %v3995
      %v4956 = vunpack.c.l.b16 %v4009
      %v4957 = vunpack.c.l.b16 %v4019
      %v4958 = vunpack.c.l.b16 %v4033
      %v4959 = vunpack.c.l.b16 %v4043
      %v4960 = vunpack.c.l.b16 %v4057
      %v4961 = vunpack.c.l.b16 %v4067
      %v4962 = vunpack.c.l.b16 %v4081
      %v4963 = vunpack.c.l.b16 %v4091
      %v4964 = vunpack.c.l.b16 %v4105
      %v4965 = vunpack.c.l.b16 %v4115
      %v4966 = vunpack.c.l.b16 %v4129
      %v4967 = vunpack.c.l.b16 %v4139
      %v4968 = vunpack.c.l.b16 %v4153
      %v4969 = vunpack.c.l.b16 %v4163
      %v4970 = vunpack.c.l.b16 %v4177
      %v4971 = vunpack.c.l.b16 %v4187
      %v4972 = vpack.c.b16 %v4941, %v4940
      %v4973 = vpack.c.b16 %v4943, %v4942
      %v4974 = vpack.c.b16 %v4945, %v4944
      %v4975 = vpack.c.b16 %v4947, %v4946
      %v4976 = vpack.c.b16 %v4949, %v4948
      %v4977 = vpack.c.b16 %v4951, %v4950
      %v4978 = vpack.c.b16 %v4953, %v4952
      %v4979 = vpack.c.b16 %v4955, %v4954
      %v4980 = vpack.c.b16 %v4957, %v4956
      %v4981 = vpack.c.b16 %v4959, %v4958
      %v4982 = vpack.c.b16 %v4961, %v4960
      %v4983 = vpack.c.b16 %v4963, %v4962
      %v4984 = vpack.c.b16 %v4965, %v4964
      %v4985 = vpack.c.b16 %v4967, %v4966
      %v4986 = vpack.c.b16 %v4969, %v4968
      %v4987 = vpack.c.b16 %v4971, %v4970
      %4988 = vrot.lane.b32.xlu0 %v4972, 56
      %v4989 = vpop.permute.xlu0 %4988
      %4990 = vrot.lane.b32.xlu0 %v4973, 56
      %v4991 = vpop.permute.xlu0 %4990
      %4992 = vrot.lane.b32.xlu0 %v4974, 56
      %v4993 = vpop.permute.xlu0 %4992
      %4994 = vrot.lane.b32.xlu0 %v4975, 56
      %v4995 = vpop.permute.xlu0 %4994
      %4996 = vrot.lane.b32.xlu0 %v4976, 56
      %v4997 = vpop.permute.xlu0 %4996
      %4998 = vrot.lane.b32.xlu0 %v4977, 56
      %v4999 = vpop.permute.xlu0 %4998
      %5000 = vrot.lane.b32.xlu0 %v4978, 56
      %v5001 = vpop.permute.xlu0 %5000
      %5002 = vrot.lane.b32.xlu0 %v4979, 56
      %v5003 = vpop.permute.xlu0 %5002
      %5004 = vrot.lane.b32.xlu0 %v4980, 56
      %v5005 = vpop.permute.xlu0 %5004
      %5006 = vrot.lane.b32.xlu0 %v4981, 56
      %v5007 = vpop.permute.xlu0 %5006
      %5008 = vrot.lane.b32.xlu0 %v4982, 56
      %v5009 = vpop.permute.xlu0 %5008
      %5010 = vrot.lane.b32.xlu0 %v4983, 56
      %v5011 = vpop.permute.xlu0 %5010
      %5012 = vrot.lane.b32.xlu0 %v4984, 56
      %v5013 = vpop.permute.xlu0 %5012
      %5014 = vrot.lane.b32.xlu0 %v4985, 56
      %v5015 = vpop.permute.xlu0 %5014
      %5016 = vrot.lane.b32.xlu0 %v4986, 56
      %v5017 = vpop.permute.xlu0 %5016
      %5018 = vrot.lane.b32.xlu0 %v4987, 56
      %v5019 = vpop.permute.xlu0 %5018
      %v5020 = vunpack.c.l.b16 %v4255
      %v5021 = vunpack.c.l.b16 %v4258
      %v5022 = vunpack.c.l.b16 %v4262
      %v5023 = vunpack.c.l.b16 %v4265
      %v5024 = vunpack.c.l.b16 %v4269
      %v5025 = vunpack.c.l.b16 %v4272
      %v5026 = vunpack.c.l.b16 %v4276
      %v5027 = vunpack.c.l.b16 %v4279
      %v5028 = vunpack.c.l.b16 %v4283
      %v5029 = vunpack.c.l.b16 %v4286
      %v5030 = vunpack.c.l.b16 %v4290
      %v5031 = vunpack.c.l.b16 %v4293
      %v5032 = vunpack.c.l.b16 %v4297
      %v5033 = vunpack.c.l.b16 %v4300
      %v5034 = vunpack.c.l.b16 %v4304
      %v5035 = vunpack.c.l.b16 %v4307
      %v5036 = vunpack.c.l.b16 %v4311
      %v5037 = vunpack.c.l.b16 %v4314
      %v5038 = vunpack.c.l.b16 %v4318
      %v5039 = vunpack.c.l.b16 %v4321
      %v5040 = vunpack.c.l.b16 %v4325
      %v5041 = vunpack.c.l.b16 %v4328
      %v5042 = vunpack.c.l.b16 %v4332
      %v5043 = vunpack.c.l.b16 %v4335
      %v5044 = vunpack.c.l.b16 %v4339
      %v5045 = vunpack.c.l.b16 %v4342
      %v5046 = vunpack.c.l.b16 %v4346
      %v5047 = vunpack.c.l.b16 %v4349
      %v5048 = vunpack.c.l.b16 %v4353
      %v5049 = vunpack.c.l.b16 %v4356
      %v5050 = vunpack.c.l.b16 %v4360
      %v5051 = vunpack.c.l.b16 %v4363
      %v5052 = vpack.c.b16 %v5021, %v5020
      %v5053 = vpack.c.b16 %v5023, %v5022
      %v5054 = vpack.c.b16 %v5025, %v5024
      %v5055 = vpack.c.b16 %v5027, %v5026
      %v5056 = vpack.c.b16 %v5029, %v5028
      %v5057 = vpack.c.b16 %v5031, %v5030
      %v5058 = vpack.c.b16 %v5033, %v5032
      %v5059 = vpack.c.b16 %v5035, %v5034
      %v5060 = vpack.c.b16 %v5037, %v5036
      %v5061 = vpack.c.b16 %v5039, %v5038
      %v5062 = vpack.c.b16 %v5041, %v5040
      %v5063 = vpack.c.b16 %v5043, %v5042
      %v5064 = vpack.c.b16 %v5045, %v5044
      %v5065 = vpack.c.b16 %v5047, %v5046
      %v5066 = vpack.c.b16 %v5049, %v5048
      %v5067 = vpack.c.b16 %v5051, %v5050
      %5068 = vrot.lane.b32.xlu0 %v5052, 64
      %v5069 = vpop.permute.xlu0 %5068
      %5070 = vrot.lane.b32.xlu0 %v5053, 64
      %v5071 = vpop.permute.xlu0 %5070
      %5072 = vrot.lane.b32.xlu0 %v5054, 64
      %v5073 = vpop.permute.xlu0 %5072
      %5074 = vrot.lane.b32.xlu0 %v5055, 64
      %v5075 = vpop.permute.xlu0 %5074
      %5076 = vrot.lane.b32.xlu0 %v5056, 64
      %v5077 = vpop.permute.xlu0 %5076
      %5078 = vrot.lane.b32.xlu0 %v5057, 64
      %v5079 = vpop.permute.xlu0 %5078
      %5080 = vrot.lane.b32.xlu0 %v5058, 64
      %v5081 = vpop.permute.xlu0 %5080
      %5082 = vrot.lane.b32.xlu0 %v5059, 64
      %v5083 = vpop.permute.xlu0 %5082
      %5084 = vrot.lane.b32.xlu0 %v5060, 64
      %v5085 = vpop.permute.xlu0 %5084
      %5086 = vrot.lane.b32.xlu0 %v5061, 64
      %v5087 = vpop.permute.xlu0 %5086
      %5088 = vrot.lane.b32.xlu0 %v5062, 64
      %v5089 = vpop.permute.xlu0 %5088
      %5090 = vrot.lane.b32.xlu0 %v5063, 64
      %v5091 = vpop.permute.xlu0 %5090
      %5092 = vrot.lane.b32.xlu0 %v5064, 64
      %v5093 = vpop.permute.xlu0 %5092
      %5094 = vrot.lane.b32.xlu0 %v5065, 64
      %v5095 = vpop.permute.xlu0 %5094
      %5096 = vrot.lane.b32.xlu0 %v5066, 64
      %v5097 = vpop.permute.xlu0 %5096
      %5098 = vrot.lane.b32.xlu0 %v5067, 64
      %v5099 = vpop.permute.xlu0 %5098
      %v5102 = vsel %vm1524, %v4412, %v4477
      %v5105 = vsel %vm1524, %v4413, %v4479
      %v5108 = vsel %vm1524, %v4414, %v4481
      %v5111 = vsel %vm1524, %v4415, %v4483
      %v5114 = vsel %vm1524, %v4416, %v4485
      %v5117 = vsel %vm1524, %v4417, %v4487
      %v5120 = vsel %vm1524, %v4418, %v4489
      %v5123 = vsel %vm1524, %v4419, %v4491
      %v5126 = vsel %vm1524, %v4420, %v4493
      %v5129 = vsel %vm1524, %v4421, %v4495
      %v5132 = vsel %vm1524, %v4422, %v4497
      %v5135 = vsel %vm1524, %v4423, %v4499
      %v5138 = vsel %vm1524, %v4424, %v4501
      %v5141 = vsel %vm1524, %v4425, %v4503
      %v5144 = vsel %vm1524, %v4426, %v4505
      %v5147 = vsel %vm1524, %v4427, %v4507
      %v5149 = vsel %vm1573, %v5102, %v4557
      %v5151 = vsel %vm1573, %v5105, %v4559
      %v5153 = vsel %vm1573, %v5108, %v4561
      %v5155 = vsel %vm1573, %v5111, %v4563
      %v5157 = vsel %vm1573, %v5114, %v4565
      %v5159 = vsel %vm1573, %v5117, %v4567
      %v5161 = vsel %vm1573, %v5120, %v4569
      %v5163 = vsel %vm1573, %v5123, %v4571
      %v5165 = vsel %vm1573, %v5126, %v4573
      %v5167 = vsel %vm1573, %v5129, %v4575
      %v5169 = vsel %vm1573, %v5132, %v4577
      %v5171 = vsel %vm1573, %v5135, %v4579
      %v5173 = vsel %vm1573, %v5138, %v4581
      %v5175 = vsel %vm1573, %v5141, %v4583
      %v5177 = vsel %vm1573, %v5144, %v4585
      %v5179 = vsel %vm1573, %v5147, %v4587
      %v5181 = vsel %vm1606, %v5149, %v4653
      %v5183 = vsel %vm1606, %v5151, %v4655
      %v5185 = vsel %vm1606, %v5153, %v4657
      %v5187 = vsel %vm1606, %v5155, %v4659
      %v5189 = vsel %vm1606, %v5157, %v4661
      %v5191 = vsel %vm1606, %v5159, %v4663
      %v5193 = vsel %vm1606, %v5161, %v4665
      %v5195 = vsel %vm1606, %v5163, %v4667
      %v5197 = vsel %vm1606, %v5165, %v4669
      %v5199 = vsel %vm1606, %v5167, %v4671
      %v5201 = vsel %vm1606, %v5169, %v4673
      %v5203 = vsel %vm1606, %v5171, %v4675
      %v5205 = vsel %vm1606, %v5173, %v4677
      %v5207 = vsel %vm1606, %v5175, %v4679
      %v5209 = vsel %vm1606, %v5177, %v4681
      %v5211 = vsel %vm1606, %v5179, %v4683
      %v5213 = vsel %vm1639, %v5181, %v4733
      %v5215 = vsel %vm1639, %v5183, %v4735
      %v5217 = vsel %vm1639, %v5185, %v4737
      %v5219 = vsel %vm1639, %v5187, %v4739
      %v5221 = vsel %vm1639, %v5189, %v4741
      %v5223 = vsel %vm1639, %v5191, %v4743
      %v5225 = vsel %vm1639, %v5193, %v4745
      %v5227 = vsel %vm1639, %v5195, %v4747
      %v5229 = vsel %vm1639, %v5197, %v4749
      %v5231 = vsel %vm1639, %v5199, %v4751
      %v5233 = vsel %vm1639, %v5201, %v4753
      %v5235 = vsel %vm1639, %v5203, %v4755
      %v5237 = vsel %vm1639, %v5205, %v4757
      %v5239 = vsel %vm1639, %v5207, %v4759
      %v5241 = vsel %vm1639, %v5209, %v4761
      %v5243 = vsel %vm1639, %v5211, %v4763
      %v5245 = vsel %vm1672, %v5213, %v4813
      %v5247 = vsel %vm1672, %v5215, %v4815
      %v5249 = vsel %vm1672, %v5217, %v4817
      %v5251 = vsel %vm1672, %v5219, %v4819
      %v5253 = vsel %vm1672, %v5221, %v4821
      %v5255 = vsel %vm1672, %v5223, %v4823
      %v5257 = vsel %vm1672, %v5225, %v4825
      %v5259 = vsel %vm1672, %v5227, %v4827
      %v5261 = vsel %vm1672, %v5229, %v4829
      %v5263 = vsel %vm1672, %v5231, %v4831
      %v5265 = vsel %vm1672, %v5233, %v4833
      %v5267 = vsel %vm1672, %v5235, %v4835
      %v5269 = vsel %vm1672, %v5237, %v4837
      %v5271 = vsel %vm1672, %v5239, %v4839
      %v5273 = vsel %vm1672, %v5241, %v4841
      %v5275 = vsel %vm1672, %v5243, %v4843
      %v5277 = vsel %vm1705, %v5245, %v4909
      %v5279 = vsel %vm1705, %v5247, %v4911
      %v5281 = vsel %vm1705, %v5249, %v4913
      %v5283 = vsel %vm1705, %v5251, %v4915
      %v5285 = vsel %vm1705, %v5253, %v4917
      %v5287 = vsel %vm1705, %v5255, %v4919
      %v5289 = vsel %vm1705, %v5257, %v4921
      %v5291 = vsel %vm1705, %v5259, %v4923
      %v5293 = vsel %vm1705, %v5261, %v4925
      %v5295 = vsel %vm1705, %v5263, %v4927
      %v5297 = vsel %vm1705, %v5265, %v4929
      %v5299 = vsel %vm1705, %v5267, %v4931
      %v5301 = vsel %vm1705, %v5269, %v4933
      %v5303 = vsel %vm1705, %v5271, %v4935
      %v5305 = vsel %vm1705, %v5273, %v4937
      %v5307 = vsel %vm1705, %v5275, %v4939
      %v5309 = vsel %vm1738, %v5277, %v4989
      %v5311 = vsel %vm1738, %v5279, %v4991
      %v5313 = vsel %vm1738, %v5281, %v4993
      %v5315 = vsel %vm1738, %v5283, %v4995
      %v5317 = vsel %vm1738, %v5285, %v4997
      %v5319 = vsel %vm1738, %v5287, %v4999
      %v5321 = vsel %vm1738, %v5289, %v5001
      %v5323 = vsel %vm1738, %v5291, %v5003
      %v5325 = vsel %vm1738, %v5293, %v5005
      %v5327 = vsel %vm1738, %v5295, %v5007
      %v5329 = vsel %vm1738, %v5297, %v5009
      %v5331 = vsel %vm1738, %v5299, %v5011
      %v5333 = vsel %vm1738, %v5301, %v5013
      %v5335 = vsel %vm1738, %v5303, %v5015
      %v5337 = vsel %vm1738, %v5305, %v5017
      %v5339 = vsel %vm1738, %v5307, %v5019
      %v5341 = vsel %vm1771, %v5309, %v5069
      %v5343 = vsel %vm1771, %v5311, %v5071
      %v5345 = vsel %vm1771, %v5313, %v5073
      %v5347 = vsel %vm1771, %v5315, %v5075
      %v5349 = vsel %vm1771, %v5317, %v5077
      %v5351 = vsel %vm1771, %v5319, %v5079
      %v5353 = vsel %vm1771, %v5321, %v5081
      %v5355 = vsel %vm1771, %v5323, %v5083
      %v5357 = vsel %vm1771, %v5325, %v5085
      %v5359 = vsel %vm1771, %v5327, %v5087
      %v5361 = vsel %vm1771, %v5329, %v5089
      %v5363 = vsel %vm1771, %v5331, %v5091
      %v5365 = vsel %vm1771, %v5333, %v5093
      %v5367 = vsel %vm1771, %v5335, %v5095
      %v5369 = vsel %vm1771, %v5337, %v5097
      %v5371 = vsel %vm1771, %v5339, %v5099
      %v5372 = vld [vmem:[%s2] sm:$0xf]
      %v5373 = vld [vmem:[%s2 + $0x4] sm:$0xf]
      %v5374 = vld [vmem:[%s2 + $0x8] sm:$0xf]
      %v5375 = vld [vmem:[%s2 + $0xc] sm:$0xf]
      %v5376 = vld [vmem:[%s2 + $0x10] sm:$0xf]
      %v5377 = vld [vmem:[%s2 + $0x14] sm:$0xf]
      %v5378 = vld [vmem:[%s2 + $0x18] sm:$0xf]
      %v5379 = vld [vmem:[%s2 + $0x1c] sm:$0xf]
      %v5380 = vld [vmem:[%s2 + $0x20] sm:$0xf]
      %v5390 = vunpack.c.l.b16 %v5372
      %v5391 = vunpack.c.l.b16 %v5373
      %v5392 = vunpack.c.l.b16 %v5374
      %v5393 = vunpack.c.l.b16 %v5375
      %v5394 = vunpack.c.l.b16 %v5376
      %v5395 = vunpack.c.l.b16 %v5377
      %v5396 = vunpack.c.l.b16 %v5378
      %v5397 = vunpack.c.l.b16 %v5379
      %v5398 = vunpack.c.l.b16 %v5380
      %v5399 = vpack.c.b16 %v5391, %v5390
      %v5400 = vpack.c.b16 %v5393, %v5392
      %v5401 = vpack.c.b16 %v5395, %v5394
      %v5402 = vpack.c.b16 %v5397, %v5396
      %v5403 = vpack.c.b16 %v5398, %v5398
      %v5408 = vsel %vm1840, %v5341, 0
      %v5410 = vsel %vm1840, %v5343, 0
      %v5412 = vsel %vm1840, %v5345, 0
      %v5414 = vsel %vm1840, %v5347, 0
      %v5416 = vsel %vm1840, %v5349, 0
      %v5418 = vsel %vm1840, %v5351, 0
      %v5420 = vsel %vm1840, %v5353, 0
      %v5422 = vsel %vm1840, %v5355, 0
      %v5424 = vsel %vm1840, %v5357, 0
      %v5426 = vsel %vm1840, %v5359, 0
      %v5428 = vsel %vm1840, %v5361, 0
      %v5430 = vsel %vm1840, %v5363, 0
      %v5432 = vsel %vm1840, %v5365, 0
      %v5434 = vsel %vm1840, %v5367, 0
      %v5436 = vsel %vm1840, %v5369, 0
      %v5438 = vsel %vm1840, %v5371, 0
      %v5441 = vsel %vm1873, %v5403, 0
      %5443 = vmatpush.bf16.msra.mxu0 0
      %5444 = vmatpush.bf16.msra.mxu0 0
      %5445 = vmatpush.bf16.msra.mxu0 0
      %5446 = vmatpush.bf16.msra.mxu0 %v5441
      %5447 = vmatpush.bf16.msra.mxu0 %v5402
      %5448 = vmatpush.bf16.msra.mxu0 %v5401
      %5449 = vmatpush.bf16.msra.mxu0 %v5400
      %5450 = vmatpush.bf16.msra.mxu0 %v5399
      %5451 = vmatmul.bf16.gmra.mxu0 %v5408
      %v5452 = vpop.f32.mrf.mxu0
      %v5453 = vadd.f32 0.0, %v5452
      %v5454 = vpop.f32.mrf.mxu0
      %v5455 = vadd.f32 0.0, %v5454
      %5456 = vmatmul.bf16.gmra.mxu0 %v5410
      %v5457 = vpop.f32.mrf.mxu0
      %v5458 = vadd.f32 0.0, %v5457
      %v5459 = vpop.f32.mrf.mxu0
      %v5460 = vadd.f32 0.0, %v5459
      %5461 = vmatmul.bf16.gmra.mxu0 %v5412
      %v5462 = vpop.f32.mrf.mxu0
      %v5463 = vadd.f32 0.0, %v5462
      %v5464 = vpop.f32.mrf.mxu0
      %v5465 = vadd.f32 0.0, %v5464
      %5466 = vmatmul.bf16.gmra.mxu0 %v5414
      %v5467 = vpop.f32.mrf.mxu0
      %v5468 = vadd.f32 0.0, %v5467
      %v5469 = vpop.f32.mrf.mxu0
      %v5470 = vadd.f32 0.0, %v5469
      %5471 = vmatmul.bf16.gmra.mxu0 %v5416
      %v5472 = vpop.f32.mrf.mxu0
      %v5473 = vadd.f32 0.0, %v5472
      %v5474 = vpop.f32.mrf.mxu0
      %v5475 = vadd.f32 0.0, %v5474
      %5476 = vmatmul.bf16.gmra.mxu0 %v5418
      %v5477 = vpop.f32.mrf.mxu0
      %v5478 = vadd.f32 0.0, %v5477
      %v5479 = vpop.f32.mrf.mxu0
      %v5480 = vadd.f32 0.0, %v5479
      %5481 = vmatmul.bf16.gmra.mxu0 %v5420
      %v5482 = vpop.f32.mrf.mxu0
      %v5483 = vadd.f32 0.0, %v5482
      %v5484 = vpop.f32.mrf.mxu0
      %v5485 = vadd.f32 0.0, %v5484
      %5486 = vmatmul.bf16.gmra.mxu0 %v5422
      %v5487 = vpop.f32.mrf.mxu0
      %v5488 = vadd.f32 0.0, %v5487
      %v5489 = vpop.f32.mrf.mxu0
      %v5490 = vadd.f32 0.0, %v5489
      %5491 = vmatmul.bf16.gmra.mxu0 %v5424
      %v5492 = vpop.f32.mrf.mxu0
      %v5493 = vadd.f32 0.0, %v5492
      %v5494 = vpop.f32.mrf.mxu0
      %v5495 = vadd.f32 0.0, %v5494
      %5496 = vmatmul.bf16.gmra.mxu0 %v5426
      %v5497 = vpop.f32.mrf.mxu0
      %v5498 = vadd.f32 0.0, %v5497
      %v5499 = vpop.f32.mrf.mxu0
      %v5500 = vadd.f32 0.0, %v5499
      %5501 = vmatmul.bf16.gmra.mxu0 %v5428
      %v5502 = vpop.f32.mrf.mxu0
      %v5503 = vadd.f32 0.0, %v5502
      %v5504 = vpop.f32.mrf.mxu0
      %v5505 = vadd.f32 0.0, %v5504
      %5506 = vmatmul.bf16.gmra.mxu0 %v5430
      %v5507 = vpop.f32.mrf.mxu0
      %v5508 = vadd.f32 0.0, %v5507
      %v5509 = vpop.f32.mrf.mxu0
      %v5510 = vadd.f32 0.0, %v5509
      %5511 = vmatmul.bf16.gmra.mxu0 %v5432
      %v5512 = vpop.f32.mrf.mxu0
      %v5513 = vadd.f32 0.0, %v5512
      %v5514 = vpop.f32.mrf.mxu0
      %v5515 = vadd.f32 0.0, %v5514
      %5516 = vmatmul.bf16.gmra.mxu0 %v5434
      %v5517 = vpop.f32.mrf.mxu0
      %v5518 = vadd.f32 0.0, %v5517
      %v5519 = vpop.f32.mrf.mxu0
      %v5520 = vadd.f32 0.0, %v5519
      %5521 = vmatmul.bf16.gmra.mxu0 %v5436
      %v5522 = vpop.f32.mrf.mxu0
      %v5523 = vadd.f32 0.0, %v5522
      %v5524 = vpop.f32.mrf.mxu0
      %v5525 = vadd.f32 0.0, %v5524
      %5526 = vmatmul.bf16.gmra.mxu0 %v5438
      %v5527 = vpop.f32.mrf.mxu0
      %v5528 = vadd.f32 0.0, %v5527
      %v5529 = vpop.f32.mrf.mxu0
      %v5530 = vadd.f32 0.0, %v5529
      %5531 = vdwg.mxu0
      %v5532 = vld [vmem:[%s5] sm:$0x1]
      %v5534 = vperm.slane %v5532, 0
      %v5536 = vmul.f32 %v5453, %v5534
      %v5537 = vmul.f32 %v5455, %v5534
      %v5538 = vmul.f32 %v5458, %v5534
      %v5539 = vmul.f32 %v5460, %v5534
      %v5540 = vmul.f32 %v5463, %v5534
      %v5541 = vmul.f32 %v5465, %v5534
      %v5542 = vmul.f32 %v5468, %v5534
      %v5543 = vmul.f32 %v5470, %v5534
      %v5544 = vmul.f32 %v5473, %v5534
      %v5545 = vmul.f32 %v5475, %v5534
      %v5546 = vmul.f32 %v5478, %v5534
      %v5547 = vmul.f32 %v5480, %v5534
      %v5548 = vmul.f32 %v5483, %v5534
      %v5549 = vmul.f32 %v5485, %v5534
      %v5550 = vmul.f32 %v5488, %v5534
      %v5551 = vmul.f32 %v5490, %v5534
      %v5552 = vmul.f32 %v5493, %v5534
      %v5553 = vmul.f32 %v5495, %v5534
      %v5554 = vmul.f32 %v5498, %v5534
      %v5555 = vmul.f32 %v5500, %v5534
      %v5556 = vmul.f32 %v5503, %v5534
      %v5557 = vmul.f32 %v5505, %v5534
      %v5558 = vmul.f32 %v5508, %v5534
      %v5559 = vmul.f32 %v5510, %v5534
      %v5560 = vmul.f32 %v5513, %v5534
      %v5561 = vmul.f32 %v5515, %v5534
      %v5562 = vmul.f32 %v5518, %v5534
      %v5563 = vmul.f32 %v5520, %v5534
      %v5564 = vmul.f32 %v5523, %v5534
      %v5565 = vmul.f32 %v5525, %v5534
      %v5566 = vmul.f32 %v5528, %v5534
      %v5567 = vmul.f32 %v5530, %v5534
      %v5568 = vld [vmem:[%s6] sm:$0x1]
      %v5570 = vperm.slane %v5568, 0
      %v5572 = vadd.f32 %v5536, %v5570
      %v5573 = vadd.f32 %v5537, %v5570
      %v5574 = vadd.f32 %v5538, %v5570
      %v5575 = vadd.f32 %v5539, %v5570
      %v5576 = vadd.f32 %v5540, %v5570
      %v5577 = vadd.f32 %v5541, %v5570
      %v5578 = vadd.f32 %v5542, %v5570
      %v5579 = vadd.f32 %v5543, %v5570
      %v5580 = vadd.f32 %v5544, %v5570
      %v5581 = vadd.f32 %v5545, %v5570
      %v5582 = vadd.f32 %v5546, %v5570
      %v5583 = vadd.f32 %v5547, %v5570
      %v5584 = vadd.f32 %v5548, %v5570
      %v5585 = vadd.f32 %v5549, %v5570
      %v5586 = vadd.f32 %v5550, %v5570
      %v5587 = vadd.f32 %v5551, %v5570
      %v5588 = vadd.f32 %v5552, %v5570
      %v5589 = vadd.f32 %v5553, %v5570
      %v5590 = vadd.f32 %v5554, %v5570
      %v5591 = vadd.f32 %v5555, %v5570
      %v5592 = vadd.f32 %v5556, %v5570
      %v5593 = vadd.f32 %v5557, %v5570
      %v5594 = vadd.f32 %v5558, %v5570
      %v5595 = vadd.f32 %v5559, %v5570
      %v5596 = vadd.f32 %v5560, %v5570
      %v5597 = vadd.f32 %v5561, %v5570
      %v5598 = vadd.f32 %v5562, %v5570
      %v5599 = vadd.f32 %v5563, %v5570
      %v5600 = vadd.f32 %v5564, %v5570
      %v5601 = vadd.f32 %v5565, %v5570
      %v5602 = vadd.f32 %v5566, %v5570
      %v5603 = vadd.f32 %v5567, %v5570
      %v5604 = vunpack.c.l.bf16 %v496
      %v5605 = vunpack.c.l.bf16 %v506
      %v5606 = vunpack.c.l.bf16 %v520
      %v5607 = vunpack.c.l.bf16 %v530
      %v5608 = vunpack.c.l.bf16 %v544
      %v5609 = vunpack.c.l.bf16 %v554
      %v5610 = vunpack.c.l.bf16 %v568
      %v5611 = vunpack.c.l.bf16 %v578
      %v5612 = vunpack.c.l.bf16 %v592
      %v5613 = vunpack.c.l.bf16 %v602
      %v5614 = vunpack.c.l.bf16 %v616
      %v5615 = vunpack.c.l.bf16 %v626
      %v5616 = vunpack.c.l.bf16 %v640
      %v5617 = vunpack.c.l.bf16 %v650
      %v5618 = vunpack.c.l.bf16 %v664
      %v5619 = vunpack.c.l.bf16 %v674
      %v5620 = vunpack.c.l.bf16 %v688
      %v5621 = vunpack.c.l.bf16 %v698
      %v5622 = vunpack.c.l.bf16 %v712
      %v5623 = vunpack.c.l.bf16 %v722
      %v5624 = vunpack.c.l.bf16 %v736
      %v5625 = vunpack.c.l.bf16 %v746
      %v5626 = vunpack.c.l.bf16 %v760
      %v5627 = vunpack.c.l.bf16 %v770
      %v5628 = vunpack.c.l.bf16 %v784
      %v5629 = vunpack.c.l.bf16 %v794
      %v5630 = vunpack.c.l.bf16 %v808
      %v5631 = vunpack.c.l.bf16 %v818
      %v5632 = vunpack.c.l.bf16 %v832
      %v5633 = vunpack.c.l.bf16 %v842
      %v5634 = vunpack.c.l.bf16 %v1019
      %v5635 = vunpack.c.l.bf16 %v1029
      %v5636 = vadd.f32 %v5572, %v5604
      %v5637 = vadd.f32 %v5573, %v5605
      %v5638 = vadd.f32 %v5574, %v5606
      %v5639 = vadd.f32 %v5575, %v5607
      %v5640 = vadd.f32 %v5576, %v5608
      %v5641 = vadd.f32 %v5577, %v5609
      %v5642 = vadd.f32 %v5578, %v5610
      %v5643 = vadd.f32 %v5579, %v5611
      %v5644 = vadd.f32 %v5580, %v5612
      %v5645 = vadd.f32 %v5581, %v5613
      %v5646 = vadd.f32 %v5582, %v5614
      %v5647 = vadd.f32 %v5583, %v5615
      %v5648 = vadd.f32 %v5584, %v5616
      %v5649 = vadd.f32 %v5585, %v5617
      %v5650 = vadd.f32 %v5586, %v5618
      %v5651 = vadd.f32 %v5587, %v5619
      %v5652 = vadd.f32 %v5588, %v5620
      %v5653 = vadd.f32 %v5589, %v5621
      %v5654 = vadd.f32 %v5590, %v5622
      %v5655 = vadd.f32 %v5591, %v5623
      %v5656 = vadd.f32 %v5592, %v5624
      %v5657 = vadd.f32 %v5593, %v5625
      %v5658 = vadd.f32 %v5594, %v5626
      %v5659 = vadd.f32 %v5595, %v5627
      %v5660 = vadd.f32 %v5596, %v5628
      %v5661 = vadd.f32 %v5597, %v5629
      %v5662 = vadd.f32 %v5598, %v5630
      %v5663 = vadd.f32 %v5599, %v5631
      %v5664 = vadd.f32 %v5600, %v5632
      %v5665 = vadd.f32 %v5601, %v5633
      %v5666 = vadd.f32 %v5602, %v5634
      %v5667 = vadd.f32 %v5603, %v5635
      %v5668 = vmax.f32 %v5636, 0.0
      %v5669 = vmax.f32 %v5637, 0.0
      %v5670 = vmax.f32 %v5638, 0.0
      %v5671 = vmax.f32 %v5639, 0.0
      %v5672 = vmax.f32 %v5640, 0.0
      %v5673 = vmax.f32 %v5641, 0.0
      %v5674 = vmax.f32 %v5642, 0.0
      %v5675 = vmax.f32 %v5643, 0.0
      %v5676 = vmax.f32 %v5644, 0.0
      %v5677 = vmax.f32 %v5645, 0.0
      %v5678 = vmax.f32 %v5646, 0.0
      %v5679 = vmax.f32 %v5647, 0.0
      %v5680 = vmax.f32 %v5648, 0.0
      %v5681 = vmax.f32 %v5649, 0.0
      %v5682 = vmax.f32 %v5650, 0.0
      %v5683 = vmax.f32 %v5651, 0.0
      %v5684 = vmax.f32 %v5652, 0.0
      %v5685 = vmax.f32 %v5653, 0.0
      %v5686 = vmax.f32 %v5654, 0.0
      %v5687 = vmax.f32 %v5655, 0.0
      %v5688 = vmax.f32 %v5656, 0.0
      %v5689 = vmax.f32 %v5657, 0.0
      %v5690 = vmax.f32 %v5658, 0.0
      %v5691 = vmax.f32 %v5659, 0.0
      %v5692 = vmax.f32 %v5660, 0.0
      %v5693 = vmax.f32 %v5661, 0.0
      %v5694 = vmax.f32 %v5662, 0.0
      %v5695 = vmax.f32 %v5663, 0.0
      %v5696 = vmax.f32 %v5664, 0.0
      %v5697 = vmax.f32 %v5665, 0.0
      %v5698 = vmax.f32 %v5666, 0.0
      %v5699 = vmax.f32 %v5667, 0.0
      %5700 = vst.msk [vmem:[%s278] sm:$0xff] %vm1524, %v5668
      %5701 = vst.msk [vmem:[%s278 + $0x8] sm:$0xff] %vm1524, %v5669
      %5702 = vst.msk [vmem:[%s278 + $0x10] sm:$0xff] %vm1524, %v5670
      %5703 = vst.msk [vmem:[%s278 + $0x18] sm:$0xff] %vm1524, %v5671
      %5704 = vst.msk [vmem:[%s278 + $0x20] sm:$0xff] %vm1524, %v5672
      %5705 = vst.msk [vmem:[%s278 + $0x28] sm:$0xff] %vm1524, %v5673
      %5706 = vst.msk [vmem:[%s278 + $0x30] sm:$0xff] %vm1524, %v5674
      %5707 = vst.msk [vmem:[%s278 + $0x38] sm:$0xff] %vm1524, %v5675
      %5708 = vst.msk [vmem:[%s278 + $0x40] sm:$0xff] %vm1524, %v5676
      %5709 = vst.msk [vmem:[%s278 + $0x48] sm:$0xff] %vm1524, %v5677
      %5710 = vst.msk [vmem:[%s278 + $0x50] sm:$0xff] %vm1524, %v5678
      %5711 = vst.msk [vmem:[%s278 + $0x58] sm:$0xff] %vm1524, %v5679
      %5712 = vst.msk [vmem:[%s278 + $0x60] sm:$0xff] %vm1524, %v5680
      %5713 = vst.msk [vmem:[%s278 + $0x68] sm:$0xff] %vm1524, %v5681
      %5714 = vst.msk [vmem:[%s278 + $0x70] sm:$0xff] %vm1524, %v5682
      %5715 = vst.msk [vmem:[%s278 + $0x78] sm:$0xff] %vm1524, %v5683
      %5716 = vst.msk [vmem:[%s278 + $0x80] sm:$0xff] %vm1524, %v5684
      %5717 = vst.msk [vmem:[%s278 + $0x88] sm:$0xff] %vm1524, %v5685
      %5718 = vst.msk [vmem:[%s278 + $0x90] sm:$0xff] %vm1524, %v5686
      %5719 = vst.msk [vmem:[%s278 + $0x98] sm:$0xff] %vm1524, %v5687
      %5720 = vst.msk [vmem:[%s278 + $0xa0] sm:$0xff] %vm1524, %v5688
      %5721 = vst.msk [vmem:[%s278 + $0xa8] sm:$0xff] %vm1524, %v5689
      %5722 = vst.msk [vmem:[%s278 + $0xb0] sm:$0xff] %vm1524, %v5690
      %5723 = vst.msk [vmem:[%s278 + $0xb8] sm:$0xff] %vm1524, %v5691
      %5724 = vst.msk [vmem:[%s278 + $0xc0] sm:$0xff] %vm1524, %v5692
      %5725 = vst.msk [vmem:[%s278 + $0xc8] sm:$0xff] %vm1524, %v5693
      %5726 = vst.msk [vmem:[%s278 + $0xd0] sm:$0xff] %vm1524, %v5694
      %5727 = vst.msk [vmem:[%s278 + $0xd8] sm:$0xff] %vm1524, %v5695
      %5728 = vst.msk [vmem:[%s278 + $0xe0] sm:$0xff] %vm1524, %v5696
      %5729 = vst.msk [vmem:[%s278 + $0xe8] sm:$0xff] %vm1524, %v5697
      %5730 = vst.msk [vmem:[%s278 + $0xf0] sm:$0xff] %vm1524, %v5698
      %5731 = vst.msk [vmem:[%s278 + $0xf8] sm:$0xff] %vm1524, %v5699
      %p5732 = scmp.lt.s32.totalorder %s18, 1
      %s5733 = scalar_select %p5732, %s18, 1
      %s5734 = smul.addr %s5733, 32
      %s5735 = smul.addr %s5734, 8
      %s5736 = scalar_lea.vmem %s7, %s5735
      // Predicated region
      $region49: #{tpu_custom_call.1} parent=47 // pred_check
        %p5737 = pneg %p188
      $region50: #{tpu_custom_call.1} parent=47 // pred_check_branch
        %5739 = sbr.rel (%p5737) target = $region52
      $region51: #{tpu_custom_call.1} parent=47 // pred_region
        _
      $region52: #{tpu_custom_call.1} parent=47 // pred_fallthru
        _
    $region48: #{tpu_custom_call.1} parent=5 // pred_fallthru
      _
    %p5740 = scmp.le.s32.totalorder 2, %s13
    // Predicated region
    $region53: #{tpu_custom_call.1} parent=5 // pred_check
      %p5741 = pneg %p5740
    $region54: #{tpu_custom_call.1} parent=5 // pred_check_branch
      %5743 = sbr.rel (%p5741) target = $region56
    $region55: #{tpu_custom_call.1} parent=5 // pred_region
      %s5744 = ssub.s32 %s13, 2
      // Predicated region
      $region57: #{tpu_custom_call.1} parent=55 // pred_check
        %p5745 = pneg %p194
      $region58: #{tpu_custom_call.1} parent=55 // pred_check_branch
        %5747 = sbr.rel (%p5745) target = $region60
      $region59: #{tpu_custom_call.1} parent=55 // pred_region
        %p5748 = scmp.lt.s32.totalorder %s19, 1
        %s5749 = scalar_select %p5748, %s19, 1
        %s5750 = smul.addr %s5749, 32
        %s5751 = smul.addr %s5750, 8
        %s5752 = scalar_lea.vmem %s7, %s5751
      $region60: #{tpu_custom_call.1} parent=55 // pred_fallthru
        _
    $region56: #{tpu_custom_call.1} parent=5 // pred_fallthru
      _
  $region6: #{tpu_custom_call.1} parent=0 // loop_footer
    %s17 = sadd.s32 1, %s13
  $region7: #{tpu_custom_call.1} parent=0 // loop_footer_branch
    %12 = sbr.rel target = $region3
  $region8: #{tpu_custom_call.1} parent=0 // loop_exit
    _

</llo_original>
